<compile_context>
chip_gen: v6e
topology: v6e:2x2x1
jax: 0.10.0
libtpu: 0.0.40
codegen_flags: <defaults>
</compile_context>

<pallas_src>
import jax
import jax.numpy as jnp
from jax.experimental import pallas as pl
from jax.experimental.pallas import tpu as pltpu


# ----------------------------------------------------------------------------
# Fused whole-model kernel factory.
# ----------------------------------------------------------------------------
def _make_fused_kernel(T, BP, H, ND, num_layers):
    """T: seq len, BP: padded batch (multiple of 8), H: hidden, ND: 1 or 2."""
    G = ND * 4 * H  # width of the combined gate projection

    def gate_block(g, c_prev):
        # PyTorch gate order [i, f, g, o]; all math in f32.
        i = jax.nn.sigmoid(g[:, 0 * H:1 * H])
        f = jax.nn.sigmoid(g[:, 1 * H:2 * H])
        gg = jnp.tanh(g[:, 2 * H:3 * H])
        o = jax.nn.sigmoid(g[:, 3 * H:4 * H])
        c_new = f * c_prev + i * gg
        h_new = o * jnp.tanh(c_new)
        return h_new, c_new

    def kernel(*refs):
        n_in = 1 + 3 * num_layers + 6
        x_ref = refs[0]
        layer_refs = refs[1:1 + 3 * num_layers]
        w1, b1, w2, b2, w3, b3 = refs[1 + 3 * num_layers:n_in]
        out_ref = refs[n_in]
        scr = refs[n_in + 1:]
        proj_scr = scr[0]                       # (T*BP, G)
        seq_f = scr[1]                          # (T*BP, H) forward outputs
        seq_r = scr[2] if ND == 2 else None     # (T*BP, H) reverse outputs

        for l in range(num_layers):
            w_ih = layer_refs[3 * l]            # (D_l, G)
            w_hh = layer_refs[3 * l + 1]        # (ND*H, G) block-diagonal
            b = layer_refs[3 * l + 2]           # (1, G)

            if l == 0:
                inp = x_ref[...]                                 # (T*BP, D_in)
            elif ND == 2:
                inp = jnp.concatenate([seq_f[...], seq_r[...]], axis=-1)
            else:
                inp = seq_f[...]

            # Hoisted input projection: one MXU matmul for all timesteps and
            # both directions, bias folded in.
            proj_scr[...] = (
                jnp.dot(inp, w_ih[...], preferred_element_type=jnp.float32)
                + b[...]
            )

            # Recurrence. State carried as traced values through the
            # statically unrolled time loop (h0 = c0 = 0, as in init_hidden).
            h_cat = jnp.zeros((BP, ND * H), jnp.float32)
            c_cat = jnp.zeros((BP, ND * H), jnp.float32)

            for t in range(T):
                rec = jnp.dot(h_cat, w_hh[...],
                              preferred_element_type=jnp.float32)   # (BP, G)

                # forward direction processes input time t
                g_f = rec[:, 0:4 * H] + proj_scr[t * BP:(t + 1) * BP, 0:4 * H]
                h_f, c_f = gate_block(g_f, c_cat[:, 0:H])
                seq_f[t * BP:(t + 1) * BP, :] = h_f

                if ND == 2:
                    # reverse direction processes input time T-1-t and writes
                    # its output at that position (PyTorch semantics).
                    rt = T - 1 - t
                    g_r = (rec[:, 4 * H:8 * H]
                           + proj_scr[rt * BP:(rt + 1) * BP, 4 * H:8 * H])
                    h_r, c_r = gate_block(g_r, c_cat[:, H:2 * H])
                    seq_r[rt * BP:(rt + 1) * BP, :] = h_r
                    h_cat = jnp.concatenate([h_f, h_r], axis=-1)
                    c_cat = jnp.concatenate([c_f, c_r], axis=-1)
                else:
                    h_cat, c_cat = h_f, c_f

        # Classifier head on lstm_out[:, -1, :] (dropout = identity in eval).
        lo = (T - 1) * BP
        last = seq_f[lo:lo + BP, :]
        if ND == 2:
            last = jnp.concatenate([last, seq_r[lo:lo + BP, :]], axis=-1)
        h1 = jnp.maximum(
            jnp.dot(last, w1[...], preferred_element_type=jnp.float32) + b1[...],
            0.0)
        h2 = jnp.maximum(
            jnp.dot(h1, w2[...], preferred_element_type=jnp.float32) + b2[...],
            0.0)
        out_ref[...] = (
            jnp.dot(h2, w3[...], preferred_element_type=jnp.float32) + b3[...])

    return kernel


# ----------------------------------------------------------------------------
# Wrapper: layout plumbing (time-major, batch padding, combined weights) in
# XLA, then a single pallas_call.
# ----------------------------------------------------------------------------
def lstm_classifier_forward(x, lstm_params, head_params):
    """x: (B, T, in_dim) float32 -> (B, num_classes) float32."""
    B, T, D_in = x.shape
    num_layers = len(lstm_params)
    ND = len(lstm_params[0])                    # 1 or 2 directions
    H = lstm_params[0][0]["w_hh"].shape[0]
    C = head_params["w3"].shape[1]
    BP = ((B + 7) // 8) * 8                     # pad batch to sublane multiple
    G = ND * 4 * H

    # Time-major, batch-padded, flattened to 2-D: row = t*BP + b.
    x_tm = jnp.transpose(x, (1, 0, 2))          # (T, B, D_in)
    if BP != B:
        x_tm = jnp.pad(x_tm, ((0, 0), (0, BP - B), (0, 0)))
    x2d = x_tm.reshape(T * BP, D_in)

    args = [x2d]
    for layer in lstm_params:
        # Columns: [i,f,g,o]_fwd then (optionally) [i,f,g,o]_rev.
        w_ih_cat = jnp.concatenate([p["w_ih"] for p in layer], axis=1)  # (D_l, G)
        if ND == 2:
            z = jnp.zeros((H, 4 * H), jnp.float32)
            w_hh_cmb = jnp.concatenate(
                [jnp.concatenate([layer[0]["w_hh"], z], axis=1),
                 jnp.concatenate([z, layer[1]["w_hh"]], axis=1)],
                axis=0)                                                 # (2H, G)
        else:
            w_hh_cmb = layer[0]["w_hh"]                                 # (H, G)
        b_cat = jnp.concatenate([p["b"] for p in layer], axis=1)        # (1, G)
        args += [w_ih_cat, w_hh_cmb, b_cat]
    args += [head_params[k] for k in ("w1", "b1", "w2", "b2", "w3", "b3")]

    scratch = [
        pltpu.VMEM((T * BP, G), jnp.float32),   # hoisted input projection
        pltpu.VMEM((T * BP, H), jnp.float32),   # forward output sequence
    ]
    if ND == 2:
        scratch.append(pltpu.VMEM((T * BP, H), jnp.float32))  # reverse outputs

    out = pl.pallas_call(
        _make_fused_kernel(T, BP, H, ND, num_layers),
        out_shape=jax.ShapeDtypeStruct((BP, C), jnp.float32),
        scratch_shapes=scratch,
    )(*args)
    return out[:B]


# ----------------------------------------------------------------------------
# Deterministic parameter construction (PyTorch-style uniform init).
# Weights stored pre-transposed: w_ih (D_in, 4H), w_hh (H, 4H), b = b_ih+b_hh.
# ----------------------------------------------------------------------------
def make_params(key, in_dim, hidden_dim, num_layers, bidirectional, num_classes):
    num_dir = 2 if bidirectional else 1
    bound = 1.0 / jnp.sqrt(hidden_dim)

    def uni(k, shape):
        return jax.random.uniform(k, shape, jnp.float32, -bound, bound)

    lstm_params = []
    for layer in range(num_layers):
        d_in = in_dim if layer == 0 else hidden_dim * num_dir
        dirs = []
        for _ in range(num_dir):
            key, k1, k2, k3, k4 = jax.random.split(key, 5)
            dirs.append({
                "w_ih": uni(k1, (d_in, 4 * hidden_dim)),
                "w_hh": uni(k2, (hidden_dim, 4 * hidden_dim)),
                "b": uni(k3, (1, 4 * hidden_dim)) + uni(k4, (1, 4 * hidden_dim)),
            })
        lstm_params.append(dirs)

    key, k1, k2, k3, k4, k5, k6 = jax.random.split(key, 7)
    head_params = {
        "w1": uni(k1, (hidden_dim * num_dir, hidden_dim)),
        "b1": uni(k2, (1, hidden_dim)),
        "w2": uni(k3, (hidden_dim, hidden_dim)),
        "b2": uni(k4, (1, hidden_dim)),
        "w3": uni(k5, (hidden_dim, num_classes)),
        "b3": uni(k6, (1, num_classes)),
    }
    return lstm_params, head_params


# ----------------------------------------------------------------------------
# Pure-JAX reference for correctness checking.
# ----------------------------------------------------------------------------
def _ref_lstm_dir(x, p, reverse):
    B, T, _ = x.shape
    H = p["w_hh"].shape[0]
    xs = jnp.flip(x, axis=1) if reverse else x

    def step(carry, x_t):
        h, c = carry
        gates = x_t @ p["w_ih"] + h @ p["w_hh"] + p["b"][0]
        i = jax.nn.sigmoid(gates[:, 0 * H:1 * H])
        f = jax.nn.sigmoid(gates[:, 1 * H:2 * H])
        g = jnp.tanh(gates[:, 2 * H:3 * H])
        o = jax.nn.sigmoid(gates[:, 3 * H:4 * H])
        c = f * c + i * g
        h = o * jnp.tanh(c)
        return (h, c), h

    init = (jnp.zeros((B, H), jnp.float32), jnp.zeros((B, H), jnp.float32))
    _, ys = jax.lax.scan(step, init, jnp.swapaxes(xs, 0, 1))
    ys = jnp.swapaxes(ys, 0, 1)
    return jnp.flip(ys, axis=1) if reverse else ys


def _ref_forward(x, lstm_params, head_params):
    h = x
    for layer in lstm_params:
        outs = [_ref_lstm_dir(h, p, d == 1) for d, p in enumerate(layer)]
        h = jnp.concatenate(outs, axis=-1) if len(outs) > 1 else outs[0]
    last = h[:, -1, :]
    h1 = jnp.maximum(last @ head_params["w1"] + head_params["b1"], 0.0)
    h2 = jnp.maximum(h1 @ head_params["w2"] + head_params["b2"], 0.0)
    return h2 @ head_params["w3"] + head_params["b3"]


if __name__ == "__main__":
    B, T = 2, 8
    in_dim, hidden_dim = 16, 32
    num_layers, num_classes = 2, 10

    key = jax.random.PRNGKey(0)
    key, kx, kp1, kp2 = jax.random.split(key, 4)
    x = jax.random.normal(kx, (B, T, in_dim), jnp.float32)

    fwd = jax.jit(lstm_classifier_forward)

    # Main config: 2-layer bidirectional (matches the reference module usage).
    lstm_p, head_p = make_params(kp1, in_dim, hidden_dim, num_layers,
                                 True, num_classes)
    y = jax.block_until_ready(fwd(x, lstm_p, head_p))
    y_ref = _ref_forward(x, lstm_p, head_p)
    assert y.shape == (B, num_classes)
    assert jnp.max(jnp.abs(y - y_ref)) < 1e-3, "bidirectional mismatch vs reference"

    # Sanity check of the unidirectional (num_dir == 1) path.
    lstm_p1, head_p1 = make_params(kp2, in_dim, hidden_dim, num_layers,
                                   False, num_classes)
    y1 = jax.block_until_ready(fwd(x, lstm_p1, head_p1))
    y1_ref = _ref_forward(x, lstm_p1, head_p1)
    assert y1.shape == (B, num_classes)
    assert jnp.max(jnp.abs(y1 - y1_ref)) < 1e-3, "unidirectional mismatch vs reference"

    print("KERNEL_OK")
</pallas_src>

<mosaic_0001>
module attributes {stable_mosaic.version = 11 : i64} {
  func.func @kernel(%arg0: memref<64x16xf32, #tpu.memory_space<vmem>>, %arg1: memref<16x256xf32, #tpu.memory_space<vmem>>, %arg2: memref<64x256xf32, #tpu.memory_space<vmem>>, %arg3: memref<1x256xf32, #tpu.memory_space<vmem>>, %arg4: memref<64x256xf32, #tpu.memory_space<vmem>>, %arg5: memref<64x256xf32, #tpu.memory_space<vmem>>, %arg6: memref<1x256xf32, #tpu.memory_space<vmem>>, %arg7: memref<64x32xf32, #tpu.memory_space<vmem>>, %arg8: memref<1x32xf32, #tpu.memory_space<vmem>>, %arg9: memref<32x32xf32, #tpu.memory_space<vmem>>, %arg10: memref<1x32xf32, #tpu.memory_space<vmem>>, %arg11: memref<32x10xf32, #tpu.memory_space<vmem>>, %arg12: memref<1x10xf32, #tpu.memory_space<vmem>>, %arg13: memref<8x10xf32, #tpu.memory_space<vmem>>, %arg14: memref<64x256xf32, #tpu.memory_space<vmem>>, %arg15: memref<64x32xf32, #tpu.memory_space<vmem>>, %arg16: memref<64x32xf32, #tpu.memory_space<vmem>>) attributes {dimension_semantics = [], scalar_prefetch = 0 : i64, scratch_operands = 3 : i64, tpu.core_type = #tpu.core_type<tc>} {
    %c0 = arith.constant 0 : index
    %c0_0 = arith.constant 0 : index
    %0 = vector.load %arg0[%c0, %c0_0] : memref<64x16xf32, #tpu.memory_space<vmem>>, vector<64x16xf32>
    %c0_1 = arith.constant 0 : index
    %c0_2 = arith.constant 0 : index
    %1 = vector.load %arg1[%c0_1, %c0_2] : memref<16x256xf32, #tpu.memory_space<vmem>>, vector<16x256xf32>
    %cst = arith.constant dense<0.000000e+00> : vector<64x256xf32>
    %2 = tpu.matmul %0, %1, %cst {dimension_numbers = #tpu.dot_dimension_numbers<[1], [0], [0], [1], [0, 0, 1, 1], [], []>} : vector<64x16xf32>, vector<16x256xf32>, vector<64x256xf32> -> vector<64x256xf32>
    %c0_3 = arith.constant 0 : index
    %c0_4 = arith.constant 0 : index
    %3 = vector.load %arg3[%c0_3, %c0_4] : memref<1x256xf32, #tpu.memory_space<vmem>>, vector<1x256xf32>
    %4 = vector.broadcast %3 : vector<1x256xf32> to vector<64x256xf32>
    %5 = arith.addf %2, %4 : vector<64x256xf32>
    %c0_5 = arith.constant 0 : index
    %c0_6 = arith.constant 0 : index
    %6 = vector.load %arg14[%c0_5, %c0_6] : memref<64x256xf32, #tpu.memory_space<vmem>>, vector<64x256xf32>
    tpu.vector_store %arg14[%c0_5, %c0_6], %5 {strides = array<i32>} : memref<64x256xf32, #tpu.memory_space<vmem>>, vector<64x256xf32>,
    %cst_7 = arith.constant 0.000000e+00 : f32
    %7 = vector.broadcast %cst_7 : f32 to vector<8x64xf32>
    %cst_8 = arith.constant 0.000000e+00 : f32
    %8 = vector.broadcast %cst_8 : f32 to vector<8x64xf32>
    %c0_9 = arith.constant 0 : index
    %c0_10 = arith.constant 0 : index
    %9 = vector.load %arg2[%c0_9, %c0_10] : memref<64x256xf32, #tpu.memory_space<vmem>>, vector<64x256xf32>
    %cst_11 = arith.constant dense<0.000000e+00> : vector<8x256xf32>
    %10 = tpu.matmul %7, %9, %cst_11 {dimension_numbers = #tpu.dot_dimension_numbers<[1], [0], [0], [1], [0, 0, 1, 1], [], []>} : vector<8x64xf32>, vector<64x256xf32>, vector<8x256xf32> -> vector<8x256xf32>
    %11 = vector.extract_strided_slice %10 {offsets = [0, 0], sizes = [8, 128], strides = [1, 1]} : vector<8x256xf32> to vector<8x128xf32>
    %c0_12 = arith.constant 0 : index
    %c0_13 = arith.constant 0 : index
    %12 = vector.load %arg14[%c0_12, %c0_13] : memref<64x256xf32, #tpu.memory_space<vmem>>, vector<8x128xf32>
    %13 = arith.addf %11, %12 : vector<8x128xf32>
    %14 = vector.extract_strided_slice %8 {offsets = [0, 0], sizes = [8, 32], strides = [1, 1]} : vector<8x64xf32> to vector<8x32xf32>
    %15 = vector.extract_strided_slice %13 {offsets = [0, 0], sizes = [8, 32], strides = [1, 1]} : vector<8x128xf32> to vector<8x32xf32>
    %16 = arith.negf %15 : vector<8x32xf32>
    %17 = math.exp %16 : vector<8x32xf32>
    %cst_14 = arith.constant 1.000000e+00 : f32
    %18 = vector.broadcast %cst_14 : f32 to vector<8x32xf32>
    %19 = arith.addf %18, %17 : vector<8x32xf32>
    %20 = arith.divf %18, %19 : vector<8x32xf32>
    %21 = vector.extract_strided_slice %13 {offsets = [0, 32], sizes = [8, 32], strides = [1, 1]} : vector<8x128xf32> to vector<8x32xf32>
    %22 = arith.negf %21 : vector<8x32xf32>
    %23 = math.exp %22 : vector<8x32xf32>
    %cst_15 = arith.constant 1.000000e+00 : f32
    %24 = vector.broadcast %cst_15 : f32 to vector<8x32xf32>
    %25 = arith.addf %24, %23 : vector<8x32xf32>
    %26 = arith.divf %24, %25 : vector<8x32xf32>
    %27 = vector.extract_strided_slice %13 {offsets = [0, 64], sizes = [8, 32], strides = [1, 1]} : vector<8x128xf32> to vector<8x32xf32>
    %28 = math.tanh %27 : vector<8x32xf32>
    %29 = vector.extract_strided_slice %13 {offsets = [0, 96], sizes = [8, 32], strides = [1, 1]} : vector<8x128xf32> to vector<8x32xf32>
    %30 = arith.negf %29 : vector<8x32xf32>
    %31 = math.exp %30 : vector<8x32xf32>
    %cst_16 = arith.constant 1.000000e+00 : f32
    %32 = vector.broadcast %cst_16 : f32 to vector<8x32xf32>
    %33 = arith.addf %32, %31 : vector<8x32xf32>
    %34 = arith.divf %32, %33 : vector<8x32xf32>
    %35 = arith.mulf %26, %14 : vector<8x32xf32>
    %36 = arith.mulf %20, %28 : vector<8x32xf32>
    %37 = arith.addf %35, %36 : vector<8x32xf32>
    %38 = math.tanh %37 : vector<8x32xf32>
    %39 = arith.mulf %34, %38 : vector<8x32xf32>
    %c0_17 = arith.constant 0 : index
    %c0_18 = arith.constant 0 : index
    %40 = vector.load %arg15[%c0_17, %c0_18] : memref<64x32xf32, #tpu.memory_space<vmem>>, vector<8x32xf32>
    tpu.vector_store %arg15[%c0_17, %c0_18], %39 {strides = array<i32>} : memref<64x32xf32, #tpu.memory_space<vmem>>, vector<8x32xf32>,
    %41 = vector.extract_strided_slice %10 {offsets = [0, 128], sizes = [8, 128], strides = [1, 1]} : vector<8x256xf32> to vector<8x128xf32>
    %c56 = arith.constant 56 : index
    %c128 = arith.constant 128 : index
    %42 = vector.load %arg14[%c56, %c128] : memref<64x256xf32, #tpu.memory_space<vmem>>, vector<8x128xf32>
    %43 = arith.addf %41, %42 : vector<8x128xf32>
    %44 = vector.extract_strided_slice %8 {offsets = [0, 32], sizes = [8, 32], strides = [1, 1]} : vector<8x64xf32> to vector<8x32xf32>
    %45 = vector.extract_strided_slice %43 {offsets = [0, 0], sizes = [8, 32], strides = [1, 1]} : vector<8x128xf32> to vector<8x32xf32>
    %46 = arith.negf %45 : vector<8x32xf32>
    %47 = math.exp %46 : vector<8x32xf32>
    %cst_19 = arith.constant 1.000000e+00 : f32
    %48 = vector.broadcast %cst_19 : f32 to vector<8x32xf32>
    %49 = arith.addf %48, %47 : vector<8x32xf32>
    %50 = arith.divf %48, %49 : vector<8x32xf32>
    %51 = vector.extract_strided_slice %43 {offsets = [0, 32], sizes = [8, 32], strides = [1, 1]} : vector<8x128xf32> to vector<8x32xf32>
    %52 = arith.negf %51 : vector<8x32xf32>
    %53 = math.exp %52 : vector<8x32xf32>
    %cst_20 = arith.constant 1.000000e+00 : f32
    %54 = vector.broadcast %cst_20 : f32 to vector<8x32xf32>
    %55 = arith.addf %54, %53 : vector<8x32xf32>
    %56 = arith.divf %54, %55 : vector<8x32xf32>
    %57 = vector.extract_strided_slice %43 {offsets = [0, 64], sizes = [8, 32], strides = [1, 1]} : vector<8x128xf32> to vector<8x32xf32>
    %58 = math.tanh %57 : vector<8x32xf32>
    %59 = vector.extract_strided_slice %43 {offsets = [0, 96], sizes = [8, 32], strides = [1, 1]} : vector<8x128xf32> to vector<8x32xf32>
    %60 = arith.negf %59 : vector<8x32xf32>
    %61 = math.exp %60 : vector<8x32xf32>
    %cst_21 = arith.constant 1.000000e+00 : f32
    %62 = vector.broadcast %cst_21 : f32 to vector<8x32xf32>
    %63 = arith.addf %62, %61 : vector<8x32xf32>
    %64 = arith.divf %62, %63 : vector<8x32xf32>
    %65 = arith.mulf %56, %44 : vector<8x32xf32>
    %66 = arith.mulf %50, %58 : vector<8x32xf32>
    %67 = arith.addf %65, %66 : vector<8x32xf32>
    %68 = math.tanh %67 : vector<8x32xf32>
    %69 = arith.mulf %64, %68 : vector<8x32xf32>
    %c56_22 = arith.constant 56 : index
    %c0_23 = arith.constant 0 : index
    %70 = vector.load %arg16[%c56_22, %c0_23] : memref<64x32xf32, #tpu.memory_space<vmem>>, vector<8x32xf32>
    tpu.vector_store %arg16[%c56_22, %c0_23], %69 {strides = array<i32>} : memref<64x32xf32, #tpu.memory_space<vmem>>, vector<8x32xf32>,
    %71 = tpu.concatenate %39, %69 in 1 : vector<8x32xf32>, vector<8x32xf32> -> vector<8x64xf32>
    %72 = tpu.concatenate %37, %67 in 1 : vector<8x32xf32>, vector<8x32xf32> -> vector<8x64xf32>
    %c0_24 = arith.constant 0 : index
    %c0_25 = arith.constant 0 : index
    %73 = vector.load %arg2[%c0_24, %c0_25] : memref<64x256xf32, #tpu.memory_space<vmem>>, vector<64x256xf32>
    %cst_26 = arith.constant dense<0.000000e+00> : vector<8x256xf32>
    %74 = tpu.matmul %71, %73, %cst_26 {dimension_numbers = #tpu.dot_dimension_numbers<[1], [0], [0], [1], [0, 0, 1, 1], [], []>} : vector<8x64xf32>, vector<64x256xf32>, vector<8x256xf32> -> vector<8x256xf32>
    %75 = vector.extract_strided_slice %74 {offsets = [0, 0], sizes = [8, 128], strides = [1, 1]} : vector<8x256xf32> to vector<8x128xf32>
    %c8 = arith.constant 8 : index
    %c0_27 = arith.constant 0 : index
    %76 = vector.load %arg14[%c8, %c0_27] : memref<64x256xf32, #tpu.memory_space<vmem>>, vector<8x128xf32>
    %77 = arith.addf %75, %76 : vector<8x128xf32>
    %78 = vector.extract_strided_slice %72 {offsets = [0, 0], sizes = [8, 32], strides = [1, 1]} : vector<8x64xf32> to vector<8x32xf32>
    %79 = vector.extract_strided_slice %77 {offsets = [0, 0], sizes = [8, 32], strides = [1, 1]} : vector<8x128xf32> to vector<8x32xf32>
    %80 = arith.negf %79 : vector<8x32xf32>
    %81 = math.exp %80 : vector<8x32xf32>
    %cst_28 = arith.constant 1.000000e+00 : f32
    %82 = vector.broadcast %cst_28 : f32 to vector<8x32xf32>
    %83 = arith.addf %82, %81 : vector<8x32xf32>
    %84 = arith.divf %82, %83 : vector<8x32xf32>
    %85 = vector.extract_strided_slice %77 {offsets = [0, 32], sizes = [8, 32], strides = [1, 1]} : vector<8x128xf32> to vector<8x32xf32>
    %86 = arith.negf %85 : vector<8x32xf32>
    %87 = math.exp %86 : vector<8x32xf32>
    %cst_29 = arith.constant 1.000000e+00 : f32
    %88 = vector.broadcast %cst_29 : f32 to vector<8x32xf32>
    %89 = arith.addf %88, %87 : vector<8x32xf32>
    %90 = arith.divf %88, %89 : vector<8x32xf32>
    %91 = vector.extract_strided_slice %77 {offsets = [0, 64], sizes = [8, 32], strides = [1, 1]} : vector<8x128xf32> to vector<8x32xf32>
    %92 = math.tanh %91 : vector<8x32xf32>
    %93 = vector.extract_strided_slice %77 {offsets = [0, 96], sizes = [8, 32], strides = [1, 1]} : vector<8x128xf32> to vector<8x32xf32>
    %94 = arith.negf %93 : vector<8x32xf32>
    %95 = math.exp %94 : vector<8x32xf32>
    %cst_30 = arith.constant 1.000000e+00 : f32
    %96 = vector.broadcast %cst_30 : f32 to vector<8x32xf32>
    %97 = arith.addf %96, %95 : vector<8x32xf32>
    %98 = arith.divf %96, %97 : vector<8x32xf32>
    %99 = arith.mulf %90, %78 : vector<8x32xf32>
    %100 = arith.mulf %84, %92 : vector<8x32xf32>
    %101 = arith.addf %99, %100 : vector<8x32xf32>
    %102 = math.tanh %101 : vector<8x32xf32>
    %103 = arith.mulf %98, %102 : vector<8x32xf32>
    %c8_31 = arith.constant 8 : index
    %c0_32 = arith.constant 0 : index
    %104 = vector.load %arg15[%c8_31, %c0_32] : memref<64x32xf32, #tpu.memory_space<vmem>>, vector<8x32xf32>
    tpu.vector_store %arg15[%c8_31, %c0_32], %103 {strides = array<i32>} : memref<64x32xf32, #tpu.memory_space<vmem>>, vector<8x32xf32>,
    %105 = vector.extract_strided_slice %74 {offsets = [0, 128], sizes = [8, 128], strides = [1, 1]} : vector<8x256xf32> to vector<8x128xf32>
    %c48 = arith.constant 48 : index
    %c128_33 = arith.constant 128 : index
    %106 = vector.load %arg14[%c48, %c128_33] : memref<64x256xf32, #tpu.memory_space<vmem>>, vector<8x128xf32>
    %107 = arith.addf %105, %106 : vector<8x128xf32>
    %108 = vector.extract_strided_slice %72 {offsets = [0, 32], sizes = [8, 32], strides = [1, 1]} : vector<8x64xf32> to vector<8x32xf32>
    %109 = vector.extract_strided_slice %107 {offsets = [0, 0], sizes = [8, 32], strides = [1, 1]} : vector<8x128xf32> to vector<8x32xf32>
    %110 = arith.negf %109 : vector<8x32xf32>
    %111 = math.exp %110 : vector<8x32xf32>
    %cst_34 = arith.constant 1.000000e+00 : f32
    %112 = vector.broadcast %cst_34 : f32 to vector<8x32xf32>
    %113 = arith.addf %112, %111 : vector<8x32xf32>
    %114 = arith.divf %112, %113 : vector<8x32xf32>
    %115 = vector.extract_strided_slice %107 {offsets = [0, 32], sizes = [8, 32], strides = [1, 1]} : vector<8x128xf32> to vector<8x32xf32>
    %116 = arith.negf %115 : vector<8x32xf32>
    %117 = math.exp %116 : vector<8x32xf32>
    %cst_35 = arith.constant 1.000000e+00 : f32
    %118 = vector.broadcast %cst_35 : f32 to vector<8x32xf32>
    %119 = arith.addf %118, %117 : vector<8x32xf32>
    %120 = arith.divf %118, %119 : vector<8x32xf32>
    %121 = vector.extract_strided_slice %107 {offsets = [0, 64], sizes = [8, 32], strides = [1, 1]} : vector<8x128xf32> to vector<8x32xf32>
    %122 = math.tanh %121 : vector<8x32xf32>
    %123 = vector.extract_strided_slice %107 {offsets = [0, 96], sizes = [8, 32], strides = [1, 1]} : vector<8x128xf32> to vector<8x32xf32>
    %124 = arith.negf %123 : vector<8x32xf32>
    %125 = math.exp %124 : vector<8x32xf32>
    %cst_36 = arith.constant 1.000000e+00 : f32
    %126 = vector.broadcast %cst_36 : f32 to vector<8x32xf32>
    %127 = arith.addf %126, %125 : vector<8x32xf32>
    %128 = arith.divf %126, %127 : vector<8x32xf32>
    %129 = arith.mulf %120, %108 : vector<8x32xf32>
    %130 = arith.mulf %114, %122 : vector<8x32xf32>
    %131 = arith.addf %129, %130 : vector<8x32xf32>
    %132 = math.tanh %131 : vector<8x32xf32>
    %133 = arith.mulf %128, %132 : vector<8x32xf32>
    %c48_37 = arith.constant 48 : index
    %c0_38 = arith.constant 0 : index
    %134 = vector.load %arg16[%c48_37, %c0_38] : memref<64x32xf32, #tpu.memory_space<vmem>>, vector<8x32xf32>
    tpu.vector_store %arg16[%c48_37, %c0_38], %133 {strides = array<i32>} : memref<64x32xf32, #tpu.memory_space<vmem>>, vector<8x32xf32>,
    %135 = tpu.concatenate %103, %133 in 1 : vector<8x32xf32>, vector<8x32xf32> -> vector<8x64xf32>
    %136 = tpu.concatenate %101, %131 in 1 : vector<8x32xf32>, vector<8x32xf32> -> vector<8x64xf32>
    %c0_39 = arith.constant 0 : index
    %c0_40 = arith.constant 0 : index
    %137 = vector.load %arg2[%c0_39, %c0_40] : memref<64x256xf32, #tpu.memory_space<vmem>>, vector<64x256xf32>
    %cst_41 = arith.constant dense<0.000000e+00> : vector<8x256xf32>
    %138 = tpu.matmul %135, %137, %cst_41 {dimension_numbers = #tpu.dot_dimension_numbers<[1], [0], [0], [1], [0, 0, 1, 1], [], []>} : vector<8x64xf32>, vector<64x256xf32>, vector<8x256xf32> -> vector<8x256xf32>
    %139 = vector.extract_strided_slice %138 {offsets = [0, 0], sizes = [8, 128], strides = [1, 1]} : vector<8x256xf32> to vector<8x128xf32>
    %c16 = arith.constant 16 : index
    %c0_42 = arith.constant 0 : index
    %140 = vector.load %arg14[%c16, %c0_42] : memref<64x256xf32, #tpu.memory_space<vmem>>, vector<8x128xf32>
    %141 = arith.addf %139, %140 : vector<8x128xf32>
    %142 = vector.extract_strided_slice %136 {offsets = [0, 0], sizes = [8, 32], strides = [1, 1]} : vector<8x64xf32> to vector<8x32xf32>
    %143 = vector.extract_strided_slice %141 {offsets = [0, 0], sizes = [8, 32], strides = [1, 1]} : vector<8x128xf32> to vector<8x32xf32>
    %144 = arith.negf %143 : vector<8x32xf32>
    %145 = math.exp %144 : vector<8x32xf32>
    %cst_43 = arith.constant 1.000000e+00 : f32
    %146 = vector.broadcast %cst_43 : f32 to vector<8x32xf32>
    %147 = arith.addf %146, %145 : vector<8x32xf32>
    %148 = arith.divf %146, %147 : vector<8x32xf32>
    %149 = vector.extract_strided_slice %141 {offsets = [0, 32], sizes = [8, 32], strides = [1, 1]} : vector<8x128xf32> to vector<8x32xf32>
    %150 = arith.negf %149 : vector<8x32xf32>
    %151 = math.exp %150 : vector<8x32xf32>
    %cst_44 = arith.constant 1.000000e+00 : f32
    %152 = vector.broadcast %cst_44 : f32 to vector<8x32xf32>
    %153 = arith.addf %152, %151 : vector<8x32xf32>
    %154 = arith.divf %152, %153 : vector<8x32xf32>
    %155 = vector.extract_strided_slice %141 {offsets = [0, 64], sizes = [8, 32], strides = [1, 1]} : vector<8x128xf32> to vector<8x32xf32>
    %156 = math.tanh %155 : vector<8x32xf32>
    %157 = vector.extract_strided_slice %141 {offsets = [0, 96], sizes = [8, 32], strides = [1, 1]} : vector<8x128xf32> to vector<8x32xf32>
    %158 = arith.negf %157 : vector<8x32xf32>
    %159 = math.exp %158 : vector<8x32xf32>
    %cst_45 = arith.constant 1.000000e+00 : f32
    %160 = vector.broadcast %cst_45 : f32 to vector<8x32xf32>
    %161 = arith.addf %160, %159 : vector<8x32xf32>
    %162 = arith.divf %160, %161 : vector<8x32xf32>
    %163 = arith.mulf %154, %142 : vector<8x32xf32>
    %164 = arith.mulf %148, %156 : vector<8x32xf32>
    %165 = arith.addf %163, %164 : vector<8x32xf32>
    %166 = math.tanh %165 : vector<8x32xf32>
    %167 = arith.mulf %162, %166 : vector<8x32xf32>
    %c16_46 = arith.constant 16 : index
    %c0_47 = arith.constant 0 : index
    %168 = vector.load %arg15[%c16_46, %c0_47] : memref<64x32xf32, #tpu.memory_space<vmem>>, vector<8x32xf32>
    tpu.vector_store %arg15[%c16_46, %c0_47], %167 {strides = array<i32>} : memref<64x32xf32, #tpu.memory_space<vmem>>, vector<8x32xf32>,
    %169 = vector.extract_strided_slice %138 {offsets = [0, 128], sizes = [8, 128], strides = [1, 1]} : vector<8x256xf32> to vector<8x128xf32>
    %c40 = arith.constant 40 : index
    %c128_48 = arith.constant 128 : index
    %170 = vector.load %arg14[%c40, %c128_48] : memref<64x256xf32, #tpu.memory_space<vmem>>, vector<8x128xf32>
    %171 = arith.addf %169, %170 : vector<8x128xf32>
    %172 = vector.extract_strided_slice %136 {offsets = [0, 32], sizes = [8, 32], strides = [1, 1]} : vector<8x64xf32> to vector<8x32xf32>
    %173 = vector.extract_strided_slice %171 {offsets = [0, 0], sizes = [8, 32], strides = [1, 1]} : vector<8x128xf32> to vector<8x32xf32>
    %174 = arith.negf %173 : vector<8x32xf32>
    %175 = math.exp %174 : vector<8x32xf32>
    %cst_49 = arith.constant 1.000000e+00 : f32
    %176 = vector.broadcast %cst_49 : f32 to vector<8x32xf32>
    %177 = arith.addf %176, %175 : vector<8x32xf32>
    %178 = arith.divf %176, %177 : vector<8x32xf32>
    %179 = vector.extract_strided_slice %171 {offsets = [0, 32], sizes = [8, 32], strides = [1, 1]} : vector<8x128xf32> to vector<8x32xf32>
    %180 = arith.negf %179 : vector<8x32xf32>
    %181 = math.exp %180 : vector<8x32xf32>
    %cst_50 = arith.constant 1.000000e+00 : f32
    %182 = vector.broadcast %cst_50 : f32 to vector<8x32xf32>
    %183 = arith.addf %182, %181 : vector<8x32xf32>
    %184 = arith.divf %182, %183 : vector<8x32xf32>
    %185 = vector.extract_strided_slice %171 {offsets = [0, 64], sizes = [8, 32], strides = [1, 1]} : vector<8x128xf32> to vector<8x32xf32>
    %186 = math.tanh %185 : vector<8x32xf32>
    %187 = vector.extract_strided_slice %171 {offsets = [0, 96], sizes = [8, 32], strides = [1, 1]} : vector<8x128xf32> to vector<8x32xf32>
    %188 = arith.negf %187 : vector<8x32xf32>
    %189 = math.exp %188 : vector<8x32xf32>
    %cst_51 = arith.constant 1.000000e+00 : f32
    %190 = vector.broadcast %cst_51 : f32 to vector<8x32xf32>
    %191 = arith.addf %190, %189 : vector<8x32xf32>
    %192 = arith.divf %190, %191 : vector<8x32xf32>
    %193 = arith.mulf %184, %172 : vector<8x32xf32>
    %194 = arith.mulf %178, %186 : vector<8x32xf32>
    %195 = arith.addf %193, %194 : vector<8x32xf32>
    %196 = math.tanh %195 : vector<8x32xf32>
    %197 = arith.mulf %192, %196 : vector<8x32xf32>
    %c40_52 = arith.constant 40 : index
    %c0_53 = arith.constant 0 : index
    %198 = vector.load %arg16[%c40_52, %c0_53] : memref<64x32xf32, #tpu.memory_space<vmem>>, vector<8x32xf32>
    tpu.vector_store %arg16[%c40_52, %c0_53], %197 {strides = array<i32>} : memref<64x32xf32, #tpu.memory_space<vmem>>, vector<8x32xf32>,
    %199 = tpu.concatenate %167, %197 in 1 : vector<8x32xf32>, vector<8x32xf32> -> vector<8x64xf32>
    %200 = tpu.concatenate %165, %195 in 1 : vector<8x32xf32>, vector<8x32xf32> -> vector<8x64xf32>
    %c0_54 = arith.constant 0 : index
    %c0_55 = arith.constant 0 : index
    %201 = vector.load %arg2[%c0_54, %c0_55] : memref<64x256xf32, #tpu.memory_space<vmem>>, vector<64x256xf32>
    %cst_56 = arith.constant dense<0.000000e+00> : vector<8x256xf32>
    %202 = tpu.matmul %199, %201, %cst_56 {dimension_numbers = #tpu.dot_dimension_numbers<[1], [0], [0], [1], [0, 0, 1, 1], [], []>} : vector<8x64xf32>, vector<64x256xf32>, vector<8x256xf32> -> vector<8x256xf32>
    %203 = vector.extract_strided_slice %202 {offsets = [0, 0], sizes = [8, 128], strides = [1, 1]} : vector<8x256xf32> to vector<8x128xf32>
    %c24 = arith.constant 24 : index
    %c0_57 = arith.constant 0 : index
    %204 = vector.load %arg14[%c24, %c0_57] : memref<64x256xf32, #tpu.memory_space<vmem>>, vector<8x128xf32>
    %205 = arith.addf %203, %204 : vector<8x128xf32>
    %206 = vector.extract_strided_slice %200 {offsets = [0, 0], sizes = [8, 32], strides = [1, 1]} : vector<8x64xf32> to vector<8x32xf32>
    %207 = vector.extract_strided_slice %205 {offsets = [0, 0], sizes = [8, 32], strides = [1, 1]} : vector<8x128xf32> to vector<8x32xf32>
    %208 = arith.negf %207 : vector<8x32xf32>
    %209 = math.exp %208 : vector<8x32xf32>
    %cst_58 = arith.constant 1.000000e+00 : f32
    %210 = vector.broadcast %cst_58 : f32 to vector<8x32xf32>
    %211 = arith.addf %210, %209 : vector<8x32xf32>
    %212 = arith.divf %210, %211 : vector<8x32xf32>
    %213 = vector.extract_strided_slice %205 {offsets = [0, 32], sizes = [8, 32], strides = [1, 1]} : vector<8x128xf32> to vector<8x32xf32>
    %214 = arith.negf %213 : vector<8x32xf32>
    %215 = math.exp %214 : vector<8x32xf32>
    %cst_59 = arith.constant 1.000000e+00 : f32
    %216 = vector.broadcast %cst_59 : f32 to vector<8x32xf32>
    %217 = arith.addf %216, %215 : vector<8x32xf32>
    %218 = arith.divf %216, %217 : vector<8x32xf32>
    %219 = vector.extract_strided_slice %205 {offsets = [0, 64], sizes = [8, 32], strides = [1, 1]} : vector<8x128xf32> to vector<8x32xf32>
    %220 = math.tanh %219 : vector<8x32xf32>
    %221 = vector.extract_strided_slice %205 {offsets = [0, 96], sizes = [8, 32], strides = [1, 1]} : vector<8x128xf32> to vector<8x32xf32>
    %222 = arith.negf %221 : vector<8x32xf32>
    %223 = math.exp %222 : vector<8x32xf32>
    %cst_60 = arith.constant 1.000000e+00 : f32
    %224 = vector.broadcast %cst_60 : f32 to vector<8x32xf32>
    %225 = arith.addf %224, %223 : vector<8x32xf32>
    %226 = arith.divf %224, %225 : vector<8x32xf32>
    %227 = arith.mulf %218, %206 : vector<8x32xf32>
    %228 = arith.mulf %212, %220 : vector<8x32xf32>
    %229 = arith.addf %227, %228 : vector<8x32xf32>
    %230 = math.tanh %229 : vector<8x32xf32>
    %231 = arith.mulf %226, %230 : vector<8x32xf32>
    %c24_61 = arith.constant 24 : index
    %c0_62 = arith.constant 0 : index
    %232 = vector.load %arg15[%c24_61, %c0_62] : memref<64x32xf32, #tpu.memory_space<vmem>>, vector<8x32xf32>
    tpu.vector_store %arg15[%c24_61, %c0_62], %231 {strides = array<i32>} : memref<64x32xf32, #tpu.memory_space<vmem>>, vector<8x32xf32>,
    %233 = vector.extract_strided_slice %202 {offsets = [0, 128], sizes = [8, 128], strides = [1, 1]} : vector<8x256xf32> to vector<8x128xf32>
    %c32 = arith.constant 32 : index
    %c128_63 = arith.constant 128 : index
    %234 = vector.load %arg14[%c32, %c128_63] : memref<64x256xf32, #tpu.memory_space<vmem>>, vector<8x128xf32>
    %235 = arith.addf %233, %234 : vector<8x128xf32>
    %236 = vector.extract_strided_slice %200 {offsets = [0, 32], sizes = [8, 32], strides = [1, 1]} : vector<8x64xf32> to vector<8x32xf32>
    %237 = vector.extract_strided_slice %235 {offsets = [0, 0], sizes = [8, 32], strides = [1, 1]} : vector<8x128xf32> to vector<8x32xf32>
    %238 = arith.negf %237 : vector<8x32xf32>
    %239 = math.exp %238 : vector<8x32xf32>
    %cst_64 = arith.constant 1.000000e+00 : f32
    %240 = vector.broadcast %cst_64 : f32 to vector<8x32xf32>
    %241 = arith.addf %240, %239 : vector<8x32xf32>
    %242 = arith.divf %240, %241 : vector<8x32xf32>
    %243 = vector.extract_strided_slice %235 {offsets = [0, 32], sizes = [8, 32], strides = [1, 1]} : vector<8x128xf32> to vector<8x32xf32>
    %244 = arith.negf %243 : vector<8x32xf32>
    %245 = math.exp %244 : vector<8x32xf32>
    %cst_65 = arith.constant 1.000000e+00 : f32
    %246 = vector.broadcast %cst_65 : f32 to vector<8x32xf32>
    %247 = arith.addf %246, %245 : vector<8x32xf32>
    %248 = arith.divf %246, %247 : vector<8x32xf32>
    %249 = vector.extract_strided_slice %235 {offsets = [0, 64], sizes = [8, 32], strides = [1, 1]} : vector<8x128xf32> to vector<8x32xf32>
    %250 = math.tanh %249 : vector<8x32xf32>
    %251 = vector.extract_strided_slice %235 {offsets = [0, 96], sizes = [8, 32], strides = [1, 1]} : vector<8x128xf32> to vector<8x32xf32>
    %252 = arith.negf %251 : vector<8x32xf32>
    %253 = math.exp %252 : vector<8x32xf32>
    %cst_66 = arith.constant 1.000000e+00 : f32
    %254 = vector.broadcast %cst_66 : f32 to vector<8x32xf32>
    %255 = arith.addf %254, %253 : vector<8x32xf32>
    %256 = arith.divf %254, %255 : vector<8x32xf32>
    %257 = arith.mulf %248, %236 : vector<8x32xf32>
    %258 = arith.mulf %242, %250 : vector<8x32xf32>
    %259 = arith.addf %257, %258 : vector<8x32xf32>
    %260 = math.tanh %259 : vector<8x32xf32>
    %261 = arith.mulf %256, %260 : vector<8x32xf32>
    %c32_67 = arith.constant 32 : index
    %c0_68 = arith.constant 0 : index
    %262 = vector.load %arg16[%c32_67, %c0_68] : memref<64x32xf32, #tpu.memory_space<vmem>>, vector<8x32xf32>
    tpu.vector_store %arg16[%c32_67, %c0_68], %261 {strides = array<i32>} : memref<64x32xf32, #tpu.memory_space<vmem>>, vector<8x32xf32>,
    %263 = tpu.concatenate %231, %261 in 1 : vector<8x32xf32>, vector<8x32xf32> -> vector<8x64xf32>
    %264 = tpu.concatenate %229, %259 in 1 : vector<8x32xf32>, vector<8x32xf32> -> vector<8x64xf32>
    %c0_69 = arith.constant 0 : index
    %c0_70 = arith.constant 0 : index
    %265 = vector.load %arg2[%c0_69, %c0_70] : memref<64x256xf32, #tpu.memory_space<vmem>>, vector<64x256xf32>
    %cst_71 = arith.constant dense<0.000000e+00> : vector<8x256xf32>
    %266 = tpu.matmul %263, %265, %cst_71 {dimension_numbers = #tpu.dot_dimension_numbers<[1], [0], [0], [1], [0, 0, 1, 1], [], []>} : vector<8x64xf32>, vector<64x256xf32>, vector<8x256xf32> -> vector<8x256xf32>
    %267 = vector.extract_strided_slice %266 {offsets = [0, 0], sizes = [8, 128], strides = [1, 1]} : vector<8x256xf32> to vector<8x128xf32>
    %c32_72 = arith.constant 32 : index
    %c0_73 = arith.constant 0 : index
    %268 = vector.load %arg14[%c32_72, %c0_73] : memref<64x256xf32, #tpu.memory_space<vmem>>, vector<8x128xf32>
    %269 = arith.addf %267, %268 : vector<8x128xf32>
    %270 = vector.extract_strided_slice %264 {offsets = [0, 0], sizes = [8, 32], strides = [1, 1]} : vector<8x64xf32> to vector<8x32xf32>
    %271 = vector.extract_strided_slice %269 {offsets = [0, 0], sizes = [8, 32], strides = [1, 1]} : vector<8x128xf32> to vector<8x32xf32>
    %272 = arith.negf %271 : vector<8x32xf32>
    %273 = math.exp %272 : vector<8x32xf32>
    %cst_74 = arith.constant 1.000000e+00 : f32
    %274 = vector.broadcast %cst_74 : f32 to vector<8x32xf32>
    %275 = arith.addf %274, %273 : vector<8x32xf32>
    %276 = arith.divf %274, %275 : vector<8x32xf32>
    %277 = vector.extract_strided_slice %269 {offsets = [0, 32], sizes = [8, 32], strides = [1, 1]} : vector<8x128xf32> to vector<8x32xf32>
    %278 = arith.negf %277 : vector<8x32xf32>
    %279 = math.exp %278 : vector<8x32xf32>
    %cst_75 = arith.constant 1.000000e+00 : f32
    %280 = vector.broadcast %cst_75 : f32 to vector<8x32xf32>
    %281 = arith.addf %280, %279 : vector<8x32xf32>
    %282 = arith.divf %280, %281 : vector<8x32xf32>
    %283 = vector.extract_strided_slice %269 {offsets = [0, 64], sizes = [8, 32], strides = [1, 1]} : vector<8x128xf32> to vector<8x32xf32>
    %284 = math.tanh %283 : vector<8x32xf32>
    %285 = vector.extract_strided_slice %269 {offsets = [0, 96], sizes = [8, 32], strides = [1, 1]} : vector<8x128xf32> to vector<8x32xf32>
    %286 = arith.negf %285 : vector<8x32xf32>
    %287 = math.exp %286 : vector<8x32xf32>
    %cst_76 = arith.constant 1.000000e+00 : f32
    %288 = vector.broadcast %cst_76 : f32 to vector<8x32xf32>
    %289 = arith.addf %288, %287 : vector<8x32xf32>
    %290 = arith.divf %288, %289 : vector<8x32xf32>
    %291 = arith.mulf %282, %270 : vector<8x32xf32>
    %292 = arith.mulf %276, %284 : vector<8x32xf32>
    %293 = arith.addf %291, %292 : vector<8x32xf32>
    %294 = math.tanh %293 : vector<8x32xf32>
    %295 = arith.mulf %290, %294 : vector<8x32xf32>
    %c32_77 = arith.constant 32 : index
    %c0_78 = arith.constant 0 : index
    %296 = vector.load %arg15[%c32_77, %c0_78] : memref<64x32xf32, #tpu.memory_space<vmem>>, vector<8x32xf32>
    tpu.vector_store %arg15[%c32_77, %c0_78], %295 {strides = array<i32>} : memref<64x32xf32, #tpu.memory_space<vmem>>, vector<8x32xf32>,
    %297 = vector.extract_strided_slice %266 {offsets = [0, 128], sizes = [8, 128], strides = [1, 1]} : vector<8x256xf32> to vector<8x128xf32>
    %c24_79 = arith.constant 24 : index
    %c128_80 = arith.constant 128 : index
    %298 = vector.load %arg14[%c24_79, %c128_80] : memref<64x256xf32, #tpu.memory_space<vmem>>, vector<8x128xf32>
    %299 = arith.addf %297, %298 : vector<8x128xf32>
    %300 = vector.extract_strided_slice %264 {offsets = [0, 32], sizes = [8, 32], strides = [1, 1]} : vector<8x64xf32> to vector<8x32xf32>
    %301 = vector.extract_strided_slice %299 {offsets = [0, 0], sizes = [8, 32], strides = [1, 1]} : vector<8x128xf32> to vector<8x32xf32>
    %302 = arith.negf %301 : vector<8x32xf32>
    %303 = math.exp %302 : vector<8x32xf32>
    %cst_81 = arith.constant 1.000000e+00 : f32
    %304 = vector.broadcast %cst_81 : f32 to vector<8x32xf32>
    %305 = arith.addf %304, %303 : vector<8x32xf32>
    %306 = arith.divf %304, %305 : vector<8x32xf32>
    %307 = vector.extract_strided_slice %299 {offsets = [0, 32], sizes = [8, 32], strides = [1, 1]} : vector<8x128xf32> to vector<8x32xf32>
    %308 = arith.negf %307 : vector<8x32xf32>
    %309 = math.exp %308 : vector<8x32xf32>
    %cst_82 = arith.constant 1.000000e+00 : f32
    %310 = vector.broadcast %cst_82 : f32 to vector<8x32xf32>
    %311 = arith.addf %310, %309 : vector<8x32xf32>
    %312 = arith.divf %310, %311 : vector<8x32xf32>
    %313 = vector.extract_strided_slice %299 {offsets = [0, 64], sizes = [8, 32], strides = [1, 1]} : vector<8x128xf32> to vector<8x32xf32>
    %314 = math.tanh %313 : vector<8x32xf32>
    %315 = vector.extract_strided_slice %299 {offsets = [0, 96], sizes = [8, 32], strides = [1, 1]} : vector<8x128xf32> to vector<8x32xf32>
    %316 = arith.negf %315 : vector<8x32xf32>
    %317 = math.exp %316 : vector<8x32xf32>
    %cst_83 = arith.constant 1.000000e+00 : f32
    %318 = vector.broadcast %cst_83 : f32 to vector<8x32xf32>
    %319 = arith.addf %318, %317 : vector<8x32xf32>
    %320 = arith.divf %318, %319 : vector<8x32xf32>
    %321 = arith.mulf %312, %300 : vector<8x32xf32>
    %322 = arith.mulf %306, %314 : vector<8x32xf32>
    %323 = arith.addf %321, %322 : vector<8x32xf32>
    %324 = math.tanh %323 : vector<8x32xf32>
    %325 = arith.mulf %320, %324 : vector<8x32xf32>
    %c24_84 = arith.constant 24 : index
    %c0_85 = arith.constant 0 : index
    %326 = vector.load %arg16[%c24_84, %c0_85] : memref<64x32xf32, #tpu.memory_space<vmem>>, vector<8x32xf32>
    tpu.vector_store %arg16[%c24_84, %c0_85], %325 {strides = array<i32>} : memref<64x32xf32, #tpu.memory_space<vmem>>, vector<8x32xf32>,
    %327 = tpu.concatenate %295, %325 in 1 : vector<8x32xf32>, vector<8x32xf32> -> vector<8x64xf32>
    %328 = tpu.concatenate %293, %323 in 1 : vector<8x32xf32>, vector<8x32xf32> -> vector<8x64xf32>
    %c0_86 = arith.constant 0 : index
    %c0_87 = arith.constant 0 : index
    %329 = vector.load %arg2[%c0_86, %c0_87] : memref<64x256xf32, #tpu.memory_space<vmem>>, vector<64x256xf32>
    %cst_88 = arith.constant dense<0.000000e+00> : vector<8x256xf32>
    %330 = tpu.matmul %327, %329, %cst_88 {dimension_numbers = #tpu.dot_dimension_numbers<[1], [0], [0], [1], [0, 0, 1, 1], [], []>} : vector<8x64xf32>, vector<64x256xf32>, vector<8x256xf32> -> vector<8x256xf32>
    %331 = vector.extract_strided_slice %330 {offsets = [0, 0], sizes = [8, 128], strides = [1, 1]} : vector<8x256xf32> to vector<8x128xf32>
    %c40_89 = arith.constant 40 : index
    %c0_90 = arith.constant 0 : index
    %332 = vector.load %arg14[%c40_89, %c0_90] : memref<64x256xf32, #tpu.memory_space<vmem>>, vector<8x128xf32>
    %333 = arith.addf %331, %332 : vector<8x128xf32>
    %334 = vector.extract_strided_slice %328 {offsets = [0, 0], sizes = [8, 32], strides = [1, 1]} : vector<8x64xf32> to vector<8x32xf32>
    %335 = vector.extract_strided_slice %333 {offsets = [0, 0], sizes = [8, 32], strides = [1, 1]} : vector<8x128xf32> to vector<8x32xf32>
    %336 = arith.negf %335 : vector<8x32xf32>
    %337 = math.exp %336 : vector<8x32xf32>
    %cst_91 = arith.constant 1.000000e+00 : f32
    %338 = vector.broadcast %cst_91 : f32 to vector<8x32xf32>
    %339 = arith.addf %338, %337 : vector<8x32xf32>
    %340 = arith.divf %338, %339 : vector<8x32xf32>
    %341 = vector.extract_strided_slice %333 {offsets = [0, 32], sizes = [8, 32], strides = [1, 1]} : vector<8x128xf32> to vector<8x32xf32>
    %342 = arith.negf %341 : vector<8x32xf32>
    %343 = math.exp %342 : vector<8x32xf32>
    %cst_92 = arith.constant 1.000000e+00 : f32
    %344 = vector.broadcast %cst_92 : f32 to vector<8x32xf32>
    %345 = arith.addf %344, %343 : vector<8x32xf32>
    %346 = arith.divf %344, %345 : vector<8x32xf32>
    %347 = vector.extract_strided_slice %333 {offsets = [0, 64], sizes = [8, 32], strides = [1, 1]} : vector<8x128xf32> to vector<8x32xf32>
    %348 = math.tanh %347 : vector<8x32xf32>
    %349 = vector.extract_strided_slice %333 {offsets = [0, 96], sizes = [8, 32], strides = [1, 1]} : vector<8x128xf32> to vector<8x32xf32>
    %350 = arith.negf %349 : vector<8x32xf32>
    %351 = math.exp %350 : vector<8x32xf32>
    %cst_93 = arith.constant 1.000000e+00 : f32
    %352 = vector.broadcast %cst_93 : f32 to vector<8x32xf32>
    %353 = arith.addf %352, %351 : vector<8x32xf32>
    %354 = arith.divf %352, %353 : vector<8x32xf32>
    %355 = arith.mulf %346, %334 : vector<8x32xf32>
    %356 = arith.mulf %340, %348 : vector<8x32xf32>
    %357 = arith.addf %355, %356 : vector<8x32xf32>
    %358 = math.tanh %357 : vector<8x32xf32>
    %359 = arith.mulf %354, %358 : vector<8x32xf32>
    %c40_94 = arith.constant 40 : index
    %c0_95 = arith.constant 0 : index
    %360 = vector.load %arg15[%c40_94, %c0_95] : memref<64x32xf32, #tpu.memory_space<vmem>>, vector<8x32xf32>
    tpu.vector_store %arg15[%c40_94, %c0_95], %359 {strides = array<i32>} : memref<64x32xf32, #tpu.memory_space<vmem>>, vector<8x32xf32>,
    %361 = vector.extract_strided_slice %330 {offsets = [0, 128], sizes = [8, 128], strides = [1, 1]} : vector<8x256xf32> to vector<8x128xf32>
    %c16_96 = arith.constant 16 : index
    %c128_97 = arith.constant 128 : index
    %362 = vector.load %arg14[%c16_96, %c128_97] : memref<64x256xf32, #tpu.memory_space<vmem>>, vector<8x128xf32>
    %363 = arith.addf %361, %362 : vector<8x128xf32>
    %364 = vector.extract_strided_slice %328 {offsets = [0, 32], sizes = [8, 32], strides = [1, 1]} : vector<8x64xf32> to vector<8x32xf32>
    %365 = vector.extract_strided_slice %363 {offsets = [0, 0], sizes = [8, 32], strides = [1, 1]} : vector<8x128xf32> to vector<8x32xf32>
    %366 = arith.negf %365 : vector<8x32xf32>
    %367 = math.exp %366 : vector<8x32xf32>
    %cst_98 = arith.constant 1.000000e+00 : f32
    %368 = vector.broadcast %cst_98 : f32 to vector<8x32xf32>
    %369 = arith.addf %368, %367 : vector<8x32xf32>
    %370 = arith.divf %368, %369 : vector<8x32xf32>
    %371 = vector.extract_strided_slice %363 {offsets = [0, 32], sizes = [8, 32], strides = [1, 1]} : vector<8x128xf32> to vector<8x32xf32>
    %372 = arith.negf %371 : vector<8x32xf32>
    %373 = math.exp %372 : vector<8x32xf32>
    %cst_99 = arith.constant 1.000000e+00 : f32
    %374 = vector.broadcast %cst_99 : f32 to vector<8x32xf32>
    %375 = arith.addf %374, %373 : vector<8x32xf32>
    %376 = arith.divf %374, %375 : vector<8x32xf32>
    %377 = vector.extract_strided_slice %363 {offsets = [0, 64], sizes = [8, 32], strides = [1, 1]} : vector<8x128xf32> to vector<8x32xf32>
    %378 = math.tanh %377 : vector<8x32xf32>
    %379 = vector.extract_strided_slice %363 {offsets = [0, 96], sizes = [8, 32], strides = [1, 1]} : vector<8x128xf32> to vector<8x32xf32>
    %380 = arith.negf %379 : vector<8x32xf32>
    %381 = math.exp %380 : vector<8x32xf32>
    %cst_100 = arith.constant 1.000000e+00 : f32
    %382 = vector.broadcast %cst_100 : f32 to vector<8x32xf32>
    %383 = arith.addf %382, %381 : vector<8x32xf32>
    %384 = arith.divf %382, %383 : vector<8x32xf32>
    %385 = arith.mulf %376, %364 : vector<8x32xf32>
    %386 = arith.mulf %370, %378 : vector<8x32xf32>
    %387 = arith.addf %385, %386 : vector<8x32xf32>
    %388 = math.tanh %387 : vector<8x32xf32>
    %389 = arith.mulf %384, %388 : vector<8x32xf32>
    %c16_101 = arith.constant 16 : index
    %c0_102 = arith.constant 0 : index
    %390 = vector.load %arg16[%c16_101, %c0_102] : memref<64x32xf32, #tpu.memory_space<vmem>>, vector<8x32xf32>
    tpu.vector_store %arg16[%c16_101, %c0_102], %389 {strides = array<i32>} : memref<64x32xf32, #tpu.memory_space<vmem>>, vector<8x32xf32>,
    %391 = tpu.concatenate %359, %389 in 1 : vector<8x32xf32>, vector<8x32xf32> -> vector<8x64xf32>
    %392 = tpu.concatenate %357, %387 in 1 : vector<8x32xf32>, vector<8x32xf32> -> vector<8x64xf32>
    %c0_103 = arith.constant 0 : index
    %c0_104 = arith.constant 0 : index
    %393 = vector.load %arg2[%c0_103, %c0_104] : memref<64x256xf32, #tpu.memory_space<vmem>>, vector<64x256xf32>
    %cst_105 = arith.constant dense<0.000000e+00> : vector<8x256xf32>
    %394 = tpu.matmul %391, %393, %cst_105 {dimension_numbers = #tpu.dot_dimension_numbers<[1], [0], [0], [1], [0, 0, 1, 1], [], []>} : vector<8x64xf32>, vector<64x256xf32>, vector<8x256xf32> -> vector<8x256xf32>
    %395 = vector.extract_strided_slice %394 {offsets = [0, 0], sizes = [8, 128], strides = [1, 1]} : vector<8x256xf32> to vector<8x128xf32>
    %c48_106 = arith.constant 48 : index
    %c0_107 = arith.constant 0 : index
    %396 = vector.load %arg14[%c48_106, %c0_107] : memref<64x256xf32, #tpu.memory_space<vmem>>, vector<8x128xf32>
    %397 = arith.addf %395, %396 : vector<8x128xf32>
    %398 = vector.extract_strided_slice %392 {offsets = [0, 0], sizes = [8, 32], strides = [1, 1]} : vector<8x64xf32> to vector<8x32xf32>
    %399 = vector.extract_strided_slice %397 {offsets = [0, 0], sizes = [8, 32], strides = [1, 1]} : vector<8x128xf32> to vector<8x32xf32>
    %400 = arith.negf %399 : vector<8x32xf32>
    %401 = math.exp %400 : vector<8x32xf32>
    %cst_108 = arith.constant 1.000000e+00 : f32
    %402 = vector.broadcast %cst_108 : f32 to vector<8x32xf32>
    %403 = arith.addf %402, %401 : vector<8x32xf32>
    %404 = arith.divf %402, %403 : vector<8x32xf32>
    %405 = vector.extract_strided_slice %397 {offsets = [0, 32], sizes = [8, 32], strides = [1, 1]} : vector<8x128xf32> to vector<8x32xf32>
    %406 = arith.negf %405 : vector<8x32xf32>
    %407 = math.exp %406 : vector<8x32xf32>
    %cst_109 = arith.constant 1.000000e+00 : f32
    %408 = vector.broadcast %cst_109 : f32 to vector<8x32xf32>
    %409 = arith.addf %408, %407 : vector<8x32xf32>
    %410 = arith.divf %408, %409 : vector<8x32xf32>
    %411 = vector.extract_strided_slice %397 {offsets = [0, 64], sizes = [8, 32], strides = [1, 1]} : vector<8x128xf32> to vector<8x32xf32>
    %412 = math.tanh %411 : vector<8x32xf32>
    %413 = vector.extract_strided_slice %397 {offsets = [0, 96], sizes = [8, 32], strides = [1, 1]} : vector<8x128xf32> to vector<8x32xf32>
    %414 = arith.negf %413 : vector<8x32xf32>
    %415 = math.exp %414 : vector<8x32xf32>
    %cst_110 = arith.constant 1.000000e+00 : f32
    %416 = vector.broadcast %cst_110 : f32 to vector<8x32xf32>
    %417 = arith.addf %416, %415 : vector<8x32xf32>
    %418 = arith.divf %416, %417 : vector<8x32xf32>
    %419 = arith.mulf %410, %398 : vector<8x32xf32>
    %420 = arith.mulf %404, %412 : vector<8x32xf32>
    %421 = arith.addf %419, %420 : vector<8x32xf32>
    %422 = math.tanh %421 : vector<8x32xf32>
    %423 = arith.mulf %418, %422 : vector<8x32xf32>
    %c48_111 = arith.constant 48 : index
    %c0_112 = arith.constant 0 : index
    %424 = vector.load %arg15[%c48_111, %c0_112] : memref<64x32xf32, #tpu.memory_space<vmem>>, vector<8x32xf32>
    tpu.vector_store %arg15[%c48_111, %c0_112], %423 {strides = array<i32>} : memref<64x32xf32, #tpu.memory_space<vmem>>, vector<8x32xf32>,
    %425 = vector.extract_strided_slice %394 {offsets = [0, 128], sizes = [8, 128], strides = [1, 1]} : vector<8x256xf32> to vector<8x128xf32>
    %c8_113 = arith.constant 8 : index
    %c128_114 = arith.constant 128 : index
    %426 = vector.load %arg14[%c8_113, %c128_114] : memref<64x256xf32, #tpu.memory_space<vmem>>, vector<8x128xf32>
    %427 = arith.addf %425, %426 : vector<8x128xf32>
    %428 = vector.extract_strided_slice %392 {offsets = [0, 32], sizes = [8, 32], strides = [1, 1]} : vector<8x64xf32> to vector<8x32xf32>
    %429 = vector.extract_strided_slice %427 {offsets = [0, 0], sizes = [8, 32], strides = [1, 1]} : vector<8x128xf32> to vector<8x32xf32>
    %430 = arith.negf %429 : vector<8x32xf32>
    %431 = math.exp %430 : vector<8x32xf32>
    %cst_115 = arith.constant 1.000000e+00 : f32
    %432 = vector.broadcast %cst_115 : f32 to vector<8x32xf32>
    %433 = arith.addf %432, %431 : vector<8x32xf32>
    %434 = arith.divf %432, %433 : vector<8x32xf32>
    %435 = vector.extract_strided_slice %427 {offsets = [0, 32], sizes = [8, 32], strides = [1, 1]} : vector<8x128xf32> to vector<8x32xf32>
    %436 = arith.negf %435 : vector<8x32xf32>
    %437 = math.exp %436 : vector<8x32xf32>
    %cst_116 = arith.constant 1.000000e+00 : f32
    %438 = vector.broadcast %cst_116 : f32 to vector<8x32xf32>
    %439 = arith.addf %438, %437 : vector<8x32xf32>
    %440 = arith.divf %438, %439 : vector<8x32xf32>
    %441 = vector.extract_strided_slice %427 {offsets = [0, 64], sizes = [8, 32], strides = [1, 1]} : vector<8x128xf32> to vector<8x32xf32>
    %442 = math.tanh %441 : vector<8x32xf32>
    %443 = vector.extract_strided_slice %427 {offsets = [0, 96], sizes = [8, 32], strides = [1, 1]} : vector<8x128xf32> to vector<8x32xf32>
    %444 = arith.negf %443 : vector<8x32xf32>
    %445 = math.exp %444 : vector<8x32xf32>
    %cst_117 = arith.constant 1.000000e+00 : f32
    %446 = vector.broadcast %cst_117 : f32 to vector<8x32xf32>
    %447 = arith.addf %446, %445 : vector<8x32xf32>
    %448 = arith.divf %446, %447 : vector<8x32xf32>
    %449 = arith.mulf %440, %428 : vector<8x32xf32>
    %450 = arith.mulf %434, %442 : vector<8x32xf32>
    %451 = arith.addf %449, %450 : vector<8x32xf32>
    %452 = math.tanh %451 : vector<8x32xf32>
    %453 = arith.mulf %448, %452 : vector<8x32xf32>
    %c8_118 = arith.constant 8 : index
    %c0_119 = arith.constant 0 : index
    %454 = vector.load %arg16[%c8_118, %c0_119] : memref<64x32xf32, #tpu.memory_space<vmem>>, vector<8x32xf32>
    tpu.vector_store %arg16[%c8_118, %c0_119], %453 {strides = array<i32>} : memref<64x32xf32, #tpu.memory_space<vmem>>, vector<8x32xf32>,
    %455 = tpu.concatenate %423, %453 in 1 : vector<8x32xf32>, vector<8x32xf32> -> vector<8x64xf32>
    %456 = tpu.concatenate %421, %451 in 1 : vector<8x32xf32>, vector<8x32xf32> -> vector<8x64xf32>
    %c0_120 = arith.constant 0 : index
    %c0_121 = arith.constant 0 : index
    %457 = vector.load %arg2[%c0_120, %c0_121] : memref<64x256xf32, #tpu.memory_space<vmem>>, vector<64x256xf32>
    %cst_122 = arith.constant dense<0.000000e+00> : vector<8x256xf32>
    %458 = tpu.matmul %455, %457, %cst_122 {dimension_numbers = #tpu.dot_dimension_numbers<[1], [0], [0], [1], [0, 0, 1, 1], [], []>} : vector<8x64xf32>, vector<64x256xf32>, vector<8x256xf32> -> vector<8x256xf32>
    %459 = vector.extract_strided_slice %458 {offsets = [0, 0], sizes = [8, 128], strides = [1, 1]} : vector<8x256xf32> to vector<8x128xf32>
    %c56_123 = arith.constant 56 : index
    %c0_124 = arith.constant 0 : index
    %460 = vector.load %arg14[%c56_123, %c0_124] : memref<64x256xf32, #tpu.memory_space<vmem>>, vector<8x128xf32>
    %461 = arith.addf %459, %460 : vector<8x128xf32>
    %462 = vector.extract_strided_slice %456 {offsets = [0, 0], sizes = [8, 32], strides = [1, 1]} : vector<8x64xf32> to vector<8x32xf32>
    %463 = vector.extract_strided_slice %461 {offsets = [0, 0], sizes = [8, 32], strides = [1, 1]} : vector<8x128xf32> to vector<8x32xf32>
    %464 = arith.negf %463 : vector<8x32xf32>
    %465 = math.exp %464 : vector<8x32xf32>
    %cst_125 = arith.constant 1.000000e+00 : f32
    %466 = vector.broadcast %cst_125 : f32 to vector<8x32xf32>
    %467 = arith.addf %466, %465 : vector<8x32xf32>
    %468 = arith.divf %466, %467 : vector<8x32xf32>
    %469 = vector.extract_strided_slice %461 {offsets = [0, 32], sizes = [8, 32], strides = [1, 1]} : vector<8x128xf32> to vector<8x32xf32>
    %470 = arith.negf %469 : vector<8x32xf32>
    %471 = math.exp %470 : vector<8x32xf32>
    %cst_126 = arith.constant 1.000000e+00 : f32
    %472 = vector.broadcast %cst_126 : f32 to vector<8x32xf32>
    %473 = arith.addf %472, %471 : vector<8x32xf32>
    %474 = arith.divf %472, %473 : vector<8x32xf32>
    %475 = vector.extract_strided_slice %461 {offsets = [0, 64], sizes = [8, 32], strides = [1, 1]} : vector<8x128xf32> to vector<8x32xf32>
    %476 = math.tanh %475 : vector<8x32xf32>
    %477 = vector.extract_strided_slice %461 {offsets = [0, 96], sizes = [8, 32], strides = [1, 1]} : vector<8x128xf32> to vector<8x32xf32>
    %478 = arith.negf %477 : vector<8x32xf32>
    %479 = math.exp %478 : vector<8x32xf32>
    %cst_127 = arith.constant 1.000000e+00 : f32
    %480 = vector.broadcast %cst_127 : f32 to vector<8x32xf32>
    %481 = arith.addf %480, %479 : vector<8x32xf32>
    %482 = arith.divf %480, %481 : vector<8x32xf32>
    %483 = arith.mulf %474, %462 : vector<8x32xf32>
    %484 = arith.mulf %468, %476 : vector<8x32xf32>
    %485 = arith.addf %483, %484 : vector<8x32xf32>
    %486 = math.tanh %485 : vector<8x32xf32>
    %487 = arith.mulf %482, %486 : vector<8x32xf32>
    %c56_128 = arith.constant 56 : index
    %c0_129 = arith.constant 0 : index
    %488 = vector.load %arg15[%c56_128, %c0_129] : memref<64x32xf32, #tpu.memory_space<vmem>>, vector<8x32xf32>
    tpu.vector_store %arg15[%c56_128, %c0_129], %487 {strides = array<i32>} : memref<64x32xf32, #tpu.memory_space<vmem>>, vector<8x32xf32>,
    %489 = vector.extract_strided_slice %458 {offsets = [0, 128], sizes = [8, 128], strides = [1, 1]} : vector<8x256xf32> to vector<8x128xf32>
    %c0_130 = arith.constant 0 : index
    %c128_131 = arith.constant 128 : index
    %490 = vector.load %arg14[%c0_130, %c128_131] : memref<64x256xf32, #tpu.memory_space<vmem>>, vector<8x128xf32>
    %491 = arith.addf %489, %490 : vector<8x128xf32>
    %492 = vector.extract_strided_slice %456 {offsets = [0, 32], sizes = [8, 32], strides = [1, 1]} : vector<8x64xf32> to vector<8x32xf32>
    %493 = vector.extract_strided_slice %491 {offsets = [0, 0], sizes = [8, 32], strides = [1, 1]} : vector<8x128xf32> to vector<8x32xf32>
    %494 = arith.negf %493 : vector<8x32xf32>
    %495 = math.exp %494 : vector<8x32xf32>
    %cst_132 = arith.constant 1.000000e+00 : f32
    %496 = vector.broadcast %cst_132 : f32 to vector<8x32xf32>
    %497 = arith.addf %496, %495 : vector<8x32xf32>
    %498 = arith.divf %496, %497 : vector<8x32xf32>
    %499 = vector.extract_strided_slice %491 {offsets = [0, 32], sizes = [8, 32], strides = [1, 1]} : vector<8x128xf32> to vector<8x32xf32>
    %500 = arith.negf %499 : vector<8x32xf32>
    %501 = math.exp %500 : vector<8x32xf32>
    %cst_133 = arith.constant 1.000000e+00 : f32
    %502 = vector.broadcast %cst_133 : f32 to vector<8x32xf32>
    %503 = arith.addf %502, %501 : vector<8x32xf32>
    %504 = arith.divf %502, %503 : vector<8x32xf32>
    %505 = vector.extract_strided_slice %491 {offsets = [0, 64], sizes = [8, 32], strides = [1, 1]} : vector<8x128xf32> to vector<8x32xf32>
    %506 = math.tanh %505 : vector<8x32xf32>
    %507 = vector.extract_strided_slice %491 {offsets = [0, 96], sizes = [8, 32], strides = [1, 1]} : vector<8x128xf32> to vector<8x32xf32>
    %508 = arith.negf %507 : vector<8x32xf32>
    %509 = math.exp %508 : vector<8x32xf32>
    %cst_134 = arith.constant 1.000000e+00 : f32
    %510 = vector.broadcast %cst_134 : f32 to vector<8x32xf32>
    %511 = arith.addf %510, %509 : vector<8x32xf32>
    %512 = arith.divf %510, %511 : vector<8x32xf32>
    %513 = arith.mulf %504, %492 : vector<8x32xf32>
    %514 = arith.mulf %498, %506 : vector<8x32xf32>
    %515 = arith.addf %513, %514 : vector<8x32xf32>
    %516 = math.tanh %515 : vector<8x32xf32>
    %517 = arith.mulf %512, %516 : vector<8x32xf32>
    %c0_135 = arith.constant 0 : index
    %c0_136 = arith.constant 0 : index
    %518 = vector.load %arg16[%c0_135, %c0_136] : memref<64x32xf32, #tpu.memory_space<vmem>>, vector<8x32xf32>
    tpu.vector_store %arg16[%c0_135, %c0_136], %517 {strides = array<i32>} : memref<64x32xf32, #tpu.memory_space<vmem>>, vector<8x32xf32>,
    %c0_137 = arith.constant 0 : index
    %c0_138 = arith.constant 0 : index
    %519 = vector.load %arg15[%c0_137, %c0_138] : memref<64x32xf32, #tpu.memory_space<vmem>>, vector<64x32xf32>
    %c0_139 = arith.constant 0 : index
    %c0_140 = arith.constant 0 : index
    %520 = vector.load %arg16[%c0_139, %c0_140] : memref<64x32xf32, #tpu.memory_space<vmem>>, vector<64x32xf32>
    %521 = tpu.concatenate %519, %520 in 1 : vector<64x32xf32>, vector<64x32xf32> -> vector<64x64xf32>
    %c0_141 = arith.constant 0 : index
    %c0_142 = arith.constant 0 : index
    %522 = vector.load %arg4[%c0_141, %c0_142] : memref<64x256xf32, #tpu.memory_space<vmem>>, vector<64x256xf32>
    %cst_143 = arith.constant dense<0.000000e+00> : vector<64x256xf32>
    %523 = tpu.matmul %521, %522, %cst_143 {dimension_numbers = #tpu.dot_dimension_numbers<[1], [0], [0], [1], [0, 0, 1, 1], [], []>} : vector<64x64xf32>, vector<64x256xf32>, vector<64x256xf32> -> vector<64x256xf32>
    %c0_144 = arith.constant 0 : index
    %c0_145 = arith.constant 0 : index
    %524 = vector.load %arg6[%c0_144, %c0_145] : memref<1x256xf32, #tpu.memory_space<vmem>>, vector<1x256xf32>
    %525 = vector.broadcast %524 : vector<1x256xf32> to vector<64x256xf32>
    %526 = arith.addf %523, %525 : vector<64x256xf32>
    %c0_146 = arith.constant 0 : index
    %c0_147 = arith.constant 0 : index
    %527 = vector.load %arg14[%c0_146, %c0_147] : memref<64x256xf32, #tpu.memory_space<vmem>>, vector<64x256xf32>
    tpu.vector_store %arg14[%c0_146, %c0_147], %526 {strides = array<i32>} : memref<64x256xf32, #tpu.memory_space<vmem>>, vector<64x256xf32>,
    %cst_148 = arith.constant 0.000000e+00 : f32
    %528 = vector.broadcast %cst_148 : f32 to vector<8x64xf32>
    %cst_149 = arith.constant 0.000000e+00 : f32
    %529 = vector.broadcast %cst_149 : f32 to vector<8x64xf32>
    %c0_150 = arith.constant 0 : index
    %c0_151 = arith.constant 0 : index
    %530 = vector.load %arg5[%c0_150, %c0_151] : memref<64x256xf32, #tpu.memory_space<vmem>>, vector<64x256xf32>
    %cst_152 = arith.constant dense<0.000000e+00> : vector<8x256xf32>
    %531 = tpu.matmul %528, %530, %cst_152 {dimension_numbers = #tpu.dot_dimension_numbers<[1], [0], [0], [1], [0, 0, 1, 1], [], []>} : vector<8x64xf32>, vector<64x256xf32>, vector<8x256xf32> -> vector<8x256xf32>
    %532 = vector.extract_strided_slice %531 {offsets = [0, 0], sizes = [8, 128], strides = [1, 1]} : vector<8x256xf32> to vector<8x128xf32>
    %c0_153 = arith.constant 0 : index
    %c0_154 = arith.constant 0 : index
    %533 = vector.load %arg14[%c0_153, %c0_154] : memref<64x256xf32, #tpu.memory_space<vmem>>, vector<8x128xf32>
    %534 = arith.addf %532, %533 : vector<8x128xf32>
    %535 = vector.extract_strided_slice %529 {offsets = [0, 0], sizes = [8, 32], strides = [1, 1]} : vector<8x64xf32> to vector<8x32xf32>
    %536 = vector.extract_strided_slice %534 {offsets = [0, 0], sizes = [8, 32], strides = [1, 1]} : vector<8x128xf32> to vector<8x32xf32>
    %537 = arith.negf %536 : vector<8x32xf32>
    %538 = math.exp %537 : vector<8x32xf32>
    %cst_155 = arith.constant 1.000000e+00 : f32
    %539 = vector.broadcast %cst_155 : f32 to vector<8x32xf32>
    %540 = arith.addf %539, %538 : vector<8x32xf32>
    %541 = arith.divf %539, %540 : vector<8x32xf32>
    %542 = vector.extract_strided_slice %534 {offsets = [0, 32], sizes = [8, 32], strides = [1, 1]} : vector<8x128xf32> to vector<8x32xf32>
    %543 = arith.negf %542 : vector<8x32xf32>
    %544 = math.exp %543 : vector<8x32xf32>
    %cst_156 = arith.constant 1.000000e+00 : f32
    %545 = vector.broadcast %cst_156 : f32 to vector<8x32xf32>
    %546 = arith.addf %545, %544 : vector<8x32xf32>
    %547 = arith.divf %545, %546 : vector<8x32xf32>
    %548 = vector.extract_strided_slice %534 {offsets = [0, 64], sizes = [8, 32], strides = [1, 1]} : vector<8x128xf32> to vector<8x32xf32>
    %549 = math.tanh %548 : vector<8x32xf32>
    %550 = vector.extract_strided_slice %534 {offsets = [0, 96], sizes = [8, 32], strides = [1, 1]} : vector<8x128xf32> to vector<8x32xf32>
    %551 = arith.negf %550 : vector<8x32xf32>
    %552 = math.exp %551 : vector<8x32xf32>
    %cst_157 = arith.constant 1.000000e+00 : f32
    %553 = vector.broadcast %cst_157 : f32 to vector<8x32xf32>
    %554 = arith.addf %553, %552 : vector<8x32xf32>
    %555 = arith.divf %553, %554 : vector<8x32xf32>
    %556 = arith.mulf %547, %535 : vector<8x32xf32>
    %557 = arith.mulf %541, %549 : vector<8x32xf32>
    %558 = arith.addf %556, %557 : vector<8x32xf32>
    %559 = math.tanh %558 : vector<8x32xf32>
    %560 = arith.mulf %555, %559 : vector<8x32xf32>
    %c0_158 = arith.constant 0 : index
    %c0_159 = arith.constant 0 : index
    %561 = vector.load %arg15[%c0_158, %c0_159] : memref<64x32xf32, #tpu.memory_space<vmem>>, vector<8x32xf32>
    tpu.vector_store %arg15[%c0_158, %c0_159], %560 {strides = array<i32>} : memref<64x32xf32, #tpu.memory_space<vmem>>, vector<8x32xf32>,
    %562 = vector.extract_strided_slice %531 {offsets = [0, 128], sizes = [8, 128], strides = [1, 1]} : vector<8x256xf32> to vector<8x128xf32>
    %c56_160 = arith.constant 56 : index
    %c128_161 = arith.constant 128 : index
    %563 = vector.load %arg14[%c56_160, %c128_161] : memref<64x256xf32, #tpu.memory_space<vmem>>, vector<8x128xf32>
    %564 = arith.addf %562, %563 : vector<8x128xf32>
    %565 = vector.extract_strided_slice %529 {offsets = [0, 32], sizes = [8, 32], strides = [1, 1]} : vector<8x64xf32> to vector<8x32xf32>
    %566 = vector.extract_strided_slice %564 {offsets = [0, 0], sizes = [8, 32], strides = [1, 1]} : vector<8x128xf32> to vector<8x32xf32>
    %567 = arith.negf %566 : vector<8x32xf32>
    %568 = math.exp %567 : vector<8x32xf32>
    %cst_162 = arith.constant 1.000000e+00 : f32
    %569 = vector.broadcast %cst_162 : f32 to vector<8x32xf32>
    %570 = arith.addf %569, %568 : vector<8x32xf32>
    %571 = arith.divf %569, %570 : vector<8x32xf32>
    %572 = vector.extract_strided_slice %564 {offsets = [0, 32], sizes = [8, 32], strides = [1, 1]} : vector<8x128xf32> to vector<8x32xf32>
    %573 = arith.negf %572 : vector<8x32xf32>
    %574 = math.exp %573 : vector<8x32xf32>
    %cst_163 = arith.constant 1.000000e+00 : f32
    %575 = vector.broadcast %cst_163 : f32 to vector<8x32xf32>
    %576 = arith.addf %575, %574 : vector<8x32xf32>
    %577 = arith.divf %575, %576 : vector<8x32xf32>
    %578 = vector.extract_strided_slice %564 {offsets = [0, 64], sizes = [8, 32], strides = [1, 1]} : vector<8x128xf32> to vector<8x32xf32>
    %579 = math.tanh %578 : vector<8x32xf32>
    %580 = vector.extract_strided_slice %564 {offsets = [0, 96], sizes = [8, 32], strides = [1, 1]} : vector<8x128xf32> to vector<8x32xf32>
    %581 = arith.negf %580 : vector<8x32xf32>
    %582 = math.exp %581 : vector<8x32xf32>
    %cst_164 = arith.constant 1.000000e+00 : f32
    %583 = vector.broadcast %cst_164 : f32 to vector<8x32xf32>
    %584 = arith.addf %583, %582 : vector<8x32xf32>
    %585 = arith.divf %583, %584 : vector<8x32xf32>
    %586 = arith.mulf %577, %565 : vector<8x32xf32>
    %587 = arith.mulf %571, %579 : vector<8x32xf32>
    %588 = arith.addf %586, %587 : vector<8x32xf32>
    %589 = math.tanh %588 : vector<8x32xf32>
    %590 = arith.mulf %585, %589 : vector<8x32xf32>
    %c56_165 = arith.constant 56 : index
    %c0_166 = arith.constant 0 : index
    %591 = vector.load %arg16[%c56_165, %c0_166] : memref<64x32xf32, #tpu.memory_space<vmem>>, vector<8x32xf32>
    tpu.vector_store %arg16[%c56_165, %c0_166], %590 {strides = array<i32>} : memref<64x32xf32, #tpu.memory_space<vmem>>, vector<8x32xf32>,
    %592 = tpu.concatenate %560, %590 in 1 : vector<8x32xf32>, vector<8x32xf32> -> vector<8x64xf32>
    %593 = tpu.concatenate %558, %588 in 1 : vector<8x32xf32>, vector<8x32xf32> -> vector<8x64xf32>
    %c0_167 = arith.constant 0 : index
    %c0_168 = arith.constant 0 : index
    %594 = vector.load %arg5[%c0_167, %c0_168] : memref<64x256xf32, #tpu.memory_space<vmem>>, vector<64x256xf32>
    %cst_169 = arith.constant dense<0.000000e+00> : vector<8x256xf32>
    %595 = tpu.matmul %592, %594, %cst_169 {dimension_numbers = #tpu.dot_dimension_numbers<[1], [0], [0], [1], [0, 0, 1, 1], [], []>} : vector<8x64xf32>, vector<64x256xf32>, vector<8x256xf32> -> vector<8x256xf32>
    %596 = vector.extract_strided_slice %595 {offsets = [0, 0], sizes = [8, 128], strides = [1, 1]} : vector<8x256xf32> to vector<8x128xf32>
    %c8_170 = arith.constant 8 : index
    %c0_171 = arith.constant 0 : index
    %597 = vector.load %arg14[%c8_170, %c0_171] : memref<64x256xf32, #tpu.memory_space<vmem>>, vector<8x128xf32>
    %598 = arith.addf %596, %597 : vector<8x128xf32>
    %599 = vector.extract_strided_slice %593 {offsets = [0, 0], sizes = [8, 32], strides = [1, 1]} : vector<8x64xf32> to vector<8x32xf32>
    %600 = vector.extract_strided_slice %598 {offsets = [0, 0], sizes = [8, 32], strides = [1, 1]} : vector<8x128xf32> to vector<8x32xf32>
    %601 = arith.negf %600 : vector<8x32xf32>
    %602 = math.exp %601 : vector<8x32xf32>
    %cst_172 = arith.constant 1.000000e+00 : f32
    %603 = vector.broadcast %cst_172 : f32 to vector<8x32xf32>
    %604 = arith.addf %603, %602 : vector<8x32xf32>
    %605 = arith.divf %603, %604 : vector<8x32xf32>
    %606 = vector.extract_strided_slice %598 {offsets = [0, 32], sizes = [8, 32], strides = [1, 1]} : vector<8x128xf32> to vector<8x32xf32>
    %607 = arith.negf %606 : vector<8x32xf32>
    %608 = math.exp %607 : vector<8x32xf32>
    %cst_173 = arith.constant 1.000000e+00 : f32
    %609 = vector.broadcast %cst_173 : f32 to vector<8x32xf32>
    %610 = arith.addf %609, %608 : vector<8x32xf32>
    %611 = arith.divf %609, %610 : vector<8x32xf32>
    %612 = vector.extract_strided_slice %598 {offsets = [0, 64], sizes = [8, 32], strides = [1, 1]} : vector<8x128xf32> to vector<8x32xf32>
    %613 = math.tanh %612 : vector<8x32xf32>
    %614 = vector.extract_strided_slice %598 {offsets = [0, 96], sizes = [8, 32], strides = [1, 1]} : vector<8x128xf32> to vector<8x32xf32>
    %615 = arith.negf %614 : vector<8x32xf32>
    %616 = math.exp %615 : vector<8x32xf32>
    %cst_174 = arith.constant 1.000000e+00 : f32
    %617 = vector.broadcast %cst_174 : f32 to vector<8x32xf32>
    %618 = arith.addf %617, %616 : vector<8x32xf32>
    %619 = arith.divf %617, %618 : vector<8x32xf32>
    %620 = arith.mulf %611, %599 : vector<8x32xf32>
    %621 = arith.mulf %605, %613 : vector<8x32xf32>
    %622 = arith.addf %620, %621 : vector<8x32xf32>
    %623 = math.tanh %622 : vector<8x32xf32>
    %624 = arith.mulf %619, %623 : vector<8x32xf32>
    %c8_175 = arith.constant 8 : index
    %c0_176 = arith.constant 0 : index
    %625 = vector.load %arg15[%c8_175, %c0_176] : memref<64x32xf32, #tpu.memory_space<vmem>>, vector<8x32xf32>
    tpu.vector_store %arg15[%c8_175, %c0_176], %624 {strides = array<i32>} : memref<64x32xf32, #tpu.memory_space<vmem>>, vector<8x32xf32>,
    %626 = vector.extract_strided_slice %595 {offsets = [0, 128], sizes = [8, 128], strides = [1, 1]} : vector<8x256xf32> to vector<8x128xf32>
    %c48_177 = arith.constant 48 : index
    %c128_178 = arith.constant 128 : index
    %627 = vector.load %arg14[%c48_177, %c128_178] : memref<64x256xf32, #tpu.memory_space<vmem>>, vector<8x128xf32>
    %628 = arith.addf %626, %627 : vector<8x128xf32>
    %629 = vector.extract_strided_slice %593 {offsets = [0, 32], sizes = [8, 32], strides = [1, 1]} : vector<8x64xf32> to vector<8x32xf32>
    %630 = vector.extract_strided_slice %628 {offsets = [0, 0], sizes = [8, 32], strides = [1, 1]} : vector<8x128xf32> to vector<8x32xf32>
    %631 = arith.negf %630 : vector<8x32xf32>
    %632 = math.exp %631 : vector<8x32xf32>
    %cst_179 = arith.constant 1.000000e+00 : f32
    %633 = vector.broadcast %cst_179 : f32 to vector<8x32xf32>
    %634 = arith.addf %633, %632 : vector<8x32xf32>
    %635 = arith.divf %633, %634 : vector<8x32xf32>
    %636 = vector.extract_strided_slice %628 {offsets = [0, 32], sizes = [8, 32], strides = [1, 1]} : vector<8x128xf32> to vector<8x32xf32>
    %637 = arith.negf %636 : vector<8x32xf32>
    %638 = math.exp %637 : vector<8x32xf32>
    %cst_180 = arith.constant 1.000000e+00 : f32
    %639 = vector.broadcast %cst_180 : f32 to vector<8x32xf32>
    %640 = arith.addf %639, %638 : vector<8x32xf32>
    %641 = arith.divf %639, %640 : vector<8x32xf32>
    %642 = vector.extract_strided_slice %628 {offsets = [0, 64], sizes = [8, 32], strides = [1, 1]} : vector<8x128xf32> to vector<8x32xf32>
    %643 = math.tanh %642 : vector<8x32xf32>
    %644 = vector.extract_strided_slice %628 {offsets = [0, 96], sizes = [8, 32], strides = [1, 1]} : vector<8x128xf32> to vector<8x32xf32>
    %645 = arith.negf %644 : vector<8x32xf32>
    %646 = math.exp %645 : vector<8x32xf32>
    %cst_181 = arith.constant 1.000000e+00 : f32
    %647 = vector.broadcast %cst_181 : f32 to vector<8x32xf32>
    %648 = arith.addf %647, %646 : vector<8x32xf32>
    %649 = arith.divf %647, %648 : vector<8x32xf32>
    %650 = arith.mulf %641, %629 : vector<8x32xf32>
    %651 = arith.mulf %635, %643 : vector<8x32xf32>
    %652 = arith.addf %650, %651 : vector<8x32xf32>
    %653 = math.tanh %652 : vector<8x32xf32>
    %654 = arith.mulf %649, %653 : vector<8x32xf32>
    %c48_182 = arith.constant 48 : index
    %c0_183 = arith.constant 0 : index
    %655 = vector.load %arg16[%c48_182, %c0_183] : memref<64x32xf32, #tpu.memory_space<vmem>>, vector<8x32xf32>
    tpu.vector_store %arg16[%c48_182, %c0_183], %654 {strides = array<i32>} : memref<64x32xf32, #tpu.memory_space<vmem>>, vector<8x32xf32>,
    %656 = tpu.concatenate %624, %654 in 1 : vector<8x32xf32>, vector<8x32xf32> -> vector<8x64xf32>
    %657 = tpu.concatenate %622, %652 in 1 : vector<8x32xf32>, vector<8x32xf32> -> vector<8x64xf32>
    %c0_184 = arith.constant 0 : index
    %c0_185 = arith.constant 0 : index
    %658 = vector.load %arg5[%c0_184, %c0_185] : memref<64x256xf32, #tpu.memory_space<vmem>>, vector<64x256xf32>
    %cst_186 = arith.constant dense<0.000000e+00> : vector<8x256xf32>
    %659 = tpu.matmul %656, %658, %cst_186 {dimension_numbers = #tpu.dot_dimension_numbers<[1], [0], [0], [1], [0, 0, 1, 1], [], []>} : vector<8x64xf32>, vector<64x256xf32>, vector<8x256xf32> -> vector<8x256xf32>
    %660 = vector.extract_strided_slice %659 {offsets = [0, 0], sizes = [8, 128], strides = [1, 1]} : vector<8x256xf32> to vector<8x128xf32>
    %c16_187 = arith.constant 16 : index
    %c0_188 = arith.constant 0 : index
    %661 = vector.load %arg14[%c16_187, %c0_188] : memref<64x256xf32, #tpu.memory_space<vmem>>, vector<8x128xf32>
    %662 = arith.addf %660, %661 : vector<8x128xf32>
    %663 = vector.extract_strided_slice %657 {offsets = [0, 0], sizes = [8, 32], strides = [1, 1]} : vector<8x64xf32> to vector<8x32xf32>
    %664 = vector.extract_strided_slice %662 {offsets = [0, 0], sizes = [8, 32], strides = [1, 1]} : vector<8x128xf32> to vector<8x32xf32>
    %665 = arith.negf %664 : vector<8x32xf32>
    %666 = math.exp %665 : vector<8x32xf32>
    %cst_189 = arith.constant 1.000000e+00 : f32
    %667 = vector.broadcast %cst_189 : f32 to vector<8x32xf32>
    %668 = arith.addf %667, %666 : vector<8x32xf32>
    %669 = arith.divf %667, %668 : vector<8x32xf32>
    %670 = vector.extract_strided_slice %662 {offsets = [0, 32], sizes = [8, 32], strides = [1, 1]} : vector<8x128xf32> to vector<8x32xf32>
    %671 = arith.negf %670 : vector<8x32xf32>
    %672 = math.exp %671 : vector<8x32xf32>
    %cst_190 = arith.constant 1.000000e+00 : f32
    %673 = vector.broadcast %cst_190 : f32 to vector<8x32xf32>
    %674 = arith.addf %673, %672 : vector<8x32xf32>
    %675 = arith.divf %673, %674 : vector<8x32xf32>
    %676 = vector.extract_strided_slice %662 {offsets = [0, 64], sizes = [8, 32], strides = [1, 1]} : vector<8x128xf32> to vector<8x32xf32>
    %677 = math.tanh %676 : vector<8x32xf32>
    %678 = vector.extract_strided_slice %662 {offsets = [0, 96], sizes = [8, 32], strides = [1, 1]} : vector<8x128xf32> to vector<8x32xf32>
    %679 = arith.negf %678 : vector<8x32xf32>
    %680 = math.exp %679 : vector<8x32xf32>
    %cst_191 = arith.constant 1.000000e+00 : f32
    %681 = vector.broadcast %cst_191 : f32 to vector<8x32xf32>
    %682 = arith.addf %681, %680 : vector<8x32xf32>
    %683 = arith.divf %681, %682 : vector<8x32xf32>
    %684 = arith.mulf %675, %663 : vector<8x32xf32>
    %685 = arith.mulf %669, %677 : vector<8x32xf32>
    %686 = arith.addf %684, %685 : vector<8x32xf32>
    %687 = math.tanh %686 : vector<8x32xf32>
    %688 = arith.mulf %683, %687 : vector<8x32xf32>
    %c16_192 = arith.constant 16 : index
    %c0_193 = arith.constant 0 : index
    %689 = vector.load %arg15[%c16_192, %c0_193] : memref<64x32xf32, #tpu.memory_space<vmem>>, vector<8x32xf32>
    tpu.vector_store %arg15[%c16_192, %c0_193], %688 {strides = array<i32>} : memref<64x32xf32, #tpu.memory_space<vmem>>, vector<8x32xf32>,
    %690 = vector.extract_strided_slice %659 {offsets = [0, 128], sizes = [8, 128], strides = [1, 1]} : vector<8x256xf32> to vector<8x128xf32>
    %c40_194 = arith.constant 40 : index
    %c128_195 = arith.constant 128 : index
    %691 = vector.load %arg14[%c40_194, %c128_195] : memref<64x256xf32, #tpu.memory_space<vmem>>, vector<8x128xf32>
    %692 = arith.addf %690, %691 : vector<8x128xf32>
    %693 = vector.extract_strided_slice %657 {offsets = [0, 32], sizes = [8, 32], strides = [1, 1]} : vector<8x64xf32> to vector<8x32xf32>
    %694 = vector.extract_strided_slice %692 {offsets = [0, 0], sizes = [8, 32], strides = [1, 1]} : vector<8x128xf32> to vector<8x32xf32>
    %695 = arith.negf %694 : vector<8x32xf32>
    %696 = math.exp %695 : vector<8x32xf32>
    %cst_196 = arith.constant 1.000000e+00 : f32
    %697 = vector.broadcast %cst_196 : f32 to vector<8x32xf32>
    %698 = arith.addf %697, %696 : vector<8x32xf32>
    %699 = arith.divf %697, %698 : vector<8x32xf32>
    %700 = vector.extract_strided_slice %692 {offsets = [0, 32], sizes = [8, 32], strides = [1, 1]} : vector<8x128xf32> to vector<8x32xf32>
    %701 = arith.negf %700 : vector<8x32xf32>
    %702 = math.exp %701 : vector<8x32xf32>
    %cst_197 = arith.constant 1.000000e+00 : f32
    %703 = vector.broadcast %cst_197 : f32 to vector<8x32xf32>
    %704 = arith.addf %703, %702 : vector<8x32xf32>
    %705 = arith.divf %703, %704 : vector<8x32xf32>
    %706 = vector.extract_strided_slice %692 {offsets = [0, 64], sizes = [8, 32], strides = [1, 1]} : vector<8x128xf32> to vector<8x32xf32>
    %707 = math.tanh %706 : vector<8x32xf32>
    %708 = vector.extract_strided_slice %692 {offsets = [0, 96], sizes = [8, 32], strides = [1, 1]} : vector<8x128xf32> to vector<8x32xf32>
    %709 = arith.negf %708 : vector<8x32xf32>
    %710 = math.exp %709 : vector<8x32xf32>
    %cst_198 = arith.constant 1.000000e+00 : f32
    %711 = vector.broadcast %cst_198 : f32 to vector<8x32xf32>
    %712 = arith.addf %711, %710 : vector<8x32xf32>
    %713 = arith.divf %711, %712 : vector<8x32xf32>
    %714 = arith.mulf %705, %693 : vector<8x32xf32>
    %715 = arith.mulf %699, %707 : vector<8x32xf32>
    %716 = arith.addf %714, %715 : vector<8x32xf32>
    %717 = math.tanh %716 : vector<8x32xf32>
    %718 = arith.mulf %713, %717 : vector<8x32xf32>
    %c40_199 = arith.constant 40 : index
    %c0_200 = arith.constant 0 : index
    %719 = vector.load %arg16[%c40_199, %c0_200] : memref<64x32xf32, #tpu.memory_space<vmem>>, vector<8x32xf32>
    tpu.vector_store %arg16[%c40_199, %c0_200], %718 {strides = array<i32>} : memref<64x32xf32, #tpu.memory_space<vmem>>, vector<8x32xf32>,
    %720 = tpu.concatenate %688, %718 in 1 : vector<8x32xf32>, vector<8x32xf32> -> vector<8x64xf32>
    %721 = tpu.concatenate %686, %716 in 1 : vector<8x32xf32>, vector<8x32xf32> -> vector<8x64xf32>
    %c0_201 = arith.constant 0 : index
    %c0_202 = arith.constant 0 : index
    %722 = vector.load %arg5[%c0_201, %c0_202] : memref<64x256xf32, #tpu.memory_space<vmem>>, vector<64x256xf32>
    %cst_203 = arith.constant dense<0.000000e+00> : vector<8x256xf32>
    %723 = tpu.matmul %720, %722, %cst_203 {dimension_numbers = #tpu.dot_dimension_numbers<[1], [0], [0], [1], [0, 0, 1, 1], [], []>} : vector<8x64xf32>, vector<64x256xf32>, vector<8x256xf32> -> vector<8x256xf32>
    %724 = vector.extract_strided_slice %723 {offsets = [0, 0], sizes = [8, 128], strides = [1, 1]} : vector<8x256xf32> to vector<8x128xf32>
    %c24_204 = arith.constant 24 : index
    %c0_205 = arith.constant 0 : index
    %725 = vector.load %arg14[%c24_204, %c0_205] : memref<64x256xf32, #tpu.memory_space<vmem>>, vector<8x128xf32>
    %726 = arith.addf %724, %725 : vector<8x128xf32>
    %727 = vector.extract_strided_slice %721 {offsets = [0, 0], sizes = [8, 32], strides = [1, 1]} : vector<8x64xf32> to vector<8x32xf32>
    %728 = vector.extract_strided_slice %726 {offsets = [0, 0], sizes = [8, 32], strides = [1, 1]} : vector<8x128xf32> to vector<8x32xf32>
    %729 = arith.negf %728 : vector<8x32xf32>
    %730 = math.exp %729 : vector<8x32xf32>
    %cst_206 = arith.constant 1.000000e+00 : f32
    %731 = vector.broadcast %cst_206 : f32 to vector<8x32xf32>
    %732 = arith.addf %731, %730 : vector<8x32xf32>
    %733 = arith.divf %731, %732 : vector<8x32xf32>
    %734 = vector.extract_strided_slice %726 {offsets = [0, 32], sizes = [8, 32], strides = [1, 1]} : vector<8x128xf32> to vector<8x32xf32>
    %735 = arith.negf %734 : vector<8x32xf32>
    %736 = math.exp %735 : vector<8x32xf32>
    %cst_207 = arith.constant 1.000000e+00 : f32
    %737 = vector.broadcast %cst_207 : f32 to vector<8x32xf32>
    %738 = arith.addf %737, %736 : vector<8x32xf32>
    %739 = arith.divf %737, %738 : vector<8x32xf32>
    %740 = vector.extract_strided_slice %726 {offsets = [0, 64], sizes = [8, 32], strides = [1, 1]} : vector<8x128xf32> to vector<8x32xf32>
    %741 = math.tanh %740 : vector<8x32xf32>
    %742 = vector.extract_strided_slice %726 {offsets = [0, 96], sizes = [8, 32], strides = [1, 1]} : vector<8x128xf32> to vector<8x32xf32>
    %743 = arith.negf %742 : vector<8x32xf32>
    %744 = math.exp %743 : vector<8x32xf32>
    %cst_208 = arith.constant 1.000000e+00 : f32
    %745 = vector.broadcast %cst_208 : f32 to vector<8x32xf32>
    %746 = arith.addf %745, %744 : vector<8x32xf32>
    %747 = arith.divf %745, %746 : vector<8x32xf32>
    %748 = arith.mulf %739, %727 : vector<8x32xf32>
    %749 = arith.mulf %733, %741 : vector<8x32xf32>
    %750 = arith.addf %748, %749 : vector<8x32xf32>
    %751 = math.tanh %750 : vector<8x32xf32>
    %752 = arith.mulf %747, %751 : vector<8x32xf32>
    %c24_209 = arith.constant 24 : index
    %c0_210 = arith.constant 0 : index
    %753 = vector.load %arg15[%c24_209, %c0_210] : memref<64x32xf32, #tpu.memory_space<vmem>>, vector<8x32xf32>
    tpu.vector_store %arg15[%c24_209, %c0_210], %752 {strides = array<i32>} : memref<64x32xf32, #tpu.memory_space<vmem>>, vector<8x32xf32>,
    %754 = vector.extract_strided_slice %723 {offsets = [0, 128], sizes = [8, 128], strides = [1, 1]} : vector<8x256xf32> to vector<8x128xf32>
    %c32_211 = arith.constant 32 : index
    %c128_212 = arith.constant 128 : index
    %755 = vector.load %arg14[%c32_211, %c128_212] : memref<64x256xf32, #tpu.memory_space<vmem>>, vector<8x128xf32>
    %756 = arith.addf %754, %755 : vector<8x128xf32>
    %757 = vector.extract_strided_slice %721 {offsets = [0, 32], sizes = [8, 32], strides = [1, 1]} : vector<8x64xf32> to vector<8x32xf32>
    %758 = vector.extract_strided_slice %756 {offsets = [0, 0], sizes = [8, 32], strides = [1, 1]} : vector<8x128xf32> to vector<8x32xf32>
    %759 = arith.negf %758 : vector<8x32xf32>
    %760 = math.exp %759 : vector<8x32xf32>
    %cst_213 = arith.constant 1.000000e+00 : f32
    %761 = vector.broadcast %cst_213 : f32 to vector<8x32xf32>
    %762 = arith.addf %761, %760 : vector<8x32xf32>
    %763 = arith.divf %761, %762 : vector<8x32xf32>
    %764 = vector.extract_strided_slice %756 {offsets = [0, 32], sizes = [8, 32], strides = [1, 1]} : vector<8x128xf32> to vector<8x32xf32>
    %765 = arith.negf %764 : vector<8x32xf32>
    %766 = math.exp %765 : vector<8x32xf32>
    %cst_214 = arith.constant 1.000000e+00 : f32
    %767 = vector.broadcast %cst_214 : f32 to vector<8x32xf32>
    %768 = arith.addf %767, %766 : vector<8x32xf32>
    %769 = arith.divf %767, %768 : vector<8x32xf32>
    %770 = vector.extract_strided_slice %756 {offsets = [0, 64], sizes = [8, 32], strides = [1, 1]} : vector<8x128xf32> to vector<8x32xf32>
    %771 = math.tanh %770 : vector<8x32xf32>
    %772 = vector.extract_strided_slice %756 {offsets = [0, 96], sizes = [8, 32], strides = [1, 1]} : vector<8x128xf32> to vector<8x32xf32>
    %773 = arith.negf %772 : vector<8x32xf32>
    %774 = math.exp %773 : vector<8x32xf32>
    %cst_215 = arith.constant 1.000000e+00 : f32
    %775 = vector.broadcast %cst_215 : f32 to vector<8x32xf32>
    %776 = arith.addf %775, %774 : vector<8x32xf32>
    %777 = arith.divf %775, %776 : vector<8x32xf32>
    %778 = arith.mulf %769, %757 : vector<8x32xf32>
    %779 = arith.mulf %763, %771 : vector<8x32xf32>
    %780 = arith.addf %778, %779 : vector<8x32xf32>
    %781 = math.tanh %780 : vector<8x32xf32>
    %782 = arith.mulf %777, %781 : vector<8x32xf32>
    %c32_216 = arith.constant 32 : index
    %c0_217 = arith.constant 0 : index
    %783 = vector.load %arg16[%c32_216, %c0_217] : memref<64x32xf32, #tpu.memory_space<vmem>>, vector<8x32xf32>
    tpu.vector_store %arg16[%c32_216, %c0_217], %782 {strides = array<i32>} : memref<64x32xf32, #tpu.memory_space<vmem>>, vector<8x32xf32>,
    %784 = tpu.concatenate %752, %782 in 1 : vector<8x32xf32>, vector<8x32xf32> -> vector<8x64xf32>
    %785 = tpu.concatenate %750, %780 in 1 : vector<8x32xf32>, vector<8x32xf32> -> vector<8x64xf32>
    %c0_218 = arith.constant 0 : index
    %c0_219 = arith.constant 0 : index
    %786 = vector.load %arg5[%c0_218, %c0_219] : memref<64x256xf32, #tpu.memory_space<vmem>>, vector<64x256xf32>
    %cst_220 = arith.constant dense<0.000000e+00> : vector<8x256xf32>
    %787 = tpu.matmul %784, %786, %cst_220 {dimension_numbers = #tpu.dot_dimension_numbers<[1], [0], [0], [1], [0, 0, 1, 1], [], []>} : vector<8x64xf32>, vector<64x256xf32>, vector<8x256xf32> -> vector<8x256xf32>
    %788 = vector.extract_strided_slice %787 {offsets = [0, 0], sizes = [8, 128], strides = [1, 1]} : vector<8x256xf32> to vector<8x128xf32>
    %c32_221 = arith.constant 32 : index
    %c0_222 = arith.constant 0 : index
    %789 = vector.load %arg14[%c32_221, %c0_222] : memref<64x256xf32, #tpu.memory_space<vmem>>, vector<8x128xf32>
    %790 = arith.addf %788, %789 : vector<8x128xf32>
    %791 = vector.extract_strided_slice %785 {offsets = [0, 0], sizes = [8, 32], strides = [1, 1]} : vector<8x64xf32> to vector<8x32xf32>
    %792 = vector.extract_strided_slice %790 {offsets = [0, 0], sizes = [8, 32], strides = [1, 1]} : vector<8x128xf32> to vector<8x32xf32>
    %793 = arith.negf %792 : vector<8x32xf32>
    %794 = math.exp %793 : vector<8x32xf32>
    %cst_223 = arith.constant 1.000000e+00 : f32
    %795 = vector.broadcast %cst_223 : f32 to vector<8x32xf32>
    %796 = arith.addf %795, %794 : vector<8x32xf32>
    %797 = arith.divf %795, %796 : vector<8x32xf32>
    %798 = vector.extract_strided_slice %790 {offsets = [0, 32], sizes = [8, 32], strides = [1, 1]} : vector<8x128xf32> to vector<8x32xf32>
    %799 = arith.negf %798 : vector<8x32xf32>
    %800 = math.exp %799 : vector<8x32xf32>
    %cst_224 = arith.constant 1.000000e+00 : f32
    %801 = vector.broadcast %cst_224 : f32 to vector<8x32xf32>
    %802 = arith.addf %801, %800 : vector<8x32xf32>
    %803 = arith.divf %801, %802 : vector<8x32xf32>
    %804 = vector.extract_strided_slice %790 {offsets = [0, 64], sizes = [8, 32], strides = [1, 1]} : vector<8x128xf32> to vector<8x32xf32>
    %805 = math.tanh %804 : vector<8x32xf32>
    %806 = vector.extract_strided_slice %790 {offsets = [0, 96], sizes = [8, 32], strides = [1, 1]} : vector<8x128xf32> to vector<8x32xf32>
    %807 = arith.negf %806 : vector<8x32xf32>
    %808 = math.exp %807 : vector<8x32xf32>
    %cst_225 = arith.constant 1.000000e+00 : f32
    %809 = vector.broadcast %cst_225 : f32 to vector<8x32xf32>
    %810 = arith.addf %809, %808 : vector<8x32xf32>
    %811 = arith.divf %809, %810 : vector<8x32xf32>
    %812 = arith.mulf %803, %791 : vector<8x32xf32>
    %813 = arith.mulf %797, %805 : vector<8x32xf32>
    %814 = arith.addf %812, %813 : vector<8x32xf32>
    %815 = math.tanh %814 : vector<8x32xf32>
    %816 = arith.mulf %811, %815 : vector<8x32xf32>
    %c32_226 = arith.constant 32 : index
    %c0_227 = arith.constant 0 : index
    %817 = vector.load %arg15[%c32_226, %c0_227] : memref<64x32xf32, #tpu.memory_space<vmem>>, vector<8x32xf32>
    tpu.vector_store %arg15[%c32_226, %c0_227], %816 {strides = array<i32>} : memref<64x32xf32, #tpu.memory_space<vmem>>, vector<8x32xf32>,
    %818 = vector.extract_strided_slice %787 {offsets = [0, 128], sizes = [8, 128], strides = [1, 1]} : vector<8x256xf32> to vector<8x128xf32>
    %c24_228 = arith.constant 24 : index
    %c128_229 = arith.constant 128 : index
    %819 = vector.load %arg14[%c24_228, %c128_229] : memref<64x256xf32, #tpu.memory_space<vmem>>, vector<8x128xf32>
    %820 = arith.addf %818, %819 : vector<8x128xf32>
    %821 = vector.extract_strided_slice %785 {offsets = [0, 32], sizes = [8, 32], strides = [1, 1]} : vector<8x64xf32> to vector<8x32xf32>
    %822 = vector.extract_strided_slice %820 {offsets = [0, 0], sizes = [8, 32], strides = [1, 1]} : vector<8x128xf32> to vector<8x32xf32>
    %823 = arith.negf %822 : vector<8x32xf32>
    %824 = math.exp %823 : vector<8x32xf32>
    %cst_230 = arith.constant 1.000000e+00 : f32
    %825 = vector.broadcast %cst_230 : f32 to vector<8x32xf32>
    %826 = arith.addf %825, %824 : vector<8x32xf32>
    %827 = arith.divf %825, %826 : vector<8x32xf32>
    %828 = vector.extract_strided_slice %820 {offsets = [0, 32], sizes = [8, 32], strides = [1, 1]} : vector<8x128xf32> to vector<8x32xf32>
    %829 = arith.negf %828 : vector<8x32xf32>
    %830 = math.exp %829 : vector<8x32xf32>
    %cst_231 = arith.constant 1.000000e+00 : f32
    %831 = vector.broadcast %cst_231 : f32 to vector<8x32xf32>
    %832 = arith.addf %831, %830 : vector<8x32xf32>
    %833 = arith.divf %831, %832 : vector<8x32xf32>
    %834 = vector.extract_strided_slice %820 {offsets = [0, 64], sizes = [8, 32], strides = [1, 1]} : vector<8x128xf32> to vector<8x32xf32>
    %835 = math.tanh %834 : vector<8x32xf32>
    %836 = vector.extract_strided_slice %820 {offsets = [0, 96], sizes = [8, 32], strides = [1, 1]} : vector<8x128xf32> to vector<8x32xf32>
    %837 = arith.negf %836 : vector<8x32xf32>
    %838 = math.exp %837 : vector<8x32xf32>
    %cst_232 = arith.constant 1.000000e+00 : f32
    %839 = vector.broadcast %cst_232 : f32 to vector<8x32xf32>
    %840 = arith.addf %839, %838 : vector<8x32xf32>
    %841 = arith.divf %839, %840 : vector<8x32xf32>
    %842 = arith.mulf %833, %821 : vector<8x32xf32>
    %843 = arith.mulf %827, %835 : vector<8x32xf32>
    %844 = arith.addf %842, %843 : vector<8x32xf32>
    %845 = math.tanh %844 : vector<8x32xf32>
    %846 = arith.mulf %841, %845 : vector<8x32xf32>
    %c24_233 = arith.constant 24 : index
    %c0_234 = arith.constant 0 : index
    %847 = vector.load %arg16[%c24_233, %c0_234] : memref<64x32xf32, #tpu.memory_space<vmem>>, vector<8x32xf32>
    tpu.vector_store %arg16[%c24_233, %c0_234], %846 {strides = array<i32>} : memref<64x32xf32, #tpu.memory_space<vmem>>, vector<8x32xf32>,
    %848 = tpu.concatenate %816, %846 in 1 : vector<8x32xf32>, vector<8x32xf32> -> vector<8x64xf32>
    %849 = tpu.concatenate %814, %844 in 1 : vector<8x32xf32>, vector<8x32xf32> -> vector<8x64xf32>
    %c0_235 = arith.constant 0 : index
    %c0_236 = arith.constant 0 : index
    %850 = vector.load %arg5[%c0_235, %c0_236] : memref<64x256xf32, #tpu.memory_space<vmem>>, vector<64x256xf32>
    %cst_237 = arith.constant dense<0.000000e+00> : vector<8x256xf32>
    %851 = tpu.matmul %848, %850, %cst_237 {dimension_numbers = #tpu.dot_dimension_numbers<[1], [0], [0], [1], [0, 0, 1, 1], [], []>} : vector<8x64xf32>, vector<64x256xf32>, vector<8x256xf32> -> vector<8x256xf32>
    %852 = vector.extract_strided_slice %851 {offsets = [0, 0], sizes = [8, 128], strides = [1, 1]} : vector<8x256xf32> to vector<8x128xf32>
    %c40_238 = arith.constant 40 : index
    %c0_239 = arith.constant 0 : index
    %853 = vector.load %arg14[%c40_238, %c0_239] : memref<64x256xf32, #tpu.memory_space<vmem>>, vector<8x128xf32>
    %854 = arith.addf %852, %853 : vector<8x128xf32>
    %855 = vector.extract_strided_slice %849 {offsets = [0, 0], sizes = [8, 32], strides = [1, 1]} : vector<8x64xf32> to vector<8x32xf32>
    %856 = vector.extract_strided_slice %854 {offsets = [0, 0], sizes = [8, 32], strides = [1, 1]} : vector<8x128xf32> to vector<8x32xf32>
    %857 = arith.negf %856 : vector<8x32xf32>
    %858 = math.exp %857 : vector<8x32xf32>
    %cst_240 = arith.constant 1.000000e+00 : f32
    %859 = vector.broadcast %cst_240 : f32 to vector<8x32xf32>
    %860 = arith.addf %859, %858 : vector<8x32xf32>
    %861 = arith.divf %859, %860 : vector<8x32xf32>
    %862 = vector.extract_strided_slice %854 {offsets = [0, 32], sizes = [8, 32], strides = [1, 1]} : vector<8x128xf32> to vector<8x32xf32>
    %863 = arith.negf %862 : vector<8x32xf32>
    %864 = math.exp %863 : vector<8x32xf32>
    %cst_241 = arith.constant 1.000000e+00 : f32
    %865 = vector.broadcast %cst_241 : f32 to vector<8x32xf32>
    %866 = arith.addf %865, %864 : vector<8x32xf32>
    %867 = arith.divf %865, %866 : vector<8x32xf32>
    %868 = vector.extract_strided_slice %854 {offsets = [0, 64], sizes = [8, 32], strides = [1, 1]} : vector<8x128xf32> to vector<8x32xf32>
    %869 = math.tanh %868 : vector<8x32xf32>
    %870 = vector.extract_strided_slice %854 {offsets = [0, 96], sizes = [8, 32], strides = [1, 1]} : vector<8x128xf32> to vector<8x32xf32>
    %871 = arith.negf %870 : vector<8x32xf32>
    %872 = math.exp %871 : vector<8x32xf32>
    %cst_242 = arith.constant 1.000000e+00 : f32
    %873 = vector.broadcast %cst_242 : f32 to vector<8x32xf32>
    %874 = arith.addf %873, %872 : vector<8x32xf32>
    %875 = arith.divf %873, %874 : vector<8x32xf32>
    %876 = arith.mulf %867, %855 : vector<8x32xf32>
    %877 = arith.mulf %861, %869 : vector<8x32xf32>
    %878 = arith.addf %876, %877 : vector<8x32xf32>
    %879 = math.tanh %878 : vector<8x32xf32>
    %880 = arith.mulf %875, %879 : vector<8x32xf32>
    %c40_243 = arith.constant 40 : index
    %c0_244 = arith.constant 0 : index
    %881 = vector.load %arg15[%c40_243, %c0_244] : memref<64x32xf32, #tpu.memory_space<vmem>>, vector<8x32xf32>
    tpu.vector_store %arg15[%c40_243, %c0_244], %880 {strides = array<i32>} : memref<64x32xf32, #tpu.memory_space<vmem>>, vector<8x32xf32>,
    %882 = vector.extract_strided_slice %851 {offsets = [0, 128], sizes = [8, 128], strides = [1, 1]} : vector<8x256xf32> to vector<8x128xf32>
    %c16_245 = arith.constant 16 : index
    %c128_246 = arith.constant 128 : index
    %883 = vector.load %arg14[%c16_245, %c128_246] : memref<64x256xf32, #tpu.memory_space<vmem>>, vector<8x128xf32>
    %884 = arith.addf %882, %883 : vector<8x128xf32>
    %885 = vector.extract_strided_slice %849 {offsets = [0, 32], sizes = [8, 32], strides = [1, 1]} : vector<8x64xf32> to vector<8x32xf32>
    %886 = vector.extract_strided_slice %884 {offsets = [0, 0], sizes = [8, 32], strides = [1, 1]} : vector<8x128xf32> to vector<8x32xf32>
    %887 = arith.negf %886 : vector<8x32xf32>
    %888 = math.exp %887 : vector<8x32xf32>
    %cst_247 = arith.constant 1.000000e+00 : f32
    %889 = vector.broadcast %cst_247 : f32 to vector<8x32xf32>
    %890 = arith.addf %889, %888 : vector<8x32xf32>
    %891 = arith.divf %889, %890 : vector<8x32xf32>
    %892 = vector.extract_strided_slice %884 {offsets = [0, 32], sizes = [8, 32], strides = [1, 1]} : vector<8x128xf32> to vector<8x32xf32>
    %893 = arith.negf %892 : vector<8x32xf32>
    %894 = math.exp %893 : vector<8x32xf32>
    %cst_248 = arith.constant 1.000000e+00 : f32
    %895 = vector.broadcast %cst_248 : f32 to vector<8x32xf32>
    %896 = arith.addf %895, %894 : vector<8x32xf32>
    %897 = arith.divf %895, %896 : vector<8x32xf32>
    %898 = vector.extract_strided_slice %884 {offsets = [0, 64], sizes = [8, 32], strides = [1, 1]} : vector<8x128xf32> to vector<8x32xf32>
    %899 = math.tanh %898 : vector<8x32xf32>
    %900 = vector.extract_strided_slice %884 {offsets = [0, 96], sizes = [8, 32], strides = [1, 1]} : vector<8x128xf32> to vector<8x32xf32>
    %901 = arith.negf %900 : vector<8x32xf32>
    %902 = math.exp %901 : vector<8x32xf32>
    %cst_249 = arith.constant 1.000000e+00 : f32
    %903 = vector.broadcast %cst_249 : f32 to vector<8x32xf32>
    %904 = arith.addf %903, %902 : vector<8x32xf32>
    %905 = arith.divf %903, %904 : vector<8x32xf32>
    %906 = arith.mulf %897, %885 : vector<8x32xf32>
    %907 = arith.mulf %891, %899 : vector<8x32xf32>
    %908 = arith.addf %906, %907 : vector<8x32xf32>
    %909 = math.tanh %908 : vector<8x32xf32>
    %910 = arith.mulf %905, %909 : vector<8x32xf32>
    %c16_250 = arith.constant 16 : index
    %c0_251 = arith.constant 0 : index
    %911 = vector.load %arg16[%c16_250, %c0_251] : memref<64x32xf32, #tpu.memory_space<vmem>>, vector<8x32xf32>
    tpu.vector_store %arg16[%c16_250, %c0_251], %910 {strides = array<i32>} : memref<64x32xf32, #tpu.memory_space<vmem>>, vector<8x32xf32>,
    %912 = tpu.concatenate %880, %910 in 1 : vector<8x32xf32>, vector<8x32xf32> -> vector<8x64xf32>
    %913 = tpu.concatenate %878, %908 in 1 : vector<8x32xf32>, vector<8x32xf32> -> vector<8x64xf32>
    %c0_252 = arith.constant 0 : index
    %c0_253 = arith.constant 0 : index
    %914 = vector.load %arg5[%c0_252, %c0_253] : memref<64x256xf32, #tpu.memory_space<vmem>>, vector<64x256xf32>
    %cst_254 = arith.constant dense<0.000000e+00> : vector<8x256xf32>
    %915 = tpu.matmul %912, %914, %cst_254 {dimension_numbers = #tpu.dot_dimension_numbers<[1], [0], [0], [1], [0, 0, 1, 1], [], []>} : vector<8x64xf32>, vector<64x256xf32>, vector<8x256xf32> -> vector<8x256xf32>
    %916 = vector.extract_strided_slice %915 {offsets = [0, 0], sizes = [8, 128], strides = [1, 1]} : vector<8x256xf32> to vector<8x128xf32>
    %c48_255 = arith.constant 48 : index
    %c0_256 = arith.constant 0 : index
    %917 = vector.load %arg14[%c48_255, %c0_256] : memref<64x256xf32, #tpu.memory_space<vmem>>, vector<8x128xf32>
    %918 = arith.addf %916, %917 : vector<8x128xf32>
    %919 = vector.extract_strided_slice %913 {offsets = [0, 0], sizes = [8, 32], strides = [1, 1]} : vector<8x64xf32> to vector<8x32xf32>
    %920 = vector.extract_strided_slice %918 {offsets = [0, 0], sizes = [8, 32], strides = [1, 1]} : vector<8x128xf32> to vector<8x32xf32>
    %921 = arith.negf %920 : vector<8x32xf32>
    %922 = math.exp %921 : vector<8x32xf32>
    %cst_257 = arith.constant 1.000000e+00 : f32
    %923 = vector.broadcast %cst_257 : f32 to vector<8x32xf32>
    %924 = arith.addf %923, %922 : vector<8x32xf32>
    %925 = arith.divf %923, %924 : vector<8x32xf32>
    %926 = vector.extract_strided_slice %918 {offsets = [0, 32], sizes = [8, 32], strides = [1, 1]} : vector<8x128xf32> to vector<8x32xf32>
    %927 = arith.negf %926 : vector<8x32xf32>
    %928 = math.exp %927 : vector<8x32xf32>
    %cst_258 = arith.constant 1.000000e+00 : f32
    %929 = vector.broadcast %cst_258 : f32 to vector<8x32xf32>
    %930 = arith.addf %929, %928 : vector<8x32xf32>
    %931 = arith.divf %929, %930 : vector<8x32xf32>
    %932 = vector.extract_strided_slice %918 {offsets = [0, 64], sizes = [8, 32], strides = [1, 1]} : vector<8x128xf32> to vector<8x32xf32>
    %933 = math.tanh %932 : vector<8x32xf32>
    %934 = vector.extract_strided_slice %918 {offsets = [0, 96], sizes = [8, 32], strides = [1, 1]} : vector<8x128xf32> to vector<8x32xf32>
    %935 = arith.negf %934 : vector<8x32xf32>
    %936 = math.exp %935 : vector<8x32xf32>
    %cst_259 = arith.constant 1.000000e+00 : f32
    %937 = vector.broadcast %cst_259 : f32 to vector<8x32xf32>
    %938 = arith.addf %937, %936 : vector<8x32xf32>
    %939 = arith.divf %937, %938 : vector<8x32xf32>
    %940 = arith.mulf %931, %919 : vector<8x32xf32>
    %941 = arith.mulf %925, %933 : vector<8x32xf32>
    %942 = arith.addf %940, %941 : vector<8x32xf32>
    %943 = math.tanh %942 : vector<8x32xf32>
    %944 = arith.mulf %939, %943 : vector<8x32xf32>
    %c48_260 = arith.constant 48 : index
    %c0_261 = arith.constant 0 : index
    %945 = vector.load %arg15[%c48_260, %c0_261] : memref<64x32xf32, #tpu.memory_space<vmem>>, vector<8x32xf32>
    tpu.vector_store %arg15[%c48_260, %c0_261], %944 {strides = array<i32>} : memref<64x32xf32, #tpu.memory_space<vmem>>, vector<8x32xf32>,
    %946 = vector.extract_strided_slice %915 {offsets = [0, 128], sizes = [8, 128], strides = [1, 1]} : vector<8x256xf32> to vector<8x128xf32>
    %c8_262 = arith.constant 8 : index
    %c128_263 = arith.constant 128 : index
    %947 = vector.load %arg14[%c8_262, %c128_263] : memref<64x256xf32, #tpu.memory_space<vmem>>, vector<8x128xf32>
    %948 = arith.addf %946, %947 : vector<8x128xf32>
    %949 = vector.extract_strided_slice %913 {offsets = [0, 32], sizes = [8, 32], strides = [1, 1]} : vector<8x64xf32> to vector<8x32xf32>
    %950 = vector.extract_strided_slice %948 {offsets = [0, 0], sizes = [8, 32], strides = [1, 1]} : vector<8x128xf32> to vector<8x32xf32>
    %951 = arith.negf %950 : vector<8x32xf32>
    %952 = math.exp %951 : vector<8x32xf32>
    %cst_264 = arith.constant 1.000000e+00 : f32
    %953 = vector.broadcast %cst_264 : f32 to vector<8x32xf32>
    %954 = arith.addf %953, %952 : vector<8x32xf32>
    %955 = arith.divf %953, %954 : vector<8x32xf32>
    %956 = vector.extract_strided_slice %948 {offsets = [0, 32], sizes = [8, 32], strides = [1, 1]} : vector<8x128xf32> to vector<8x32xf32>
    %957 = arith.negf %956 : vector<8x32xf32>
    %958 = math.exp %957 : vector<8x32xf32>
    %cst_265 = arith.constant 1.000000e+00 : f32
    %959 = vector.broadcast %cst_265 : f32 to vector<8x32xf32>
    %960 = arith.addf %959, %958 : vector<8x32xf32>
    %961 = arith.divf %959, %960 : vector<8x32xf32>
    %962 = vector.extract_strided_slice %948 {offsets = [0, 64], sizes = [8, 32], strides = [1, 1]} : vector<8x128xf32> to vector<8x32xf32>
    %963 = math.tanh %962 : vector<8x32xf32>
    %964 = vector.extract_strided_slice %948 {offsets = [0, 96], sizes = [8, 32], strides = [1, 1]} : vector<8x128xf32> to vector<8x32xf32>
    %965 = arith.negf %964 : vector<8x32xf32>
    %966 = math.exp %965 : vector<8x32xf32>
    %cst_266 = arith.constant 1.000000e+00 : f32
    %967 = vector.broadcast %cst_266 : f32 to vector<8x32xf32>
    %968 = arith.addf %967, %966 : vector<8x32xf32>
    %969 = arith.divf %967, %968 : vector<8x32xf32>
    %970 = arith.mulf %961, %949 : vector<8x32xf32>
    %971 = arith.mulf %955, %963 : vector<8x32xf32>
    %972 = arith.addf %970, %971 : vector<8x32xf32>
    %973 = math.tanh %972 : vector<8x32xf32>
    %974 = arith.mulf %969, %973 : vector<8x32xf32>
    %c8_267 = arith.constant 8 : index
    %c0_268 = arith.constant 0 : index
    %975 = vector.load %arg16[%c8_267, %c0_268] : memref<64x32xf32, #tpu.memory_space<vmem>>, vector<8x32xf32>
    tpu.vector_store %arg16[%c8_267, %c0_268], %974 {strides = array<i32>} : memref<64x32xf32, #tpu.memory_space<vmem>>, vector<8x32xf32>,
    %976 = tpu.concatenate %944, %974 in 1 : vector<8x32xf32>, vector<8x32xf32> -> vector<8x64xf32>
    %977 = tpu.concatenate %942, %972 in 1 : vector<8x32xf32>, vector<8x32xf32> -> vector<8x64xf32>
    %c0_269 = arith.constant 0 : index
    %c0_270 = arith.constant 0 : index
    %978 = vector.load %arg5[%c0_269, %c0_270] : memref<64x256xf32, #tpu.memory_space<vmem>>, vector<64x256xf32>
    %cst_271 = arith.constant dense<0.000000e+00> : vector<8x256xf32>
    %979 = tpu.matmul %976, %978, %cst_271 {dimension_numbers = #tpu.dot_dimension_numbers<[1], [0], [0], [1], [0, 0, 1, 1], [], []>} : vector<8x64xf32>, vector<64x256xf32>, vector<8x256xf32> -> vector<8x256xf32>
    %980 = vector.extract_strided_slice %979 {offsets = [0, 0], sizes = [8, 128], strides = [1, 1]} : vector<8x256xf32> to vector<8x128xf32>
    %c56_272 = arith.constant 56 : index
    %c0_273 = arith.constant 0 : index
    %981 = vector.load %arg14[%c56_272, %c0_273] : memref<64x256xf32, #tpu.memory_space<vmem>>, vector<8x128xf32>
    %982 = arith.addf %980, %981 : vector<8x128xf32>
    %983 = vector.extract_strided_slice %977 {offsets = [0, 0], sizes = [8, 32], strides = [1, 1]} : vector<8x64xf32> to vector<8x32xf32>
    %984 = vector.extract_strided_slice %982 {offsets = [0, 0], sizes = [8, 32], strides = [1, 1]} : vector<8x128xf32> to vector<8x32xf32>
    %985 = arith.negf %984 : vector<8x32xf32>
    %986 = math.exp %985 : vector<8x32xf32>
    %cst_274 = arith.constant 1.000000e+00 : f32
    %987 = vector.broadcast %cst_274 : f32 to vector<8x32xf32>
    %988 = arith.addf %987, %986 : vector<8x32xf32>
    %989 = arith.divf %987, %988 : vector<8x32xf32>
    %990 = vector.extract_strided_slice %982 {offsets = [0, 32], sizes = [8, 32], strides = [1, 1]} : vector<8x128xf32> to vector<8x32xf32>
    %991 = arith.negf %990 : vector<8x32xf32>
    %992 = math.exp %991 : vector<8x32xf32>
    %cst_275 = arith.constant 1.000000e+00 : f32
    %993 = vector.broadcast %cst_275 : f32 to vector<8x32xf32>
    %994 = arith.addf %993, %992 : vector<8x32xf32>
    %995 = arith.divf %993, %994 : vector<8x32xf32>
    %996 = vector.extract_strided_slice %982 {offsets = [0, 64], sizes = [8, 32], strides = [1, 1]} : vector<8x128xf32> to vector<8x32xf32>
    %997 = math.tanh %996 : vector<8x32xf32>
    %998 = vector.extract_strided_slice %982 {offsets = [0, 96], sizes = [8, 32], strides = [1, 1]} : vector<8x128xf32> to vector<8x32xf32>
    %999 = arith.negf %998 : vector<8x32xf32>
    %1000 = math.exp %999 : vector<8x32xf32>
    %cst_276 = arith.constant 1.000000e+00 : f32
    %1001 = vector.broadcast %cst_276 : f32 to vector<8x32xf32>
    %1002 = arith.addf %1001, %1000 : vector<8x32xf32>
    %1003 = arith.divf %1001, %1002 : vector<8x32xf32>
    %1004 = arith.mulf %995, %983 : vector<8x32xf32>
    %1005 = arith.mulf %989, %997 : vector<8x32xf32>
    %1006 = arith.addf %1004, %1005 : vector<8x32xf32>
    %1007 = math.tanh %1006 : vector<8x32xf32>
    %1008 = arith.mulf %1003, %1007 : vector<8x32xf32>
    %c56_277 = arith.constant 56 : index
    %c0_278 = arith.constant 0 : index
    %1009 = vector.load %arg15[%c56_277, %c0_278] : memref<64x32xf32, #tpu.memory_space<vmem>>, vector<8x32xf32>
    tpu.vector_store %arg15[%c56_277, %c0_278], %1008 {strides = array<i32>} : memref<64x32xf32, #tpu.memory_space<vmem>>, vector<8x32xf32>,
    %1010 = vector.extract_strided_slice %979 {offsets = [0, 128], sizes = [8, 128], strides = [1, 1]} : vector<8x256xf32> to vector<8x128xf32>
    %c0_279 = arith.constant 0 : index
    %c128_280 = arith.constant 128 : index
    %1011 = vector.load %arg14[%c0_279, %c128_280] : memref<64x256xf32, #tpu.memory_space<vmem>>, vector<8x128xf32>
    %1012 = arith.addf %1010, %1011 : vector<8x128xf32>
    %1013 = vector.extract_strided_slice %977 {offsets = [0, 32], sizes = [8, 32], strides = [1, 1]} : vector<8x64xf32> to vector<8x32xf32>
    %1014 = vector.extract_strided_slice %1012 {offsets = [0, 0], sizes = [8, 32], strides = [1, 1]} : vector<8x128xf32> to vector<8x32xf32>
    %1015 = arith.negf %1014 : vector<8x32xf32>
    %1016 = math.exp %1015 : vector<8x32xf32>
    %cst_281 = arith.constant 1.000000e+00 : f32
    %1017 = vector.broadcast %cst_281 : f32 to vector<8x32xf32>
    %1018 = arith.addf %1017, %1016 : vector<8x32xf32>
    %1019 = arith.divf %1017, %1018 : vector<8x32xf32>
    %1020 = vector.extract_strided_slice %1012 {offsets = [0, 32], sizes = [8, 32], strides = [1, 1]} : vector<8x128xf32> to vector<8x32xf32>
    %1021 = arith.negf %1020 : vector<8x32xf32>
    %1022 = math.exp %1021 : vector<8x32xf32>
    %cst_282 = arith.constant 1.000000e+00 : f32
    %1023 = vector.broadcast %cst_282 : f32 to vector<8x32xf32>
    %1024 = arith.addf %1023, %1022 : vector<8x32xf32>
    %1025 = arith.divf %1023, %1024 : vector<8x32xf32>
    %1026 = vector.extract_strided_slice %1012 {offsets = [0, 64], sizes = [8, 32], strides = [1, 1]} : vector<8x128xf32> to vector<8x32xf32>
    %1027 = math.tanh %1026 : vector<8x32xf32>
    %1028 = vector.extract_strided_slice %1012 {offsets = [0, 96], sizes = [8, 32], strides = [1, 1]} : vector<8x128xf32> to vector<8x32xf32>
    %1029 = arith.negf %1028 : vector<8x32xf32>
    %1030 = math.exp %1029 : vector<8x32xf32>
    %cst_283 = arith.constant 1.000000e+00 : f32
    %1031 = vector.broadcast %cst_283 : f32 to vector<8x32xf32>
    %1032 = arith.addf %1031, %1030 : vector<8x32xf32>
    %1033 = arith.divf %1031, %1032 : vector<8x32xf32>
    %1034 = arith.mulf %1025, %1013 : vector<8x32xf32>
    %1035 = arith.mulf %1019, %1027 : vector<8x32xf32>
    %1036 = arith.addf %1034, %1035 : vector<8x32xf32>
    %1037 = math.tanh %1036 : vector<8x32xf32>
    %1038 = arith.mulf %1033, %1037 : vector<8x32xf32>
    %c0_284 = arith.constant 0 : index
    %c0_285 = arith.constant 0 : index
    %1039 = vector.load %arg16[%c0_284, %c0_285] : memref<64x32xf32, #tpu.memory_space<vmem>>, vector<8x32xf32>
    tpu.vector_store %arg16[%c0_284, %c0_285], %1038 {strides = array<i32>} : memref<64x32xf32, #tpu.memory_space<vmem>>, vector<8x32xf32>,
    %c56_286 = arith.constant 56 : index
    %c0_287 = arith.constant 0 : index
    %1040 = vector.load %arg15[%c56_286, %c0_287] : memref<64x32xf32, #tpu.memory_space<vmem>>, vector<8x32xf32>
    %c56_288 = arith.constant 56 : index
    %c0_289 = arith.constant 0 : index
    %1041 = vector.load %arg16[%c56_288, %c0_289] : memref<64x32xf32, #tpu.memory_space<vmem>>, vector<8x32xf32>
    %1042 = tpu.concatenate %1040, %1041 in 1 : vector<8x32xf32>, vector<8x32xf32> -> vector<8x64xf32>
    %c0_290 = arith.constant 0 : index
    %c0_291 = arith.constant 0 : index
    %1043 = vector.load %arg7[%c0_290, %c0_291] : memref<64x32xf32, #tpu.memory_space<vmem>>, vector<64x32xf32>
    %cst_292 = arith.constant dense<0.000000e+00> : vector<8x32xf32>
    %1044 = tpu.matmul %1042, %1043, %cst_292 {dimension_numbers = #tpu.dot_dimension_numbers<[1], [0], [0], [1], [0, 0, 1, 1], [], []>} : vector<8x64xf32>, vector<64x32xf32>, vector<8x32xf32> -> vector<8x32xf32>
    %c0_293 = arith.constant 0 : index
    %c0_294 = arith.constant 0 : index
    %1045 = vector.load %arg8[%c0_293, %c0_294] : memref<1x32xf32, #tpu.memory_space<vmem>>, vector<1x32xf32>
    %1046 = vector.broadcast %1045 : vector<1x32xf32> to vector<8x32xf32>
    %1047 = arith.addf %1044, %1046 : vector<8x32xf32>
    %cst_295 = arith.constant 0.000000e+00 : f32
    %1048 = vector.broadcast %cst_295 : f32 to vector<8x32xf32>
    %1049 = arith.maximumf %1047, %1048 : vector<8x32xf32>
    %c0_296 = arith.constant 0 : index
    %c0_297 = arith.constant 0 : index
    %1050 = vector.load %arg9[%c0_296, %c0_297] : memref<32x32xf32, #tpu.memory_space<vmem>>, vector<32x32xf32>
    %cst_298 = arith.constant dense<0.000000e+00> : vector<8x32xf32>
    %1051 = tpu.matmul %1049, %1050, %cst_298 {dimension_numbers = #tpu.dot_dimension_numbers<[1], [0], [0], [1], [0, 0, 1, 1], [], []>} : vector<8x32xf32>, vector<32x32xf32>, vector<8x32xf32> -> vector<8x32xf32>
    %c0_299 = arith.constant 0 : index
    %c0_300 = arith.constant 0 : index
    %1052 = vector.load %arg10[%c0_299, %c0_300] : memref<1x32xf32, #tpu.memory_space<vmem>>, vector<1x32xf32>
    %1053 = vector.broadcast %1052 : vector<1x32xf32> to vector<8x32xf32>
    %1054 = arith.addf %1051, %1053 : vector<8x32xf32>
    %cst_301 = arith.constant 0.000000e+00 : f32
    %1055 = vector.broadcast %cst_301 : f32 to vector<8x32xf32>
    %1056 = arith.maximumf %1054, %1055 : vector<8x32xf32>
    %c0_302 = arith.constant 0 : index
    %c0_303 = arith.constant 0 : index
    %1057 = vector.load %arg11[%c0_302, %c0_303] : memref<32x10xf32, #tpu.memory_space<vmem>>, vector<32x10xf32>
    %cst_304 = arith.constant dense<0.000000e+00> : vector<8x10xf32>
    %1058 = tpu.matmul %1056, %1057, %cst_304 {dimension_numbers = #tpu.dot_dimension_numbers<[1], [0], [0], [1], [0, 0, 1, 1], [], []>} : vector<8x32xf32>, vector<32x10xf32>, vector<8x10xf32> -> vector<8x10xf32>
    %c0_305 = arith.constant 0 : index
    %c0_306 = arith.constant 0 : index
    %1059 = vector.load %arg12[%c0_305, %c0_306] : memref<1x10xf32, #tpu.memory_space<vmem>>, vector<1x10xf32>
    %1060 = vector.broadcast %1059 : vector<1x10xf32> to vector<8x10xf32>
    %1061 = arith.addf %1058, %1060 : vector<8x10xf32>
    %c0_307 = arith.constant 0 : index
    %c0_308 = arith.constant 0 : index
    %1062 = vector.load %arg13[%c0_307, %c0_308] : memref<8x10xf32, #tpu.memory_space<vmem>>, vector<8x10xf32>
    tpu.vector_store %arg13[%c0_307, %c0_308], %1061 {strides = array<i32>} : memref<8x10xf32, #tpu.memory_space<vmem>>, vector<8x10xf32>,
    return
  }
}

</mosaic_0001>

<llo_original>
// kernel: lstm_classifier_forward.1
$region0: #{lstm_classifier_forward.1}
  #allocation0 [shape = 'u32[]', space=smem, size = 0x4, offset = 0x4, fixed_abs, tag = 'smem constant byte address 0x4 - core index']
  #allocation1 [shape = 'u32[144,128]{1,0:T(1,128)}', space=vmem, size = 0x12000, scoped, tag = 'internal scratch']
  #allocation2 [shape = 'f32[64,256]{1,0:T(8,128)}', space=vmem, size = 0x10000, scoped, tag = 'scratch operand']
  #allocation3 [shape = 'f32[64,32]{1,0:T(8,128)}', space=vmem, size = 0x8000, scoped, tag = 'scratch operand']
  #allocation4 [shape = 'f32[64,32]{1,0:T(8,128)}', space=vmem, size = 0x8000, scoped, tag = 'scratch operand']
  %s0 = inlined_call_operand.vmem [shape: f32[64,16], index: 0, kind: input, shape index: {}]
  %s1 = inlined_call_operand.vmem [shape: f32[16,256], index: 1, kind: input, shape index: {}]
  %s2 = inlined_call_operand.vmem [shape: f32[64,256], index: 2, kind: input, shape index: {}]
  %s3 = inlined_call_operand.vmem [shape: f32[1,256], index: 3, kind: input, shape index: {}]
  %s4 = inlined_call_operand.vmem [shape: f32[64,256], index: 4, kind: input, shape index: {}]
  %s5 = inlined_call_operand.vmem [shape: f32[64,256], index: 5, kind: input, shape index: {}]
  %s6 = inlined_call_operand.vmem [shape: f32[1,256], index: 6, kind: input, shape index: {}]
  %s7 = inlined_call_operand.vmem [shape: f32[64,32], index: 7, kind: input, shape index: {}]
  %s8 = inlined_call_operand.vmem [shape: f32[1,32], index: 8, kind: input, shape index: {}]
  %s9 = inlined_call_operand.vmem [shape: f32[32,32], index: 9, kind: input, shape index: {}]
  %s10 = inlined_call_operand.vmem [shape: f32[1,32], index: 10, kind: input, shape index: {}]
  %s11 = inlined_call_operand.vmem [shape: f32[32,10], index: 11, kind: input, shape index: {}]
  %s12 = inlined_call_operand.vmem [shape: f32[1,10], index: 12, kind: input, shape index: {}]
  %s13 = inlined_call_operand.vmem [shape: f32[8,10], index: 13, kind: output, shape index: {}]
  %s14 = sld [smem:[#allocation0]]
  $region62: #{lstm_classifier_forward.1} parent=0
    _
  %s16 = ssub.s32 1, %s14
  %s17 = scalar_select 0, %s16, %s14
  // Predicated region
  $region2: #{lstm_classifier_forward.1} parent=0 // pred_check
    _
  $region3: #{lstm_classifier_forward.1} parent=0 // pred_check_branch
    %19 = sbr.rel (0) target = $region5
  $region4: #{lstm_classifier_forward.1} parent=0 // pred_region
    _
  $region5: #{lstm_classifier_forward.1} parent=0 // pred_fallthru
    _
  // Predicated region
  $region6: #{lstm_classifier_forward.1} parent=0 // pred_check
    _
  $region7: #{lstm_classifier_forward.1} parent=0 // pred_check_branch
    %21 = sbr.rel (0) target = $region9
  $region8: #{lstm_classifier_forward.1} parent=0 // pred_region
    _
  $region9: #{lstm_classifier_forward.1} parent=0 // pred_fallthru
    _
  // Predicated region
  $region10: #{lstm_classifier_forward.1} parent=0 // pred_check
    _
  $region11: #{lstm_classifier_forward.1} parent=0 // pred_check_branch
    %23 = sbr.rel (0) target = $region13
  $region12: #{lstm_classifier_forward.1} parent=0 // pred_region
    _
  $region13: #{lstm_classifier_forward.1} parent=0 // pred_fallthru
    _
  // Predicated region
  $region14: #{lstm_classifier_forward.1} parent=0 // pred_check
    _
  $region15: #{lstm_classifier_forward.1} parent=0 // pred_check_branch
    %25 = sbr.rel (0) target = $region17
  $region16: #{lstm_classifier_forward.1} parent=0 // pred_region
    _
  $region17: #{lstm_classifier_forward.1} parent=0 // pred_fallthru
    _
  // Predicated region
  $region18: #{lstm_classifier_forward.1} parent=0 // pred_check
    _
  $region19: #{lstm_classifier_forward.1} parent=0 // pred_check_branch
    %27 = sbr.rel (0) target = $region21
  $region20: #{lstm_classifier_forward.1} parent=0 // pred_region
    _
  $region21: #{lstm_classifier_forward.1} parent=0 // pred_fallthru
    _
  // Predicated region
  $region22: #{lstm_classifier_forward.1} parent=0 // pred_check
    _
  $region23: #{lstm_classifier_forward.1} parent=0 // pred_check_branch
    %29 = sbr.rel (0) target = $region25
  $region24: #{lstm_classifier_forward.1} parent=0 // pred_region
    _
  $region25: #{lstm_classifier_forward.1} parent=0 // pred_fallthru
    _
  // Predicated region
  $region26: #{lstm_classifier_forward.1} parent=0 // pred_check
    _
  $region27: #{lstm_classifier_forward.1} parent=0 // pred_check_branch
    %31 = sbr.rel (0) target = $region29
  $region28: #{lstm_classifier_forward.1} parent=0 // pred_region
    _
  $region29: #{lstm_classifier_forward.1} parent=0 // pred_fallthru
    _
  // Predicated region
  $region30: #{lstm_classifier_forward.1} parent=0 // pred_check
    _
  $region31: #{lstm_classifier_forward.1} parent=0 // pred_check_branch
    %33 = sbr.rel (0) target = $region33
  $region32: #{lstm_classifier_forward.1} parent=0 // pred_region
    _
  $region33: #{lstm_classifier_forward.1} parent=0 // pred_fallthru
    _
  // Predicated region
  $region34: #{lstm_classifier_forward.1} parent=0 // pred_check
    _
  $region35: #{lstm_classifier_forward.1} parent=0 // pred_check_branch
    %35 = sbr.rel (0) target = $region37
  $region36: #{lstm_classifier_forward.1} parent=0 // pred_region
    _
  $region37: #{lstm_classifier_forward.1} parent=0 // pred_fallthru
    _
  // Predicated region
  $region38: #{lstm_classifier_forward.1} parent=0 // pred_check
    _
  $region39: #{lstm_classifier_forward.1} parent=0 // pred_check_branch
    %37 = sbr.rel (0) target = $region41
  $region40: #{lstm_classifier_forward.1} parent=0 // pred_region
    _
  $region41: #{lstm_classifier_forward.1} parent=0 // pred_fallthru
    _
  // Predicated region
  $region42: #{lstm_classifier_forward.1} parent=0 // pred_check
    _
  $region43: #{lstm_classifier_forward.1} parent=0 // pred_check_branch
    %39 = sbr.rel (0) target = $region45
  $region44: #{lstm_classifier_forward.1} parent=0 // pred_region
    _
  $region45: #{lstm_classifier_forward.1} parent=0 // pred_fallthru
    _
  // Predicated region
  $region46: #{lstm_classifier_forward.1} parent=0 // pred_check
    _
  $region47: #{lstm_classifier_forward.1} parent=0 // pred_check_branch
    %41 = sbr.rel (0) target = $region49
  $region48: #{lstm_classifier_forward.1} parent=0 // pred_region
    _
  $region49: #{lstm_classifier_forward.1} parent=0 // pred_fallthru
    _
  // Predicated region
  $region50: #{lstm_classifier_forward.1} parent=0 // pred_check
    _
  $region51: #{lstm_classifier_forward.1} parent=0 // pred_check_branch
    %43 = sbr.rel (0) target = $region53
  $region52: #{lstm_classifier_forward.1} parent=0 // pred_region
    _
  $region53: #{lstm_classifier_forward.1} parent=0 // pred_fallthru
    _
  %v44 = vld [vmem:[%s0] sm:$0xff]
  %v45 = vld [vmem:[%s0 + $0x8] sm:$0xff]
  %v46 = vld [vmem:[%s0 + $0x10] sm:$0xff]
  %v47 = vld [vmem:[%s0 + $0x18] sm:$0xff]
  %v48 = vld [vmem:[%s0 + $0x20] sm:$0xff]
  %v49 = vld [vmem:[%s0 + $0x28] sm:$0xff]
  %v50 = vld [vmem:[%s0 + $0x30] sm:$0xff]
  %v51 = vld [vmem:[%s0 + $0x38] sm:$0xff]
  %v52 = vld [vmem:[%s1] sm:$0xff]
  %v53 = vld [vmem:[%s1 + $0x8] sm:$0xff]
  %v54 = vld [vmem:[%s1 + $0x10] sm:$0xff]
  %v55 = vld [vmem:[%s1 + $0x18] sm:$0xff]
  %v56 = vld [vmem:[%s3] sm:$0x3]
  %v58 = vlaneseq
  %v59 = vshrl.u32 %v58, 7
  %v60 = vsub.s32 0, %v59
  %v61 = vrot.slane %v56, %v60
  %v62 = vlaneseq
  %v63 = vshrl.u32 %v62, 7
  %v64 = vsub.s32 1, %v63
  %v65 = vrot.slane %v56, %v64
  %vm68 = vcmask 130048
  %v70 = vsel %vm68, %v44, 0
  %v73 = vsel %vm68, %v45, 0
  %v76 = vsel %vm68, %v46, 0
  %v79 = vsel %vm68, %v47, 0
  %v82 = vsel %vm68, %v48, 0
  %v85 = vsel %vm68, %v49, 0
  %v88 = vsel %vm68, %v50, 0
  %v91 = vsel %vm68, %v51, 0
  %93 = vmatprep.subr.mxu0 0.0
  %94 = vmatpush1.msra.mxu0 0.0
  %95 = vmatprep.subr.mxu0 0.0
  %96 = vmatpush1.msra.mxu0 0.0
  %97 = vmatprep.subr.mxu0 0.0
  %98 = vmatpush1.msra.mxu0 0.0
  %99 = vmatprep.subr.mxu0 0.0
  %100 = vmatpush1.msra.mxu0 0.0
  %101 = vmatprep.subr.mxu0 0.0
  %102 = vmatpush1.msra.mxu0 0.0
  %103 = vmatprep.subr.mxu0 0.0
  %104 = vmatpush1.msra.mxu0 0.0
  %105 = vmatprep.subr.mxu0 0.0
  %106 = vmatpush1.msra.mxu0 0.0
  %107 = vmatprep.subr.mxu0 0.0
  %108 = vmatpush1.msra.mxu0 0.0
  %109 = vmatprep.subr.mxu0 0.0
  %110 = vmatpush1.msra.mxu0 0.0
  %111 = vmatprep.subr.mxu0 0.0
  %112 = vmatpush1.msra.mxu0 0.0
  %113 = vmatprep.subr.mxu0 0.0
  %114 = vmatpush1.msra.mxu0 0.0
  %115 = vmatprep.subr.mxu0 0.0
  %116 = vmatpush1.msra.mxu0 0.0
  %117 = vmatprep.subr.mxu0 0.0
  %118 = vmatpush1.msra.mxu0 0.0
  %119 = vmatprep.subr.mxu0 0.0
  %120 = vmatpush1.msra.mxu0 0.0
  %121 = vmatprep.subr.mxu0 %v55
  %122 = vmatpush1.msra.mxu0 %v54
  %123 = vmatprep.subr.mxu0 %v53
  %124 = vmatpush1.msra.mxu0 %v52
  %125 = vmatprep.subr.mxu0 0.0
  %126 = vmatpush2.msra.mxu0 0.0
  %127 = vmatprep.subr.mxu0 0.0
  %128 = vmatpush2.msra.mxu0 0.0
  %129 = vmatprep.subr.mxu0 0.0
  %130 = vmatpush2.msra.mxu0 0.0
  %131 = vmatprep.subr.mxu0 0.0
  %132 = vmatpush2.msra.mxu0 0.0
  %133 = vmatprep.subr.mxu0 0.0
  %134 = vmatpush2.msra.mxu0 0.0
  %135 = vmatprep.subr.mxu0 0.0
  %136 = vmatpush2.msra.mxu0 0.0
  %137 = vmatprep.subr.mxu0 0.0
  %138 = vmatpush2.msra.mxu0 0.0
  %139 = vmatprep.subr.mxu0 0.0
  %140 = vmatpush2.msra.mxu0 0.0
  %141 = vmatprep.subr.mxu0 0.0
  %142 = vmatpush2.msra.mxu0 0.0
  %143 = vmatprep.subr.mxu0 0.0
  %144 = vmatpush2.msra.mxu0 0.0
  %145 = vmatprep.subr.mxu0 0.0
  %146 = vmatpush2.msra.mxu0 0.0
  %147 = vmatprep.subr.mxu0 0.0
  %148 = vmatpush2.msra.mxu0 0.0
  %149 = vmatprep.subr.mxu0 0.0
  %150 = vmatpush2.msra.mxu0 0.0
  %151 = vmatprep.subr.mxu0 0.0
  %152 = vmatpush2.msra.mxu0 0.0
  %153 = vmatprep.subr.mxu0 0.0
  %154 = vmatpush2.msra.mxu0 0.0
  %155 = vmatprep.subr.mxu0 0.0
  %156 = vmatpush2.msra.mxu0 0.0
  %157 = vmatprep.mubr.f32.mxu0 0.0
  %158 = vmatmul.mubr.f32.gmra.mxu0 %v70
  %v159 = vpop.f32.mrf.mxu0
  %v160 = vadd.f32 %v61, %v159
  %v161 = vpop.f32.mrf.mxu0
  %v162 = vadd.f32 %v65, %v161
  %163 = vmatprep.mubr.f32.mxu0 0.0
  %164 = vmatmul.mubr.f32.gmra.mxu0 %v73
  %v165 = vpop.f32.mrf.mxu0
  %v166 = vadd.f32 %v61, %v165
  %v167 = vpop.f32.mrf.mxu0
  %v168 = vadd.f32 %v65, %v167
  %169 = vmatprep.mubr.f32.mxu0 0.0
  %170 = vmatmul.mubr.f32.gmra.mxu0 %v76
  %v171 = vpop.f32.mrf.mxu0
  %v172 = vadd.f32 %v61, %v171
  %v173 = vpop.f32.mrf.mxu0
  %v174 = vadd.f32 %v65, %v173
  %175 = vmatprep.mubr.f32.mxu0 0.0
  %176 = vmatmul.mubr.f32.gmra.mxu0 %v79
  %v177 = vpop.f32.mrf.mxu0
  %v178 = vadd.f32 %v61, %v177
  %v179 = vpop.f32.mrf.mxu0
  %v180 = vadd.f32 %v65, %v179
  %181 = vmatprep.mubr.f32.mxu0 0.0
  %182 = vmatmul.mubr.f32.gmra.mxu0 %v82
  %v183 = vpop.f32.mrf.mxu0
  %v184 = vadd.f32 %v61, %v183
  %v185 = vpop.f32.mrf.mxu0
  %v186 = vadd.f32 %v65, %v185
  %187 = vmatprep.mubr.f32.mxu0 0.0
  %188 = vmatmul.mubr.f32.gmra.mxu0 %v85
  %v189 = vpop.f32.mrf.mxu0
  %v190 = vadd.f32 %v61, %v189
  %v191 = vpop.f32.mrf.mxu0
  %v192 = vadd.f32 %v65, %v191
  %193 = vmatprep.mubr.f32.mxu0 0.0
  %194 = vmatmul.mubr.f32.gmra.mxu0 %v88
  %v195 = vpop.f32.mrf.mxu0
  %v196 = vadd.f32 %v61, %v195
  %v197 = vpop.f32.mrf.mxu0
  %v198 = vadd.f32 %v65, %v197
  %199 = vmatprep.mubr.f32.mxu0 0.0
  %200 = vmatmul.mubr.f32.gmra.mxu0 %v91
  %v201 = vpop.f32.mrf.mxu0
  %v202 = vadd.f32 %v61, %v201
  %v203 = vpop.f32.mrf.mxu0
  %v204 = vadd.f32 %v65, %v203
  %205 = vdwg.mxu0
  %206 = vst [vmem:[#allocation2] sm:$0xff] %v160
  %207 = vst [vmem:[#allocation2 + $0x8] sm:$0xff] %v162
  %208 = vst [vmem:[#allocation2 + $0x10] sm:$0xff] %v166
  %209 = vst [vmem:[#allocation2 + $0x18] sm:$0xff] %v168
  %210 = vst [vmem:[#allocation2 + $0x20] sm:$0xff] %v172
  %211 = vst [vmem:[#allocation2 + $0x28] sm:$0xff] %v174
  %212 = vst [vmem:[#allocation2 + $0x30] sm:$0xff] %v178
  %213 = vst [vmem:[#allocation2 + $0x38] sm:$0xff] %v180
  %214 = vst [vmem:[#allocation2 + $0x40] sm:$0xff] %v184
  %215 = vst [vmem:[#allocation2 + $0x48] sm:$0xff] %v186
  %216 = vst [vmem:[#allocation2 + $0x50] sm:$0xff] %v190
  %217 = vst [vmem:[#allocation2 + $0x58] sm:$0xff] %v192
  %218 = vst [vmem:[#allocation2 + $0x60] sm:$0xff] %v196
  %219 = vst [vmem:[#allocation2 + $0x68] sm:$0xff] %v198
  %220 = vst [vmem:[#allocation2 + $0x70] sm:$0xff] %v202
  %221 = vst [vmem:[#allocation2 + $0x78] sm:$0xff] %v204
  %v222 = vld [vmem:[%s2] sm:$0xff]
  %v223 = vld [vmem:[%s2 + $0x8] sm:$0xff]
  %v224 = vld [vmem:[%s2 + $0x10] sm:$0xff]
  %v225 = vld [vmem:[%s2 + $0x18] sm:$0xff]
  %v226 = vld [vmem:[%s2 + $0x20] sm:$0xff]
  %v227 = vld [vmem:[%s2 + $0x28] sm:$0xff]
  %v228 = vld [vmem:[%s2 + $0x30] sm:$0xff]
  %v229 = vld [vmem:[%s2 + $0x38] sm:$0xff]
  %v230 = vld [vmem:[%s2 + $0x40] sm:$0xff]
  %v231 = vld [vmem:[%s2 + $0x48] sm:$0xff]
  %v232 = vld [vmem:[%s2 + $0x50] sm:$0xff]
  %v233 = vld [vmem:[%s2 + $0x58] sm:$0xff]
  %v234 = vld [vmem:[%s2 + $0x60] sm:$0xff]
  %v235 = vld [vmem:[%s2 + $0x68] sm:$0xff]
  %v236 = vld [vmem:[%s2 + $0x70] sm:$0xff]
  %v237 = vld [vmem:[%s2 + $0x78] sm:$0xff]
  %vm238 = vcmask 523264
  %v240 = vsel %vm238, 0.0, 0
  %242 = vmatprep.subr.mxu0 0.0
  %243 = vmatpush1.msra.mxu0 0.0
  %244 = vmatprep.subr.mxu0 0.0
  %245 = vmatpush1.msra.mxu0 0.0
  %246 = vmatprep.subr.mxu0 0.0
  %247 = vmatpush1.msra.mxu0 0.0
  %248 = vmatprep.subr.mxu0 0.0
  %249 = vmatpush1.msra.mxu0 0.0
  %250 = vmatprep.subr.mxu0 0.0
  %251 = vmatpush1.msra.mxu0 0.0
  %252 = vmatprep.subr.mxu0 0.0
  %253 = vmatpush1.msra.mxu0 0.0
  %254 = vmatprep.subr.mxu0 0.0
  %255 = vmatpush1.msra.mxu0 0.0
  %256 = vmatprep.subr.mxu0 0.0
  %257 = vmatpush1.msra.mxu0 0.0
  %258 = vmatprep.subr.mxu0 %v237
  %259 = vmatpush1.msra.mxu0 %v236
  %260 = vmatprep.subr.mxu0 %v235
  %261 = vmatpush1.msra.mxu0 %v234
  %262 = vmatprep.subr.mxu0 %v233
  %263 = vmatpush1.msra.mxu0 %v232
  %264 = vmatprep.subr.mxu0 %v231
  %265 = vmatpush1.msra.mxu0 %v230
  %266 = vmatprep.subr.mxu0 %v229
  %267 = vmatpush1.msra.mxu0 %v228
  %268 = vmatprep.subr.mxu0 %v227
  %269 = vmatpush1.msra.mxu0 %v226
  %270 = vmatprep.subr.mxu0 %v225
  %271 = vmatpush1.msra.mxu0 %v224
  %272 = vmatprep.subr.mxu0 %v223
  %273 = vmatpush1.msra.mxu0 %v222
  %274 = vmatprep.subr.mxu0 0.0
  %275 = vmatpush2.msra.mxu0 0.0
  %276 = vmatprep.subr.mxu0 0.0
  %277 = vmatpush2.msra.mxu0 0.0
  %278 = vmatprep.subr.mxu0 0.0
  %279 = vmatpush2.msra.mxu0 0.0
  %280 = vmatprep.subr.mxu0 0.0
  %281 = vmatpush2.msra.mxu0 0.0
  %282 = vmatprep.subr.mxu0 0.0
  %283 = vmatpush2.msra.mxu0 0.0
  %284 = vmatprep.subr.mxu0 0.0
  %285 = vmatpush2.msra.mxu0 0.0
  %286 = vmatprep.subr.mxu0 0.0
  %287 = vmatpush2.msra.mxu0 0.0
  %288 = vmatprep.subr.mxu0 0.0
  %289 = vmatpush2.msra.mxu0 0.0
  %290 = vmatprep.subr.mxu0 0.0
  %291 = vmatpush2.msra.mxu0 0.0
  %292 = vmatprep.subr.mxu0 0.0
  %293 = vmatpush2.msra.mxu0 0.0
  %294 = vmatprep.subr.mxu0 0.0
  %295 = vmatpush2.msra.mxu0 0.0
  %296 = vmatprep.subr.mxu0 0.0
  %297 = vmatpush2.msra.mxu0 0.0
  %298 = vmatprep.subr.mxu0 0.0
  %299 = vmatpush2.msra.mxu0 0.0
  %300 = vmatprep.subr.mxu0 0.0
  %301 = vmatpush2.msra.mxu0 0.0
  %302 = vmatprep.subr.mxu0 0.0
  %303 = vmatpush2.msra.mxu0 0.0
  %304 = vmatprep.subr.mxu0 0.0
  %305 = vmatpush2.msra.mxu0 0.0
  %306 = vmatprep.mubr.f32.mxu0 0.0
  %307 = vmatmul.mubr.f32.gmra.mxu0 %v240
  %v308 = vpop.f32.mrf.mxu0
  %v309 = vadd.f32 0.0, %v308
  %v310 = vpop.f32.mrf.mxu0
  %v311 = vadd.f32 0.0, %v310
  %312 = vdwg.mxu0
  %v313 = vld [vmem:[#allocation2] sm:$0xff]
  %v314 = vadd.f32 %v309, %v313
  %v315 = vxor.u32 %v314, 2147483648
  %v316 = vmul.f32 %v315, 1.442695
  %v317 = vpow.pop %v316
  %v318 = vadd.f32 %v317, 1.0
  %v319 = vrcp.pop %v318
  %v320 = vmul.f32 1.0, %v319
  %v321 = vtanh.pop %v314
  %v322 = vmul.f32 %v320, 0.0
  %324 = vrot.lane.b32.xlu0 %v321, 64
  %v325 = vpop.permute.xlu0 %324
  %v327 = vmul.f32 %v320, %v325
  %329 = vrot.lane.b32.xlu0 %v327, 32
  %v330 = vpop.permute.xlu0 %329
  %v332 = vadd.f32 %v322, %v330
  %v333 = vtanh.pop %v332
  %335 = vrot.lane.b32.xlu0 %v333, 64
  %v336 = vpop.permute.xlu0 %335
  %v338 = vmul.f32 %v320, %v336
  %340 = vrot.lane.b32.xlu0 %v338, 32
  %v341 = vpop.permute.xlu0 %340
  %vm343 = vcmask 261120
  %344 = vst.msk [vmem:[#allocation3] sm:$0xff] %vm343, %v341
  %v345 = vld [vmem:[#allocation2 + $0x78] sm:$0xff]
  %v346 = vadd.f32 %v311, %v345
  %v347 = vxor.u32 %v346, 2147483648
  %v348 = vmul.f32 %v347, 1.442695
  %v349 = vpow.pop %v348
  %v350 = vadd.f32 %v349, 1.0
  %v351 = vrcp.pop %v350
  %v352 = vmul.f32 1.0, %v351
  %v353 = vtanh.pop %v346
  %v354 = vmul.f32 %v352, 0.0
  %356 = vrot.lane.b32.xlu0 %v353, 64
  %v357 = vpop.permute.xlu0 %356
  %v359 = vmul.f32 %v352, %v357
  %361 = vrot.lane.b32.xlu0 %v359, 32
  %v362 = vpop.permute.xlu0 %361
  %v364 = vadd.f32 %v354, %v362
  %v365 = vtanh.pop %v364
  %367 = vrot.lane.b32.xlu0 %v365, 64
  %v368 = vpop.permute.xlu0 %367
  %v370 = vmul.f32 %v352, %v368
  %372 = vrot.lane.b32.xlu0 %v370, 32
  %v373 = vpop.permute.xlu0 %372
  %375 = vst.msk [vmem:[#allocation4 + $0x38] sm:$0xff] %vm343, %v373
  %376 = vrot.lane.b32.xlu0 %v370, 64
  %v377 = vpop.permute.xlu0 %376
  %v379 = vsel %vm343, %v341, %v377
  %381 = vrot.lane.b32.xlu0 %v332, 96
  %v382 = vpop.permute.xlu0 %381
  %v384 = vsel %vm343, %v382, %v364
  %v385 = vld [vmem:[%s2] sm:$0xff]
  %v386 = vld [vmem:[%s2 + $0x8] sm:$0xff]
  %v387 = vld [vmem:[%s2 + $0x10] sm:$0xff]
  %v388 = vld [vmem:[%s2 + $0x18] sm:$0xff]
  %v389 = vld [vmem:[%s2 + $0x20] sm:$0xff]
  %v390 = vld [vmem:[%s2 + $0x28] sm:$0xff]
  %v391 = vld [vmem:[%s2 + $0x30] sm:$0xff]
  %v392 = vld [vmem:[%s2 + $0x38] sm:$0xff]
  %v393 = vld [vmem:[%s2 + $0x40] sm:$0xff]
  %v394 = vld [vmem:[%s2 + $0x48] sm:$0xff]
  %v395 = vld [vmem:[%s2 + $0x50] sm:$0xff]
  %v396 = vld [vmem:[%s2 + $0x58] sm:$0xff]
  %v397 = vld [vmem:[%s2 + $0x60] sm:$0xff]
  %v398 = vld [vmem:[%s2 + $0x68] sm:$0xff]
  %v399 = vld [vmem:[%s2 + $0x70] sm:$0xff]
  %v400 = vld [vmem:[%s2 + $0x78] sm:$0xff]
  %v402 = vsel %vm238, %v379, 0
  %404 = vmatprep.subr.mxu0 0.0
  %405 = vmatpush1.msra.mxu0 0.0
  %406 = vmatprep.subr.mxu0 0.0
  %407 = vmatpush1.msra.mxu0 0.0
  %408 = vmatprep.subr.mxu0 0.0
  %409 = vmatpush1.msra.mxu0 0.0
  %410 = vmatprep.subr.mxu0 0.0
  %411 = vmatpush1.msra.mxu0 0.0
  %412 = vmatprep.subr.mxu0 0.0
  %413 = vmatpush1.msra.mxu0 0.0
  %414 = vmatprep.subr.mxu0 0.0
  %415 = vmatpush1.msra.mxu0 0.0
  %416 = vmatprep.subr.mxu0 0.0
  %417 = vmatpush1.msra.mxu0 0.0
  %418 = vmatprep.subr.mxu0 0.0
  %419 = vmatpush1.msra.mxu0 0.0
  %420 = vmatprep.subr.mxu0 %v400
  %421 = vmatpush1.msra.mxu0 %v399
  %422 = vmatprep.subr.mxu0 %v398
  %423 = vmatpush1.msra.mxu0 %v397
  %424 = vmatprep.subr.mxu0 %v396
  %425 = vmatpush1.msra.mxu0 %v395
  %426 = vmatprep.subr.mxu0 %v394
  %427 = vmatpush1.msra.mxu0 %v393
  %428 = vmatprep.subr.mxu0 %v392
  %429 = vmatpush1.msra.mxu0 %v391
  %430 = vmatprep.subr.mxu0 %v390
  %431 = vmatpush1.msra.mxu0 %v389
  %432 = vmatprep.subr.mxu0 %v388
  %433 = vmatpush1.msra.mxu0 %v387
  %434 = vmatprep.subr.mxu0 %v386
  %435 = vmatpush1.msra.mxu0 %v385
  %436 = vmatprep.subr.mxu0 0.0
  %437 = vmatpush2.msra.mxu0 0.0
  %438 = vmatprep.subr.mxu0 0.0
  %439 = vmatpush2.msra.mxu0 0.0
  %440 = vmatprep.subr.mxu0 0.0
  %441 = vmatpush2.msra.mxu0 0.0
  %442 = vmatprep.subr.mxu0 0.0
  %443 = vmatpush2.msra.mxu0 0.0
  %444 = vmatprep.subr.mxu0 0.0
  %445 = vmatpush2.msra.mxu0 0.0
  %446 = vmatprep.subr.mxu0 0.0
  %447 = vmatpush2.msra.mxu0 0.0
  %448 = vmatprep.subr.mxu0 0.0
  %449 = vmatpush2.msra.mxu0 0.0
  %450 = vmatprep.subr.mxu0 0.0
  %451 = vmatpush2.msra.mxu0 0.0
  %452 = vmatprep.subr.mxu0 0.0
  %453 = vmatpush2.msra.mxu0 0.0
  %454 = vmatprep.subr.mxu0 0.0
  %455 = vmatpush2.msra.mxu0 0.0
  %456 = vmatprep.subr.mxu0 0.0
  %457 = vmatpush2.msra.mxu0 0.0
  %458 = vmatprep.subr.mxu0 0.0
  %459 = vmatpush2.msra.mxu0 0.0
  %460 = vmatprep.subr.mxu0 0.0
  %461 = vmatpush2.msra.mxu0 0.0
  %462 = vmatprep.subr.mxu0 0.0
  %463 = vmatpush2.msra.mxu0 0.0
  %464 = vmatprep.subr.mxu0 0.0
  %465 = vmatpush2.msra.mxu0 0.0
  %466 = vmatprep.subr.mxu0 0.0
  %467 = vmatpush2.msra.mxu0 0.0
  %468 = vmatprep.mubr.f32.mxu0 0.0
  %469 = vmatmul.mubr.f32.gmra.mxu0 %v402
  %v470 = vpop.f32.mrf.mxu0
  %v471 = vadd.f32 0.0, %v470
  %v472 = vpop.f32.mrf.mxu0
  %v473 = vadd.f32 0.0, %v472
  %474 = vdwg.mxu0
  %v475 = vld [vmem:[#allocation2 + $0x10] sm:$0xff]
  %v476 = vadd.f32 %v471, %v475
  %v477 = vxor.u32 %v476, 2147483648
  %v478 = vmul.f32 %v477, 1.442695
  %v479 = vpow.pop %v478
  %v480 = vadd.f32 %v479, 1.0
  %v481 = vrcp.pop %v480
  %v482 = vmul.f32 1.0, %v481
  %v483 = vtanh.pop %v476
  %485 = vrot.lane.b32.xlu0 %v384, 32
  %v486 = vpop.permute.xlu0 %485
  %v488 = vmul.f32 %v482, %v486
  %490 = vrot.lane.b32.xlu0 %v483, 64
  %v491 = vpop.permute.xlu0 %490
  %v493 = vmul.f32 %v482, %v491
  %495 = vrot.lane.b32.xlu0 %v493, 32
  %v496 = vpop.permute.xlu0 %495
  %v498 = vadd.f32 %v488, %v496
  %v499 = vtanh.pop %v498
  %501 = vrot.lane.b32.xlu0 %v499, 64
  %v502 = vpop.permute.xlu0 %501
  %v504 = vmul.f32 %v482, %v502
  %506 = vrot.lane.b32.xlu0 %v504, 32
  %v507 = vpop.permute.xlu0 %506
  %509 = vst.msk [vmem:[#allocation3 + $0x8] sm:$0xff] %vm343, %v507
  %v510 = vld [vmem:[#allocation2 + $0x68] sm:$0xff]
  %v511 = vadd.f32 %v473, %v510
  %v512 = vxor.u32 %v511, 2147483648
  %v513 = vmul.f32 %v512, 1.442695
  %v514 = vpow.pop %v513
  %v515 = vadd.f32 %v514, 1.0
  %v516 = vrcp.pop %v515
  %v517 = vmul.f32 1.0, %v516
  %v518 = vtanh.pop %v511
  %v519 = vmul.f32 %v517, %v384
  %521 = vrot.lane.b32.xlu0 %v518, 64
  %v522 = vpop.permute.xlu0 %521
  %v524 = vmul.f32 %v517, %v522
  %526 = vrot.lane.b32.xlu0 %v524, 32
  %v527 = vpop.permute.xlu0 %526
  %v529 = vadd.f32 %v519, %v527
  %v530 = vtanh.pop %v529
  %532 = vrot.lane.b32.xlu0 %v530, 64
  %v533 = vpop.permute.xlu0 %532
  %v535 = vmul.f32 %v517, %v533
  %537 = vrot.lane.b32.xlu0 %v535, 32
  %v538 = vpop.permute.xlu0 %537
  %540 = vst.msk [vmem:[#allocation4 + $0x30] sm:$0xff] %vm343, %v538
  %541 = vrot.lane.b32.xlu0 %v535, 64
  %v542 = vpop.permute.xlu0 %541
  %v544 = vsel %vm343, %v507, %v542
  %546 = vrot.lane.b32.xlu0 %v498, 96
  %v547 = vpop.permute.xlu0 %546
  %v549 = vsel %vm343, %v547, %v529
  %v550 = vld [vmem:[%s2] sm:$0xff]
  %v551 = vld [vmem:[%s2 + $0x8] sm:$0xff]
  %v552 = vld [vmem:[%s2 + $0x10] sm:$0xff]
  %v553 = vld [vmem:[%s2 + $0x18] sm:$0xff]
  %v554 = vld [vmem:[%s2 + $0x20] sm:$0xff]
  %v555 = vld [vmem:[%s2 + $0x28] sm:$0xff]
  %v556 = vld [vmem:[%s2 + $0x30] sm:$0xff]
  %v557 = vld [vmem:[%s2 + $0x38] sm:$0xff]
  %v558 = vld [vmem:[%s2 + $0x40] sm:$0xff]
  %v559 = vld [vmem:[%s2 + $0x48] sm:$0xff]
  %v560 = vld [vmem:[%s2 + $0x50] sm:$0xff]
  %v561 = vld [vmem:[%s2 + $0x58] sm:$0xff]
  %v562 = vld [vmem:[%s2 + $0x60] sm:$0xff]
  %v563 = vld [vmem:[%s2 + $0x68] sm:$0xff]
  %v564 = vld [vmem:[%s2 + $0x70] sm:$0xff]
  %v565 = vld [vmem:[%s2 + $0x78] sm:$0xff]
  %v567 = vsel %vm238, %v544, 0
  %569 = vmatprep.subr.mxu0 0.0
  %570 = vmatpush1.msra.mxu0 0.0
  %571 = vmatprep.subr.mxu0 0.0
  %572 = vmatpush1.msra.mxu0 0.0
  %573 = vmatprep.subr.mxu0 0.0
  %574 = vmatpush1.msra.mxu0 0.0
  %575 = vmatprep.subr.mxu0 0.0
  %576 = vmatpush1.msra.mxu0 0.0
  %577 = vmatprep.subr.mxu0 0.0
  %578 = vmatpush1.msra.mxu0 0.0
  %579 = vmatprep.subr.mxu0 0.0
  %580 = vmatpush1.msra.mxu0 0.0
  %581 = vmatprep.subr.mxu0 0.0
  %582 = vmatpush1.msra.mxu0 0.0
  %583 = vmatprep.subr.mxu0 0.0
  %584 = vmatpush1.msra.mxu0 0.0
  %585 = vmatprep.subr.mxu0 %v565
  %586 = vmatpush1.msra.mxu0 %v564
  %587 = vmatprep.subr.mxu0 %v563
  %588 = vmatpush1.msra.mxu0 %v562
  %589 = vmatprep.subr.mxu0 %v561
  %590 = vmatpush1.msra.mxu0 %v560
  %591 = vmatprep.subr.mxu0 %v559
  %592 = vmatpush1.msra.mxu0 %v558
  %593 = vmatprep.subr.mxu0 %v557
  %594 = vmatpush1.msra.mxu0 %v556
  %595 = vmatprep.subr.mxu0 %v555
  %596 = vmatpush1.msra.mxu0 %v554
  %597 = vmatprep.subr.mxu0 %v553
  %598 = vmatpush1.msra.mxu0 %v552
  %599 = vmatprep.subr.mxu0 %v551
  %600 = vmatpush1.msra.mxu0 %v550
  %601 = vmatprep.subr.mxu0 0.0
  %602 = vmatpush2.msra.mxu0 0.0
  %603 = vmatprep.subr.mxu0 0.0
  %604 = vmatpush2.msra.mxu0 0.0
  %605 = vmatprep.subr.mxu0 0.0
  %606 = vmatpush2.msra.mxu0 0.0
  %607 = vmatprep.subr.mxu0 0.0
  %608 = vmatpush2.msra.mxu0 0.0
  %609 = vmatprep.subr.mxu0 0.0
  %610 = vmatpush2.msra.mxu0 0.0
  %611 = vmatprep.subr.mxu0 0.0
  %612 = vmatpush2.msra.mxu0 0.0
  %613 = vmatprep.subr.mxu0 0.0
  %614 = vmatpush2.msra.mxu0 0.0
  %615 = vmatprep.subr.mxu0 0.0
  %616 = vmatpush2.msra.mxu0 0.0
  %617 = vmatprep.subr.mxu0 0.0
  %618 = vmatpush2.msra.mxu0 0.0
  %619 = vmatprep.subr.mxu0 0.0
  %620 = vmatpush2.msra.mxu0 0.0
  %621 = vmatprep.subr.mxu0 0.0
  %622 = vmatpush2.msra.mxu0 0.0
  %623 = vmatprep.subr.mxu0 0.0
  %624 = vmatpush2.msra.mxu0 0.0
  %625 = vmatprep.subr.mxu0 0.0
  %626 = vmatpush2.msra.mxu0 0.0
  %627 = vmatprep.subr.mxu0 0.0
  %628 = vmatpush2.msra.mxu0 0.0
  %629 = vmatprep.subr.mxu0 0.0
  %630 = vmatpush2.msra.mxu0 0.0
  %631 = vmatprep.subr.mxu0 0.0
  %632 = vmatpush2.msra.mxu0 0.0
  %633 = vmatprep.mubr.f32.mxu0 0.0
  %634 = vmatmul.mubr.f32.gmra.mxu0 %v567
  %v635 = vpop.f32.mrf.mxu0
  %v636 = vadd.f32 0.0, %v635
  %v637 = vpop.f32.mrf.mxu0
  %v638 = vadd.f32 0.0, %v637
  %639 = vdwg.mxu0
  %v640 = vld [vmem:[#allocation2 + $0x20] sm:$0xff]
  %v641 = vadd.f32 %v636, %v640
  %v642 = vxor.u32 %v641, 2147483648
  %v643 = vmul.f32 %v642, 1.442695
  %v644 = vpow.pop %v643
  %v645 = vadd.f32 %v644, 1.0
  %v646 = vrcp.pop %v645
  %v647 = vmul.f32 1.0, %v646
  %v648 = vtanh.pop %v641
  %650 = vrot.lane.b32.xlu0 %v549, 32
  %v651 = vpop.permute.xlu0 %650
  %v653 = vmul.f32 %v647, %v651
  %655 = vrot.lane.b32.xlu0 %v648, 64
  %v656 = vpop.permute.xlu0 %655
  %v658 = vmul.f32 %v647, %v656
  %660 = vrot.lane.b32.xlu0 %v658, 32
  %v661 = vpop.permute.xlu0 %660
  %v663 = vadd.f32 %v653, %v661
  %v664 = vtanh.pop %v663
  %666 = vrot.lane.b32.xlu0 %v664, 64
  %v667 = vpop.permute.xlu0 %666
  %v669 = vmul.f32 %v647, %v667
  %671 = vrot.lane.b32.xlu0 %v669, 32
  %v672 = vpop.permute.xlu0 %671
  %674 = vst.msk [vmem:[#allocation3 + $0x10] sm:$0xff] %vm343, %v672
  %v675 = vld [vmem:[#allocation2 + $0x58] sm:$0xff]
  %v676 = vadd.f32 %v638, %v675
  %v677 = vxor.u32 %v676, 2147483648
  %v678 = vmul.f32 %v677, 1.442695
  %v679 = vpow.pop %v678
  %v680 = vadd.f32 %v679, 1.0
  %v681 = vrcp.pop %v680
  %v682 = vmul.f32 1.0, %v681
  %v683 = vtanh.pop %v676
  %v684 = vmul.f32 %v682, %v549
  %686 = vrot.lane.b32.xlu0 %v683, 64
  %v687 = vpop.permute.xlu0 %686
  %v689 = vmul.f32 %v682, %v687
  %691 = vrot.lane.b32.xlu0 %v689, 32
  %v692 = vpop.permute.xlu0 %691
  %v694 = vadd.f32 %v684, %v692
  %v695 = vtanh.pop %v694
  %697 = vrot.lane.b32.xlu0 %v695, 64
  %v698 = vpop.permute.xlu0 %697
  %v700 = vmul.f32 %v682, %v698
  %702 = vrot.lane.b32.xlu0 %v700, 32
  %v703 = vpop.permute.xlu0 %702
  %705 = vst.msk [vmem:[#allocation4 + $0x28] sm:$0xff] %vm343, %v703
  %706 = vrot.lane.b32.xlu0 %v700, 64
  %v707 = vpop.permute.xlu0 %706
  %v709 = vsel %vm343, %v672, %v707
  %711 = vrot.lane.b32.xlu0 %v663, 96
  %v712 = vpop.permute.xlu0 %711
  %v714 = vsel %vm343, %v712, %v694
  %v715 = vld [vmem:[%s2] sm:$0xff]
  %v716 = vld [vmem:[%s2 + $0x8] sm:$0xff]
  %v717 = vld [vmem:[%s2 + $0x10] sm:$0xff]
  %v718 = vld [vmem:[%s2 + $0x18] sm:$0xff]
  %v719 = vld [vmem:[%s2 + $0x20] sm:$0xff]
  %v720 = vld [vmem:[%s2 + $0x28] sm:$0xff]
  %v721 = vld [vmem:[%s2 + $0x30] sm:$0xff]
  %v722 = vld [vmem:[%s2 + $0x38] sm:$0xff]
  %v723 = vld [vmem:[%s2 + $0x40] sm:$0xff]
  %v724 = vld [vmem:[%s2 + $0x48] sm:$0xff]
  %v725 = vld [vmem:[%s2 + $0x50] sm:$0xff]
  %v726 = vld [vmem:[%s2 + $0x58] sm:$0xff]
  %v727 = vld [vmem:[%s2 + $0x60] sm:$0xff]
  %v728 = vld [vmem:[%s2 + $0x68] sm:$0xff]
  %v729 = vld [vmem:[%s2 + $0x70] sm:$0xff]
  %v730 = vld [vmem:[%s2 + $0x78] sm:$0xff]
  %v732 = vsel %vm238, %v709, 0
  %734 = vmatprep.subr.mxu0 0.0
  %735 = vmatpush1.msra.mxu0 0.0
  %736 = vmatprep.subr.mxu0 0.0
  %737 = vmatpush1.msra.mxu0 0.0
  %738 = vmatprep.subr.mxu0 0.0
  %739 = vmatpush1.msra.mxu0 0.0
  %740 = vmatprep.subr.mxu0 0.0
  %741 = vmatpush1.msra.mxu0 0.0
  %742 = vmatprep.subr.mxu0 0.0
  %743 = vmatpush1.msra.mxu0 0.0
  %744 = vmatprep.subr.mxu0 0.0
  %745 = vmatpush1.msra.mxu0 0.0
  %746 = vmatprep.subr.mxu0 0.0
  %747 = vmatpush1.msra.mxu0 0.0
  %748 = vmatprep.subr.mxu0 0.0
  %749 = vmatpush1.msra.mxu0 0.0
  %750 = vmatprep.subr.mxu0 %v730
  %751 = vmatpush1.msra.mxu0 %v729
  %752 = vmatprep.subr.mxu0 %v728
  %753 = vmatpush1.msra.mxu0 %v727
  %754 = vmatprep.subr.mxu0 %v726
  %755 = vmatpush1.msra.mxu0 %v725
  %756 = vmatprep.subr.mxu0 %v724
  %757 = vmatpush1.msra.mxu0 %v723
  %758 = vmatprep.subr.mxu0 %v722
  %759 = vmatpush1.msra.mxu0 %v721
  %760 = vmatprep.subr.mxu0 %v720
  %761 = vmatpush1.msra.mxu0 %v719
  %762 = vmatprep.subr.mxu0 %v718
  %763 = vmatpush1.msra.mxu0 %v717
  %764 = vmatprep.subr.mxu0 %v716
  %765 = vmatpush1.msra.mxu0 %v715
  %766 = vmatprep.subr.mxu0 0.0
  %767 = vmatpush2.msra.mxu0 0.0
  %768 = vmatprep.subr.mxu0 0.0
  %769 = vmatpush2.msra.mxu0 0.0
  %770 = vmatprep.subr.mxu0 0.0
  %771 = vmatpush2.msra.mxu0 0.0
  %772 = vmatprep.subr.mxu0 0.0
  %773 = vmatpush2.msra.mxu0 0.0
  %774 = vmatprep.subr.mxu0 0.0
  %775 = vmatpush2.msra.mxu0 0.0
  %776 = vmatprep.subr.mxu0 0.0
  %777 = vmatpush2.msra.mxu0 0.0
  %778 = vmatprep.subr.mxu0 0.0
  %779 = vmatpush2.msra.mxu0 0.0
  %780 = vmatprep.subr.mxu0 0.0
  %781 = vmatpush2.msra.mxu0 0.0
  %782 = vmatprep.subr.mxu0 0.0
  %783 = vmatpush2.msra.mxu0 0.0
  %784 = vmatprep.subr.mxu0 0.0
  %785 = vmatpush2.msra.mxu0 0.0
  %786 = vmatprep.subr.mxu0 0.0
  %787 = vmatpush2.msra.mxu0 0.0
  %788 = vmatprep.subr.mxu0 0.0
  %789 = vmatpush2.msra.mxu0 0.0
  %790 = vmatprep.subr.mxu0 0.0
  %791 = vmatpush2.msra.mxu0 0.0
  %792 = vmatprep.subr.mxu0 0.0
  %793 = vmatpush2.msra.mxu0 0.0
  %794 = vmatprep.subr.mxu0 0.0
  %795 = vmatpush2.msra.mxu0 0.0
  %796 = vmatprep.subr.mxu0 0.0
  %797 = vmatpush2.msra.mxu0 0.0
  %798 = vmatprep.mubr.f32.mxu0 0.0
  %799 = vmatmul.mubr.f32.gmra.mxu0 %v732
  %v800 = vpop.f32.mrf.mxu0
  %v801 = vadd.f32 0.0, %v800
  %v802 = vpop.f32.mrf.mxu0
  %v803 = vadd.f32 0.0, %v802
  %804 = vdwg.mxu0
  %v805 = vld [vmem:[#allocation2 + $0x30] sm:$0xff]
  %v806 = vadd.f32 %v801, %v805
  %v807 = vxor.u32 %v806, 2147483648
  %v808 = vmul.f32 %v807, 1.442695
  %v809 = vpow.pop %v808
  %v810 = vadd.f32 %v809, 1.0
  %v811 = vrcp.pop %v810
  %v812 = vmul.f32 1.0, %v811
  %v813 = vtanh.pop %v806
  %815 = vrot.lane.b32.xlu0 %v714, 32
  %v816 = vpop.permute.xlu0 %815
  %v818 = vmul.f32 %v812, %v816
  %820 = vrot.lane.b32.xlu0 %v813, 64
  %v821 = vpop.permute.xlu0 %820
  %v823 = vmul.f32 %v812, %v821
  %825 = vrot.lane.b32.xlu0 %v823, 32
  %v826 = vpop.permute.xlu0 %825
  %v828 = vadd.f32 %v818, %v826
  %v829 = vtanh.pop %v828
  %831 = vrot.lane.b32.xlu0 %v829, 64
  %v832 = vpop.permute.xlu0 %831
  %v834 = vmul.f32 %v812, %v832
  %836 = vrot.lane.b32.xlu0 %v834, 32
  %v837 = vpop.permute.xlu0 %836
  %839 = vst.msk [vmem:[#allocation3 + $0x18] sm:$0xff] %vm343, %v837
  %v840 = vld [vmem:[#allocation2 + $0x48] sm:$0xff]
  %v841 = vadd.f32 %v803, %v840
  %v842 = vxor.u32 %v841, 2147483648
  %v843 = vmul.f32 %v842, 1.442695
  %v844 = vpow.pop %v843
  %v845 = vadd.f32 %v844, 1.0
  %v846 = vrcp.pop %v845
  %v847 = vmul.f32 1.0, %v846
  %v848 = vtanh.pop %v841
  %v849 = vmul.f32 %v847, %v714
  %851 = vrot.lane.b32.xlu0 %v848, 64
  %v852 = vpop.permute.xlu0 %851
  %v854 = vmul.f32 %v847, %v852
  %856 = vrot.lane.b32.xlu0 %v854, 32
  %v857 = vpop.permute.xlu0 %856
  %v859 = vadd.f32 %v849, %v857
  %v860 = vtanh.pop %v859
  %862 = vrot.lane.b32.xlu0 %v860, 64
  %v863 = vpop.permute.xlu0 %862
  %v865 = vmul.f32 %v847, %v863
  %867 = vrot.lane.b32.xlu0 %v865, 32
  %v868 = vpop.permute.xlu0 %867
  %870 = vst.msk [vmem:[#allocation4 + $0x20] sm:$0xff] %vm343, %v868
  %871 = vrot.lane.b32.xlu0 %v865, 64
  %v872 = vpop.permute.xlu0 %871
  %v874 = vsel %vm343, %v837, %v872
  %876 = vrot.lane.b32.xlu0 %v828, 96
  %v877 = vpop.permute.xlu0 %876
  %v879 = vsel %vm343, %v877, %v859
  %v880 = vld [vmem:[%s2] sm:$0xff]
  %v881 = vld [vmem:[%s2 + $0x8] sm:$0xff]
  %v882 = vld [vmem:[%s2 + $0x10] sm:$0xff]
  %v883 = vld [vmem:[%s2 + $0x18] sm:$0xff]
  %v884 = vld [vmem:[%s2 + $0x20] sm:$0xff]
  %v885 = vld [vmem:[%s2 + $0x28] sm:$0xff]
  %v886 = vld [vmem:[%s2 + $0x30] sm:$0xff]
  %v887 = vld [vmem:[%s2 + $0x38] sm:$0xff]
  %v888 = vld [vmem:[%s2 + $0x40] sm:$0xff]
  %v889 = vld [vmem:[%s2 + $0x48] sm:$0xff]
  %v890 = vld [vmem:[%s2 + $0x50] sm:$0xff]
  %v891 = vld [vmem:[%s2 + $0x58] sm:$0xff]
  %v892 = vld [vmem:[%s2 + $0x60] sm:$0xff]
  %v893 = vld [vmem:[%s2 + $0x68] sm:$0xff]
  %v894 = vld [vmem:[%s2 + $0x70] sm:$0xff]
  %v895 = vld [vmem:[%s2 + $0x78] sm:$0xff]
  %v897 = vsel %vm238, %v874, 0
  %899 = vmatprep.subr.mxu0 0.0
  %900 = vmatpush1.msra.mxu0 0.0
  %901 = vmatprep.subr.mxu0 0.0
  %902 = vmatpush1.msra.mxu0 0.0
  %903 = vmatprep.subr.mxu0 0.0
  %904 = vmatpush1.msra.mxu0 0.0
  %905 = vmatprep.subr.mxu0 0.0
  %906 = vmatpush1.msra.mxu0 0.0
  %907 = vmatprep.subr.mxu0 0.0
  %908 = vmatpush1.msra.mxu0 0.0
  %909 = vmatprep.subr.mxu0 0.0
  %910 = vmatpush1.msra.mxu0 0.0
  %911 = vmatprep.subr.mxu0 0.0
  %912 = vmatpush1.msra.mxu0 0.0
  %913 = vmatprep.subr.mxu0 0.0
  %914 = vmatpush1.msra.mxu0 0.0
  %915 = vmatprep.subr.mxu0 %v895
  %916 = vmatpush1.msra.mxu0 %v894
  %917 = vmatprep.subr.mxu0 %v893
  %918 = vmatpush1.msra.mxu0 %v892
  %919 = vmatprep.subr.mxu0 %v891
  %920 = vmatpush1.msra.mxu0 %v890
  %921 = vmatprep.subr.mxu0 %v889
  %922 = vmatpush1.msra.mxu0 %v888
  %923 = vmatprep.subr.mxu0 %v887
  %924 = vmatpush1.msra.mxu0 %v886
  %925 = vmatprep.subr.mxu0 %v885
  %926 = vmatpush1.msra.mxu0 %v884
  %927 = vmatprep.subr.mxu0 %v883
  %928 = vmatpush1.msra.mxu0 %v882
  %929 = vmatprep.subr.mxu0 %v881
  %930 = vmatpush1.msra.mxu0 %v880
  %931 = vmatprep.subr.mxu0 0.0
  %932 = vmatpush2.msra.mxu0 0.0
  %933 = vmatprep.subr.mxu0 0.0
  %934 = vmatpush2.msra.mxu0 0.0
  %935 = vmatprep.subr.mxu0 0.0
  %936 = vmatpush2.msra.mxu0 0.0
  %937 = vmatprep.subr.mxu0 0.0
  %938 = vmatpush2.msra.mxu0 0.0
  %939 = vmatprep.subr.mxu0 0.0
  %940 = vmatpush2.msra.mxu0 0.0
  %941 = vmatprep.subr.mxu0 0.0
  %942 = vmatpush2.msra.mxu0 0.0
  %943 = vmatprep.subr.mxu0 0.0
  %944 = vmatpush2.msra.mxu0 0.0
  %945 = vmatprep.subr.mxu0 0.0
  %946 = vmatpush2.msra.mxu0 0.0
  %947 = vmatprep.subr.mxu0 0.0
  %948 = vmatpush2.msra.mxu0 0.0
  %949 = vmatprep.subr.mxu0 0.0
  %950 = vmatpush2.msra.mxu0 0.0
  %951 = vmatprep.subr.mxu0 0.0
  %952 = vmatpush2.msra.mxu0 0.0
  %953 = vmatprep.subr.mxu0 0.0
  %954 = vmatpush2.msra.mxu0 0.0
  %955 = vmatprep.subr.mxu0 0.0
  %956 = vmatpush2.msra.mxu0 0.0
  %957 = vmatprep.subr.mxu0 0.0
  %958 = vmatpush2.msra.mxu0 0.0
  %959 = vmatprep.subr.mxu0 0.0
  %960 = vmatpush2.msra.mxu0 0.0
  %961 = vmatprep.subr.mxu0 0.0
  %962 = vmatpush2.msra.mxu0 0.0
  %963 = vmatprep.mubr.f32.mxu0 0.0
  %964 = vmatmul.mubr.f32.gmra.mxu0 %v897
  %v965 = vpop.f32.mrf.mxu0
  %v966 = vadd.f32 0.0, %v965
  %v967 = vpop.f32.mrf.mxu0
  %v968 = vadd.f32 0.0, %v967
  %969 = vdwg.mxu0
  %v970 = vld [vmem:[#allocation2 + $0x40] sm:$0xff]
  %v971 = vadd.f32 %v966, %v970
  %v972 = vxor.u32 %v971, 2147483648
  %v973 = vmul.f32 %v972, 1.442695
  %v974 = vpow.pop %v973
  %v975 = vadd.f32 %v974, 1.0
  %v976 = vrcp.pop %v975
  %v977 = vmul.f32 1.0, %v976
  %v978 = vtanh.pop %v971
  %980 = vrot.lane.b32.xlu0 %v879, 32
  %v981 = vpop.permute.xlu0 %980
  %v983 = vmul.f32 %v977, %v981
  %985 = vrot.lane.b32.xlu0 %v978, 64
  %v986 = vpop.permute.xlu0 %985
  %v988 = vmul.f32 %v977, %v986
  %990 = vrot.lane.b32.xlu0 %v988, 32
  %v991 = vpop.permute.xlu0 %990
  %v993 = vadd.f32 %v983, %v991
  %v994 = vtanh.pop %v993
  %996 = vrot.lane.b32.xlu0 %v994, 64
  %v997 = vpop.permute.xlu0 %996
  %v999 = vmul.f32 %v977, %v997
  %1001 = vrot.lane.b32.xlu0 %v999, 32
  %v1002 = vpop.permute.xlu0 %1001
  %1004 = vst.msk [vmem:[#allocation3 + $0x20] sm:$0xff] %vm343, %v1002
  %v1005 = vld [vmem:[#allocation2 + $0x38] sm:$0xff]
  %v1006 = vadd.f32 %v968, %v1005
  %v1007 = vxor.u32 %v1006, 2147483648
  %v1008 = vmul.f32 %v1007, 1.442695
  %v1009 = vpow.pop %v1008
  %v1010 = vadd.f32 %v1009, 1.0
  %v1011 = vrcp.pop %v1010
  %v1012 = vmul.f32 1.0, %v1011
  %v1013 = vtanh.pop %v1006
  %v1014 = vmul.f32 %v1012, %v879
  %1016 = vrot.lane.b32.xlu0 %v1013, 64
  %v1017 = vpop.permute.xlu0 %1016
  %v1019 = vmul.f32 %v1012, %v1017
  %1021 = vrot.lane.b32.xlu0 %v1019, 32
  %v1022 = vpop.permute.xlu0 %1021
  %v1024 = vadd.f32 %v1014, %v1022
  %v1025 = vtanh.pop %v1024
  %1027 = vrot.lane.b32.xlu0 %v1025, 64
  %v1028 = vpop.permute.xlu0 %1027
  %v1030 = vmul.f32 %v1012, %v1028
  %1032 = vrot.lane.b32.xlu0 %v1030, 32
  %v1033 = vpop.permute.xlu0 %1032
  %1035 = vst.msk [vmem:[#allocation4 + $0x18] sm:$0xff] %vm343, %v1033
  %1036 = vrot.lane.b32.xlu0 %v1030, 64
  %v1037 = vpop.permute.xlu0 %1036
  %v1039 = vsel %vm343, %v1002, %v1037
  %1041 = vrot.lane.b32.xlu0 %v993, 96
  %v1042 = vpop.permute.xlu0 %1041
  %v1044 = vsel %vm343, %v1042, %v1024
  %v1045 = vld [vmem:[%s2] sm:$0xff]
  %v1046 = vld [vmem:[%s2 + $0x8] sm:$0xff]
  %v1047 = vld [vmem:[%s2 + $0x10] sm:$0xff]
  %v1048 = vld [vmem:[%s2 + $0x18] sm:$0xff]
  %v1049 = vld [vmem:[%s2 + $0x20] sm:$0xff]
  %v1050 = vld [vmem:[%s2 + $0x28] sm:$0xff]
  %v1051 = vld [vmem:[%s2 + $0x30] sm:$0xff]
  %v1052 = vld [vmem:[%s2 + $0x38] sm:$0xff]
  %v1053 = vld [vmem:[%s2 + $0x40] sm:$0xff]
  %v1054 = vld [vmem:[%s2 + $0x48] sm:$0xff]
  %v1055 = vld [vmem:[%s2 + $0x50] sm:$0xff]
  %v1056 = vld [vmem:[%s2 + $0x58] sm:$0xff]
  %v1057 = vld [vmem:[%s2 + $0x60] sm:$0xff]
  %v1058 = vld [vmem:[%s2 + $0x68] sm:$0xff]
  %v1059 = vld [vmem:[%s2 + $0x70] sm:$0xff]
  %v1060 = vld [vmem:[%s2 + $0x78] sm:$0xff]
  %v1062 = vsel %vm238, %v1039, 0
  %1064 = vmatprep.subr.mxu0 0.0
  %1065 = vmatpush1.msra.mxu0 0.0
  %1066 = vmatprep.subr.mxu0 0.0
  %1067 = vmatpush1.msra.mxu0 0.0
  %1068 = vmatprep.subr.mxu0 0.0
  %1069 = vmatpush1.msra.mxu0 0.0
  %1070 = vmatprep.subr.mxu0 0.0
  %1071 = vmatpush1.msra.mxu0 0.0
  %1072 = vmatprep.subr.mxu0 0.0
  %1073 = vmatpush1.msra.mxu0 0.0
  %1074 = vmatprep.subr.mxu0 0.0
  %1075 = vmatpush1.msra.mxu0 0.0
  %1076 = vmatprep.subr.mxu0 0.0
  %1077 = vmatpush1.msra.mxu0 0.0
  %1078 = vmatprep.subr.mxu0 0.0
  %1079 = vmatpush1.msra.mxu0 0.0
  %1080 = vmatprep.subr.mxu0 %v1060
  %1081 = vmatpush1.msra.mxu0 %v1059
  %1082 = vmatprep.subr.mxu0 %v1058
  %1083 = vmatpush1.msra.mxu0 %v1057
  %1084 = vmatprep.subr.mxu0 %v1056
  %1085 = vmatpush1.msra.mxu0 %v1055
  %1086 = vmatprep.subr.mxu0 %v1054
  %1087 = vmatpush1.msra.mxu0 %v1053
  %1088 = vmatprep.subr.mxu0 %v1052
  %1089 = vmatpush1.msra.mxu0 %v1051
  %1090 = vmatprep.subr.mxu0 %v1050
  %1091 = vmatpush1.msra.mxu0 %v1049
  %1092 = vmatprep.subr.mxu0 %v1048
  %1093 = vmatpush1.msra.mxu0 %v1047
  %1094 = vmatprep.subr.mxu0 %v1046
  %1095 = vmatpush1.msra.mxu0 %v1045
  %1096 = vmatprep.subr.mxu0 0.0
  %1097 = vmatpush2.msra.mxu0 0.0
  %1098 = vmatprep.subr.mxu0 0.0
  %1099 = vmatpush2.msra.mxu0 0.0
  %1100 = vmatprep.subr.mxu0 0.0
  %1101 = vmatpush2.msra.mxu0 0.0
  %1102 = vmatprep.subr.mxu0 0.0
  %1103 = vmatpush2.msra.mxu0 0.0
  %1104 = vmatprep.subr.mxu0 0.0
  %1105 = vmatpush2.msra.mxu0 0.0
  %1106 = vmatprep.subr.mxu0 0.0
  %1107 = vmatpush2.msra.mxu0 0.0
  %1108 = vmatprep.subr.mxu0 0.0
  %1109 = vmatpush2.msra.mxu0 0.0
  %1110 = vmatprep.subr.mxu0 0.0
  %1111 = vmatpush2.msra.mxu0 0.0
  %1112 = vmatprep.subr.mxu0 0.0
  %1113 = vmatpush2.msra.mxu0 0.0
  %1114 = vmatprep.subr.mxu0 0.0
  %1115 = vmatpush2.msra.mxu0 0.0
  %1116 = vmatprep.subr.mxu0 0.0
  %1117 = vmatpush2.msra.mxu0 0.0
  %1118 = vmatprep.subr.mxu0 0.0
  %1119 = vmatpush2.msra.mxu0 0.0
  %1120 = vmatprep.subr.mxu0 0.0
  %1121 = vmatpush2.msra.mxu0 0.0
  %1122 = vmatprep.subr.mxu0 0.0
  %1123 = vmatpush2.msra.mxu0 0.0
  %1124 = vmatprep.subr.mxu0 0.0
  %1125 = vmatpush2.msra.mxu0 0.0
  %1126 = vmatprep.subr.mxu0 0.0
  %1127 = vmatpush2.msra.mxu0 0.0
  %1128 = vmatprep.mubr.f32.mxu0 0.0
  %1129 = vmatmul.mubr.f32.gmra.mxu0 %v1062
  %v1130 = vpop.f32.mrf.mxu0
  %v1131 = vadd.f32 0.0, %v1130
  %v1132 = vpop.f32.mrf.mxu0
  %v1133 = vadd.f32 0.0, %v1132
  %1134 = vdwg.mxu0
  %v1135 = vld [vmem:[#allocation2 + $0x50] sm:$0xff]
  %v1136 = vadd.f32 %v1131, %v1135
  %v1137 = vxor.u32 %v1136, 2147483648
  %v1138 = vmul.f32 %v1137, 1.442695
  %v1139 = vpow.pop %v1138
  %v1140 = vadd.f32 %v1139, 1.0
  %v1141 = vrcp.pop %v1140
  %v1142 = vmul.f32 1.0, %v1141
  %v1143 = vtanh.pop %v1136
  %1145 = vrot.lane.b32.xlu0 %v1044, 32
  %v1146 = vpop.permute.xlu0 %1145
  %v1148 = vmul.f32 %v1142, %v1146
  %1150 = vrot.lane.b32.xlu0 %v1143, 64
  %v1151 = vpop.permute.xlu0 %1150
  %v1153 = vmul.f32 %v1142, %v1151
  %1155 = vrot.lane.b32.xlu0 %v1153, 32
  %v1156 = vpop.permute.xlu0 %1155
  %v1158 = vadd.f32 %v1148, %v1156
  %v1159 = vtanh.pop %v1158
  %1161 = vrot.lane.b32.xlu0 %v1159, 64
  %v1162 = vpop.permute.xlu0 %1161
  %v1164 = vmul.f32 %v1142, %v1162
  %1166 = vrot.lane.b32.xlu0 %v1164, 32
  %v1167 = vpop.permute.xlu0 %1166
  %1169 = vst.msk [vmem:[#allocation3 + $0x28] sm:$0xff] %vm343, %v1167
  %v1170 = vld [vmem:[#allocation2 + $0x28] sm:$0xff]
  %v1171 = vadd.f32 %v1133, %v1170
  %v1172 = vxor.u32 %v1171, 2147483648
  %v1173 = vmul.f32 %v1172, 1.442695
  %v1174 = vpow.pop %v1173
  %v1175 = vadd.f32 %v1174, 1.0
  %v1176 = vrcp.pop %v1175
  %v1177 = vmul.f32 1.0, %v1176
  %v1178 = vtanh.pop %v1171
  %v1179 = vmul.f32 %v1177, %v1044
  %1181 = vrot.lane.b32.xlu0 %v1178, 64
  %v1182 = vpop.permute.xlu0 %1181
  %v1184 = vmul.f32 %v1177, %v1182
  %1186 = vrot.lane.b32.xlu0 %v1184, 32
  %v1187 = vpop.permute.xlu0 %1186
  %v1189 = vadd.f32 %v1179, %v1187
  %v1190 = vtanh.pop %v1189
  %1192 = vrot.lane.b32.xlu0 %v1190, 64
  %v1193 = vpop.permute.xlu0 %1192
  %v1195 = vmul.f32 %v1177, %v1193
  %1197 = vrot.lane.b32.xlu0 %v1195, 32
  %v1198 = vpop.permute.xlu0 %1197
  %1200 = vst.msk [vmem:[#allocation4 + $0x10] sm:$0xff] %vm343, %v1198
  %1201 = vrot.lane.b32.xlu0 %v1195, 64
  %v1202 = vpop.permute.xlu0 %1201
  %v1204 = vsel %vm343, %v1167, %v1202
  %1206 = vrot.lane.b32.xlu0 %v1158, 96
  %v1207 = vpop.permute.xlu0 %1206
  %v1209 = vsel %vm343, %v1207, %v1189
  %v1210 = vld [vmem:[%s2] sm:$0xff]
  %v1211 = vld [vmem:[%s2 + $0x8] sm:$0xff]
  %v1212 = vld [vmem:[%s2 + $0x10] sm:$0xff]
  %v1213 = vld [vmem:[%s2 + $0x18] sm:$0xff]
  %v1214 = vld [vmem:[%s2 + $0x20] sm:$0xff]
  %v1215 = vld [vmem:[%s2 + $0x28] sm:$0xff]
  %v1216 = vld [vmem:[%s2 + $0x30] sm:$0xff]
  %v1217 = vld [vmem:[%s2 + $0x38] sm:$0xff]
  %v1218 = vld [vmem:[%s2 + $0x40] sm:$0xff]
  %v1219 = vld [vmem:[%s2 + $0x48] sm:$0xff]
  %v1220 = vld [vmem:[%s2 + $0x50] sm:$0xff]
  %v1221 = vld [vmem:[%s2 + $0x58] sm:$0xff]
  %v1222 = vld [vmem:[%s2 + $0x60] sm:$0xff]
  %v1223 = vld [vmem:[%s2 + $0x68] sm:$0xff]
  %v1224 = vld [vmem:[%s2 + $0x70] sm:$0xff]
  %v1225 = vld [vmem:[%s2 + $0x78] sm:$0xff]
  %v1227 = vsel %vm238, %v1204, 0
  %1229 = vmatprep.subr.mxu0 0.0
  %1230 = vmatpush1.msra.mxu0 0.0
  %1231 = vmatprep.subr.mxu0 0.0
  %1232 = vmatpush1.msra.mxu0 0.0
  %1233 = vmatprep.subr.mxu0 0.0
  %1234 = vmatpush1.msra.mxu0 0.0
  %1235 = vmatprep.subr.mxu0 0.0
  %1236 = vmatpush1.msra.mxu0 0.0
  %1237 = vmatprep.subr.mxu0 0.0
  %1238 = vmatpush1.msra.mxu0 0.0
  %1239 = vmatprep.subr.mxu0 0.0
  %1240 = vmatpush1.msra.mxu0 0.0
  %1241 = vmatprep.subr.mxu0 0.0
  %1242 = vmatpush1.msra.mxu0 0.0
  %1243 = vmatprep.subr.mxu0 0.0
  %1244 = vmatpush1.msra.mxu0 0.0
  %1245 = vmatprep.subr.mxu0 %v1225
  %1246 = vmatpush1.msra.mxu0 %v1224
  %1247 = vmatprep.subr.mxu0 %v1223
  %1248 = vmatpush1.msra.mxu0 %v1222
  %1249 = vmatprep.subr.mxu0 %v1221
  %1250 = vmatpush1.msra.mxu0 %v1220
  %1251 = vmatprep.subr.mxu0 %v1219
  %1252 = vmatpush1.msra.mxu0 %v1218
  %1253 = vmatprep.subr.mxu0 %v1217
  %1254 = vmatpush1.msra.mxu0 %v1216
  %1255 = vmatprep.subr.mxu0 %v1215
  %1256 = vmatpush1.msra.mxu0 %v1214
  %1257 = vmatprep.subr.mxu0 %v1213
  %1258 = vmatpush1.msra.mxu0 %v1212
  %1259 = vmatprep.subr.mxu0 %v1211
  %1260 = vmatpush1.msra.mxu0 %v1210
  %1261 = vmatprep.subr.mxu0 0.0
  %1262 = vmatpush2.msra.mxu0 0.0
  %1263 = vmatprep.subr.mxu0 0.0
  %1264 = vmatpush2.msra.mxu0 0.0
  %1265 = vmatprep.subr.mxu0 0.0
  %1266 = vmatpush2.msra.mxu0 0.0
  %1267 = vmatprep.subr.mxu0 0.0
  %1268 = vmatpush2.msra.mxu0 0.0
  %1269 = vmatprep.subr.mxu0 0.0
  %1270 = vmatpush2.msra.mxu0 0.0
  %1271 = vmatprep.subr.mxu0 0.0
  %1272 = vmatpush2.msra.mxu0 0.0
  %1273 = vmatprep.subr.mxu0 0.0
  %1274 = vmatpush2.msra.mxu0 0.0
  %1275 = vmatprep.subr.mxu0 0.0
  %1276 = vmatpush2.msra.mxu0 0.0
  %1277 = vmatprep.subr.mxu0 0.0
  %1278 = vmatpush2.msra.mxu0 0.0
  %1279 = vmatprep.subr.mxu0 0.0
  %1280 = vmatpush2.msra.mxu0 0.0
  %1281 = vmatprep.subr.mxu0 0.0
  %1282 = vmatpush2.msra.mxu0 0.0
  %1283 = vmatprep.subr.mxu0 0.0
  %1284 = vmatpush2.msra.mxu0 0.0
  %1285 = vmatprep.subr.mxu0 0.0
  %1286 = vmatpush2.msra.mxu0 0.0
  %1287 = vmatprep.subr.mxu0 0.0
  %1288 = vmatpush2.msra.mxu0 0.0
  %1289 = vmatprep.subr.mxu0 0.0
  %1290 = vmatpush2.msra.mxu0 0.0
  %1291 = vmatprep.subr.mxu0 0.0
  %1292 = vmatpush2.msra.mxu0 0.0
  %1293 = vmatprep.mubr.f32.mxu0 0.0
  %1294 = vmatmul.mubr.f32.gmra.mxu0 %v1227
  %v1295 = vpop.f32.mrf.mxu0
  %v1296 = vadd.f32 0.0, %v1295
  %v1297 = vpop.f32.mrf.mxu0
  %v1298 = vadd.f32 0.0, %v1297
  %1299 = vdwg.mxu0
  %v1300 = vld [vmem:[#allocation2 + $0x60] sm:$0xff]
  %v1301 = vadd.f32 %v1296, %v1300
  %v1302 = vxor.u32 %v1301, 2147483648
  %v1303 = vmul.f32 %v1302, 1.442695
  %v1304 = vpow.pop %v1303
  %v1305 = vadd.f32 %v1304, 1.0
  %v1306 = vrcp.pop %v1305
  %v1307 = vmul.f32 1.0, %v1306
  %v1308 = vtanh.pop %v1301
  %1310 = vrot.lane.b32.xlu0 %v1209, 32
  %v1311 = vpop.permute.xlu0 %1310
  %v1313 = vmul.f32 %v1307, %v1311
  %1315 = vrot.lane.b32.xlu0 %v1308, 64
  %v1316 = vpop.permute.xlu0 %1315
  %v1318 = vmul.f32 %v1307, %v1316
  %1320 = vrot.lane.b32.xlu0 %v1318, 32
  %v1321 = vpop.permute.xlu0 %1320
  %v1323 = vadd.f32 %v1313, %v1321
  %v1324 = vtanh.pop %v1323
  %1326 = vrot.lane.b32.xlu0 %v1324, 64
  %v1327 = vpop.permute.xlu0 %1326
  %v1329 = vmul.f32 %v1307, %v1327
  %1331 = vrot.lane.b32.xlu0 %v1329, 32
  %v1332 = vpop.permute.xlu0 %1331
  %1334 = vst.msk [vmem:[#allocation3 + $0x30] sm:$0xff] %vm343, %v1332
  %v1335 = vld [vmem:[#allocation2 + $0x18] sm:$0xff]
  %v1336 = vadd.f32 %v1298, %v1335
  %v1337 = vxor.u32 %v1336, 2147483648
  %v1338 = vmul.f32 %v1337, 1.442695
  %v1339 = vpow.pop %v1338
  %v1340 = vadd.f32 %v1339, 1.0
  %v1341 = vrcp.pop %v1340
  %v1342 = vmul.f32 1.0, %v1341
  %v1343 = vtanh.pop %v1336
  %v1344 = vmul.f32 %v1342, %v1209
  %1346 = vrot.lane.b32.xlu0 %v1343, 64
  %v1347 = vpop.permute.xlu0 %1346
  %v1349 = vmul.f32 %v1342, %v1347
  %1351 = vrot.lane.b32.xlu0 %v1349, 32
  %v1352 = vpop.permute.xlu0 %1351
  %v1354 = vadd.f32 %v1344, %v1352
  %v1355 = vtanh.pop %v1354
  %1357 = vrot.lane.b32.xlu0 %v1355, 64
  %v1358 = vpop.permute.xlu0 %1357
  %v1360 = vmul.f32 %v1342, %v1358
  %1362 = vrot.lane.b32.xlu0 %v1360, 32
  %v1363 = vpop.permute.xlu0 %1362
  %1365 = vst.msk [vmem:[#allocation4 + $0x8] sm:$0xff] %vm343, %v1363
  %1366 = vrot.lane.b32.xlu0 %v1360, 64
  %v1367 = vpop.permute.xlu0 %1366
  %v1369 = vsel %vm343, %v1332, %v1367
  %1371 = vrot.lane.b32.xlu0 %v1323, 96
  %v1372 = vpop.permute.xlu0 %1371
  %v1374 = vsel %vm343, %v1372, %v1354
  %v1375 = vld [vmem:[%s2] sm:$0xff]
  %v1376 = vld [vmem:[%s2 + $0x8] sm:$0xff]
  %v1377 = vld [vmem:[%s2 + $0x10] sm:$0xff]
  %v1378 = vld [vmem:[%s2 + $0x18] sm:$0xff]
  %v1379 = vld [vmem:[%s2 + $0x20] sm:$0xff]
  %v1380 = vld [vmem:[%s2 + $0x28] sm:$0xff]
  %v1381 = vld [vmem:[%s2 + $0x30] sm:$0xff]
  %v1382 = vld [vmem:[%s2 + $0x38] sm:$0xff]
  %v1383 = vld [vmem:[%s2 + $0x40] sm:$0xff]
  %v1384 = vld [vmem:[%s2 + $0x48] sm:$0xff]
  %v1385 = vld [vmem:[%s2 + $0x50] sm:$0xff]
  %v1386 = vld [vmem:[%s2 + $0x58] sm:$0xff]
  %v1387 = vld [vmem:[%s2 + $0x60] sm:$0xff]
  %v1388 = vld [vmem:[%s2 + $0x68] sm:$0xff]
  %v1389 = vld [vmem:[%s2 + $0x70] sm:$0xff]
  %v1390 = vld [vmem:[%s2 + $0x78] sm:$0xff]
  %v1392 = vsel %vm238, %v1369, 0
  %1394 = vmatprep.subr.mxu0 0.0
  %1395 = vmatpush1.msra.mxu0 0.0
  %1396 = vmatprep.subr.mxu0 0.0
  %1397 = vmatpush1.msra.mxu0 0.0
  %1398 = vmatprep.subr.mxu0 0.0
  %1399 = vmatpush1.msra.mxu0 0.0
  %1400 = vmatprep.subr.mxu0 0.0
  %1401 = vmatpush1.msra.mxu0 0.0
  %1402 = vmatprep.subr.mxu0 0.0
  %1403 = vmatpush1.msra.mxu0 0.0
  %1404 = vmatprep.subr.mxu0 0.0
  %1405 = vmatpush1.msra.mxu0 0.0
  %1406 = vmatprep.subr.mxu0 0.0
  %1407 = vmatpush1.msra.mxu0 0.0
  %1408 = vmatprep.subr.mxu0 0.0
  %1409 = vmatpush1.msra.mxu0 0.0
  %1410 = vmatprep.subr.mxu0 %v1390
  %1411 = vmatpush1.msra.mxu0 %v1389
  %1412 = vmatprep.subr.mxu0 %v1388
  %1413 = vmatpush1.msra.mxu0 %v1387
  %1414 = vmatprep.subr.mxu0 %v1386
  %1415 = vmatpush1.msra.mxu0 %v1385
  %1416 = vmatprep.subr.mxu0 %v1384
  %1417 = vmatpush1.msra.mxu0 %v1383
  %1418 = vmatprep.subr.mxu0 %v1382
  %1419 = vmatpush1.msra.mxu0 %v1381
  %1420 = vmatprep.subr.mxu0 %v1380
  %1421 = vmatpush1.msra.mxu0 %v1379
  %1422 = vmatprep.subr.mxu0 %v1378
  %1423 = vmatpush1.msra.mxu0 %v1377
  %1424 = vmatprep.subr.mxu0 %v1376
  %1425 = vmatpush1.msra.mxu0 %v1375
  %1426 = vmatprep.subr.mxu0 0.0
  %1427 = vmatpush2.msra.mxu0 0.0
  %1428 = vmatprep.subr.mxu0 0.0
  %1429 = vmatpush2.msra.mxu0 0.0
  %1430 = vmatprep.subr.mxu0 0.0
  %1431 = vmatpush2.msra.mxu0 0.0
  %1432 = vmatprep.subr.mxu0 0.0
  %1433 = vmatpush2.msra.mxu0 0.0
  %1434 = vmatprep.subr.mxu0 0.0
  %1435 = vmatpush2.msra.mxu0 0.0
  %1436 = vmatprep.subr.mxu0 0.0
  %1437 = vmatpush2.msra.mxu0 0.0
  %1438 = vmatprep.subr.mxu0 0.0
  %1439 = vmatpush2.msra.mxu0 0.0
  %1440 = vmatprep.subr.mxu0 0.0
  %1441 = vmatpush2.msra.mxu0 0.0
  %1442 = vmatprep.subr.mxu0 0.0
  %1443 = vmatpush2.msra.mxu0 0.0
  %1444 = vmatprep.subr.mxu0 0.0
  %1445 = vmatpush2.msra.mxu0 0.0
  %1446 = vmatprep.subr.mxu0 0.0
  %1447 = vmatpush2.msra.mxu0 0.0
  %1448 = vmatprep.subr.mxu0 0.0
  %1449 = vmatpush2.msra.mxu0 0.0
  %1450 = vmatprep.subr.mxu0 0.0
  %1451 = vmatpush2.msra.mxu0 0.0
  %1452 = vmatprep.subr.mxu0 0.0
  %1453 = vmatpush2.msra.mxu0 0.0
  %1454 = vmatprep.subr.mxu0 0.0
  %1455 = vmatpush2.msra.mxu0 0.0
  %1456 = vmatprep.subr.mxu0 0.0
  %1457 = vmatpush2.msra.mxu0 0.0
  %1458 = vmatprep.mubr.f32.mxu0 0.0
  %1459 = vmatmul.mubr.f32.gmra.mxu0 %v1392
  %v1460 = vpop.f32.mrf.mxu0
  %v1461 = vadd.f32 0.0, %v1460
  %v1462 = vpop.f32.mrf.mxu0
  %v1463 = vadd.f32 0.0, %v1462
  %1464 = vdwg.mxu0
  %v1465 = vld [vmem:[#allocation2 + $0x70] sm:$0xff]
  %v1466 = vadd.f32 %v1461, %v1465
  %v1467 = vxor.u32 %v1466, 2147483648
  %v1468 = vmul.f32 %v1467, 1.442695
  %v1469 = vpow.pop %v1468
  %v1470 = vadd.f32 %v1469, 1.0
  %v1471 = vrcp.pop %v1470
  %v1472 = vmul.f32 1.0, %v1471
  %v1473 = vtanh.pop %v1466
  %1475 = vrot.lane.b32.xlu0 %v1374, 32
  %v1476 = vpop.permute.xlu0 %1475
  %v1478 = vmul.f32 %v1472, %v1476
  %1480 = vrot.lane.b32.xlu0 %v1473, 64
  %v1481 = vpop.permute.xlu0 %1480
  %v1483 = vmul.f32 %v1472, %v1481
  %1485 = vrot.lane.b32.xlu0 %v1483, 32
  %v1486 = vpop.permute.xlu0 %1485
  %v1488 = vadd.f32 %v1478, %v1486
  %v1489 = vtanh.pop %v1488
  %1491 = vrot.lane.b32.xlu0 %v1489, 64
  %v1492 = vpop.permute.xlu0 %1491
  %v1494 = vmul.f32 %v1472, %v1492
  %1496 = vrot.lane.b32.xlu0 %v1494, 32
  %v1497 = vpop.permute.xlu0 %1496
  %1499 = vst.msk [vmem:[#allocation3 + $0x38] sm:$0xff] %vm343, %v1497
  %v1500 = vld [vmem:[#allocation2 + $0x8] sm:$0xff]
  %v1501 = vadd.f32 %v1463, %v1500
  %v1502 = vxor.u32 %v1501, 2147483648
  %v1503 = vmul.f32 %v1502, 1.442695
  %v1504 = vpow.pop %v1503
  %v1505 = vadd.f32 %v1504, 1.0
  %v1506 = vrcp.pop %v1505
  %v1507 = vmul.f32 1.0, %v1506
  %v1508 = vtanh.pop %v1501
  %v1509 = vmul.f32 %v1507, %v1374
  %1511 = vrot.lane.b32.xlu0 %v1508, 64
  %v1512 = vpop.permute.xlu0 %1511
  %v1514 = vmul.f32 %v1507, %v1512
  %1516 = vrot.lane.b32.xlu0 %v1514, 32
  %v1517 = vpop.permute.xlu0 %1516
  %v1519 = vadd.f32 %v1509, %v1517
  %v1520 = vtanh.pop %v1519
  %1522 = vrot.lane.b32.xlu0 %v1520, 64
  %v1523 = vpop.permute.xlu0 %1522
  %v1525 = vmul.f32 %v1507, %v1523
  %1527 = vrot.lane.b32.xlu0 %v1525, 32
  %v1528 = vpop.permute.xlu0 %1527
  %1530 = vst.msk [vmem:[#allocation4] sm:$0xff] %vm343, %v1528
  %v1531 = vld [vmem:[#allocation3] sm:$0xff]
  %v1532 = vld [vmem:[#allocation3 + $0x8] sm:$0xff]
  %v1533 = vld [vmem:[#allocation3 + $0x10] sm:$0xff]
  %v1534 = vld [vmem:[#allocation3 + $0x18] sm:$0xff]
  %v1535 = vld [vmem:[#allocation3 + $0x20] sm:$0xff]
  %v1536 = vld [vmem:[#allocation3 + $0x28] sm:$0xff]
  %v1537 = vld [vmem:[#allocation3 + $0x30] sm:$0xff]
  %v1538 = vld [vmem:[#allocation3 + $0x38] sm:$0xff]
  %v1539 = vld [vmem:[#allocation4] sm:$0xff]
  %v1540 = vld [vmem:[#allocation4 + $0x8] sm:$0xff]
  %v1541 = vld [vmem:[#allocation4 + $0x10] sm:$0xff]
  %v1542 = vld [vmem:[#allocation4 + $0x18] sm:$0xff]
  %v1543 = vld [vmem:[#allocation4 + $0x20] sm:$0xff]
  %v1544 = vld [vmem:[#allocation4 + $0x28] sm:$0xff]
  %v1545 = vld [vmem:[#allocation4 + $0x30] sm:$0xff]
  %v1546 = vld [vmem:[#allocation4 + $0x38] sm:$0xff]
  %1555 = vrot.lane.b32.xlu0 %v1539, 32
  %v1556 = vpop.permute.xlu0 %1555
  %1557 = vrot.lane.b32.xlu0 %v1540, 32
  %v1558 = vpop.permute.xlu0 %1557
  %1559 = vrot.lane.b32.xlu0 %v1541, 32
  %v1560 = vpop.permute.xlu0 %1559
  %1561 = vrot.lane.b32.xlu0 %v1542, 32
  %v1562 = vpop.permute.xlu0 %1561
  %1563 = vrot.lane.b32.xlu0 %v1543, 32
  %v1564 = vpop.permute.xlu0 %1563
  %1565 = vrot.lane.b32.xlu0 %v1544, 32
  %v1566 = vpop.permute.xlu0 %1565
  %1567 = vrot.lane.b32.xlu0 %v1545, 32
  %v1568 = vpop.permute.xlu0 %1567
  %1569 = vrot.lane.b32.xlu0 %v1546, 32
  %v1570 = vpop.permute.xlu0 %1569
  %v1579 = vsel %vm343, %v1531, %v1556
  %v1580 = vsel %vm343, %v1532, %v1558
  %v1581 = vsel %vm343, %v1533, %v1560
  %v1582 = vsel %vm343, %v1534, %v1562
  %v1583 = vsel %vm343, %v1535, %v1564
  %v1584 = vsel %vm343, %v1536, %v1566
  %v1585 = vsel %vm343, %v1537, %v1568
  %v1586 = vsel %vm343, %v1538, %v1570
  %v1587 = vld [vmem:[%s4] sm:$0xff]
  %v1588 = vld [vmem:[%s4 + $0x8] sm:$0xff]
  %v1589 = vld [vmem:[%s4 + $0x10] sm:$0xff]
  %v1590 = vld [vmem:[%s4 + $0x18] sm:$0xff]
  %v1591 = vld [vmem:[%s4 + $0x20] sm:$0xff]
  %v1592 = vld [vmem:[%s4 + $0x28] sm:$0xff]
  %v1593 = vld [vmem:[%s4 + $0x30] sm:$0xff]
  %v1594 = vld [vmem:[%s4 + $0x38] sm:$0xff]
  %v1595 = vld [vmem:[%s4 + $0x40] sm:$0xff]
  %v1596 = vld [vmem:[%s4 + $0x48] sm:$0xff]
  %v1597 = vld [vmem:[%s4 + $0x50] sm:$0xff]
  %v1598 = vld [vmem:[%s4 + $0x58] sm:$0xff]
  %v1599 = vld [vmem:[%s4 + $0x60] sm:$0xff]
  %v1600 = vld [vmem:[%s4 + $0x68] sm:$0xff]
  %v1601 = vld [vmem:[%s4 + $0x70] sm:$0xff]
  %v1602 = vld [vmem:[%s4 + $0x78] sm:$0xff]
  %v1603 = vld [vmem:[%s6] sm:$0x3]
  %v1605 = vlaneseq
  %v1606 = vshrl.u32 %v1605, 7
  %v1607 = vsub.s32 0, %v1606
  %v1608 = vrot.slane %v1603, %v1607
  %v1609 = vlaneseq
  %v1610 = vshrl.u32 %v1609, 7
  %v1611 = vsub.s32 1, %v1610
  %v1612 = vrot.slane %v1603, %v1611
  %v1616 = vsel %vm238, %v1579, 0
  %v1619 = vsel %vm238, %v1580, 0
  %v1622 = vsel %vm238, %v1581, 0
  %v1625 = vsel %vm238, %v1582, 0
  %v1628 = vsel %vm238, %v1583, 0
  %v1631 = vsel %vm238, %v1584, 0
  %v1634 = vsel %vm238, %v1585, 0
  %v1637 = vsel %vm238, %v1586, 0
  %1639 = vmatprep.subr.mxu0 0.0
  %1640 = vmatpush1.msra.mxu0 0.0
  %1641 = vmatprep.subr.mxu0 0.0
  %1642 = vmatpush1.msra.mxu0 0.0
  %1643 = vmatprep.subr.mxu0 0.0
  %1644 = vmatpush1.msra.mxu0 0.0
  %1645 = vmatprep.subr.mxu0 0.0
  %1646 = vmatpush1.msra.mxu0 0.0
  %1647 = vmatprep.subr.mxu0 0.0
  %1648 = vmatpush1.msra.mxu0 0.0
  %1649 = vmatprep.subr.mxu0 0.0
  %1650 = vmatpush1.msra.mxu0 0.0
  %1651 = vmatprep.subr.mxu0 0.0
  %1652 = vmatpush1.msra.mxu0 0.0
  %1653 = vmatprep.subr.mxu0 0.0
  %1654 = vmatpush1.msra.mxu0 0.0
  %1655 = vmatprep.subr.mxu0 %v1602
  %1656 = vmatpush1.msra.mxu0 %v1601
  %1657 = vmatprep.subr.mxu0 %v1600
  %1658 = vmatpush1.msra.mxu0 %v1599
  %1659 = vmatprep.subr.mxu0 %v1598
  %1660 = vmatpush1.msra.mxu0 %v1597
  %1661 = vmatprep.subr.mxu0 %v1596
  %1662 = vmatpush1.msra.mxu0 %v1595
  %1663 = vmatprep.subr.mxu0 %v1594
  %1664 = vmatpush1.msra.mxu0 %v1593
  %1665 = vmatprep.subr.mxu0 %v1592
  %1666 = vmatpush1.msra.mxu0 %v1591
  %1667 = vmatprep.subr.mxu0 %v1590
  %1668 = vmatpush1.msra.mxu0 %v1589
  %1669 = vmatprep.subr.mxu0 %v1588
  %1670 = vmatpush1.msra.mxu0 %v1587
  %1671 = vmatprep.subr.mxu0 0.0
  %1672 = vmatpush2.msra.mxu0 0.0
  %1673 = vmatprep.subr.mxu0 0.0
  %1674 = vmatpush2.msra.mxu0 0.0
  %1675 = vmatprep.subr.mxu0 0.0
  %1676 = vmatpush2.msra.mxu0 0.0
  %1677 = vmatprep.subr.mxu0 0.0
  %1678 = vmatpush2.msra.mxu0 0.0
  %1679 = vmatprep.subr.mxu0 0.0
  %1680 = vmatpush2.msra.mxu0 0.0
  %1681 = vmatprep.subr.mxu0 0.0
  %1682 = vmatpush2.msra.mxu0 0.0
  %1683 = vmatprep.subr.mxu0 0.0
  %1684 = vmatpush2.msra.mxu0 0.0
  %1685 = vmatprep.subr.mxu0 0.0
  %1686 = vmatpush2.msra.mxu0 0.0
  %1687 = vmatprep.subr.mxu0 0.0
  %1688 = vmatpush2.msra.mxu0 0.0
  %1689 = vmatprep.subr.mxu0 0.0
  %1690 = vmatpush2.msra.mxu0 0.0
  %1691 = vmatprep.subr.mxu0 0.0
  %1692 = vmatpush2.msra.mxu0 0.0
  %1693 = vmatprep.subr.mxu0 0.0
  %1694 = vmatpush2.msra.mxu0 0.0
  %1695 = vmatprep.subr.mxu0 0.0
  %1696 = vmatpush2.msra.mxu0 0.0
  %1697 = vmatprep.subr.mxu0 0.0
  %1698 = vmatpush2.msra.mxu0 0.0
  %1699 = vmatprep.subr.mxu0 0.0
  %1700 = vmatpush2.msra.mxu0 0.0
  %1701 = vmatprep.subr.mxu0 0.0
  %1702 = vmatpush2.msra.mxu0 0.0
  %1703 = vmatprep.mubr.f32.mxu0 0.0
  %1704 = vmatmul.mubr.f32.gmra.mxu0 %v1616
  %v1705 = vpop.f32.mrf.mxu0
  %v1706 = vadd.f32 %v1608, %v1705
  %v1707 = vpop.f32.mrf.mxu0
  %v1708 = vadd.f32 %v1612, %v1707
  %1709 = vmatprep.mubr.f32.mxu0 0.0
  %1710 = vmatmul.mubr.f32.gmra.mxu0 %v1619
  %v1711 = vpop.f32.mrf.mxu0
  %v1712 = vadd.f32 %v1608, %v1711
  %v1713 = vpop.f32.mrf.mxu0
  %v1714 = vadd.f32 %v1612, %v1713
  %1715 = vmatprep.mubr.f32.mxu0 0.0
  %1716 = vmatmul.mubr.f32.gmra.mxu0 %v1622
  %v1717 = vpop.f32.mrf.mxu0
  %v1718 = vadd.f32 %v1608, %v1717
  %v1719 = vpop.f32.mrf.mxu0
  %v1720 = vadd.f32 %v1612, %v1719
  %1721 = vmatprep.mubr.f32.mxu0 0.0
  %1722 = vmatmul.mubr.f32.gmra.mxu0 %v1625
  %v1723 = vpop.f32.mrf.mxu0
  %v1724 = vadd.f32 %v1608, %v1723
  %v1725 = vpop.f32.mrf.mxu0
  %v1726 = vadd.f32 %v1612, %v1725
  %1727 = vmatprep.mubr.f32.mxu0 0.0
  %1728 = vmatmul.mubr.f32.gmra.mxu0 %v1628
  %v1729 = vpop.f32.mrf.mxu0
  %v1730 = vadd.f32 %v1608, %v1729
  %v1731 = vpop.f32.mrf.mxu0
  %v1732 = vadd.f32 %v1612, %v1731
  %1733 = vmatprep.mubr.f32.mxu0 0.0
  %1734 = vmatmul.mubr.f32.gmra.mxu0 %v1631
  %v1735 = vpop.f32.mrf.mxu0
  %v1736 = vadd.f32 %v1608, %v1735
  %v1737 = vpop.f32.mrf.mxu0
  %v1738 = vadd.f32 %v1612, %v1737
  %1739 = vmatprep.mubr.f32.mxu0 0.0
  %1740 = vmatmul.mubr.f32.gmra.mxu0 %v1634
  %v1741 = vpop.f32.mrf.mxu0
  %v1742 = vadd.f32 %v1608, %v1741
  %v1743 = vpop.f32.mrf.mxu0
  %v1744 = vadd.f32 %v1612, %v1743
  %1745 = vmatprep.mubr.f32.mxu0 0.0
  %1746 = vmatmul.mubr.f32.gmra.mxu0 %v1637
  %v1747 = vpop.f32.mrf.mxu0
  %v1748 = vadd.f32 %v1608, %v1747
  %v1749 = vpop.f32.mrf.mxu0
  %v1750 = vadd.f32 %v1612, %v1749
  %1751 = vdwg.mxu0
  %1752 = vst [vmem:[#allocation2] sm:$0xff] %v1706
  %1753 = vst [vmem:[#allocation2 + $0x8] sm:$0xff] %v1708
  %1754 = vst [vmem:[#allocation2 + $0x10] sm:$0xff] %v1712
  %1755 = vst [vmem:[#allocation2 + $0x18] sm:$0xff] %v1714
  %1756 = vst [vmem:[#allocation2 + $0x20] sm:$0xff] %v1718
  %1757 = vst [vmem:[#allocation2 + $0x28] sm:$0xff] %v1720
  %1758 = vst [vmem:[#allocation2 + $0x30] sm:$0xff] %v1724
  %1759 = vst [vmem:[#allocation2 + $0x38] sm:$0xff] %v1726
  %1760 = vst [vmem:[#allocation2 + $0x40] sm:$0xff] %v1730
  %1761 = vst [vmem:[#allocation2 + $0x48] sm:$0xff] %v1732
  %1762 = vst [vmem:[#allocation2 + $0x50] sm:$0xff] %v1736
  %1763 = vst [vmem:[#allocation2 + $0x58] sm:$0xff] %v1738
  %1764 = vst [vmem:[#allocation2 + $0x60] sm:$0xff] %v1742
  %1765 = vst [vmem:[#allocation2 + $0x68] sm:$0xff] %v1744
  %1766 = vst [vmem:[#allocation2 + $0x70] sm:$0xff] %v1748
  %1767 = vst [vmem:[#allocation2 + $0x78] sm:$0xff] %v1750
  %v1768 = vld [vmem:[%s5] sm:$0xff]
  %v1769 = vld [vmem:[%s5 + $0x8] sm:$0xff]
  %v1770 = vld [vmem:[%s5 + $0x10] sm:$0xff]
  %v1771 = vld [vmem:[%s5 + $0x18] sm:$0xff]
  %v1772 = vld [vmem:[%s5 + $0x20] sm:$0xff]
  %v1773 = vld [vmem:[%s5 + $0x28] sm:$0xff]
  %v1774 = vld [vmem:[%s5 + $0x30] sm:$0xff]
  %v1775 = vld [vmem:[%s5 + $0x38] sm:$0xff]
  %v1776 = vld [vmem:[%s5 + $0x40] sm:$0xff]
  %v1777 = vld [vmem:[%s5 + $0x48] sm:$0xff]
  %v1778 = vld [vmem:[%s5 + $0x50] sm:$0xff]
  %v1779 = vld [vmem:[%s5 + $0x58] sm:$0xff]
  %v1780 = vld [vmem:[%s5 + $0x60] sm:$0xff]
  %v1781 = vld [vmem:[%s5 + $0x68] sm:$0xff]
  %v1782 = vld [vmem:[%s5 + $0x70] sm:$0xff]
  %v1783 = vld [vmem:[%s5 + $0x78] sm:$0xff]
  %1784 = vmatprep.subr.mxu0 0.0
  %1785 = vmatpush1.msra.mxu0 0.0
  %1786 = vmatprep.subr.mxu0 0.0
  %1787 = vmatpush1.msra.mxu0 0.0
  %1788 = vmatprep.subr.mxu0 0.0
  %1789 = vmatpush1.msra.mxu0 0.0
  %1790 = vmatprep.subr.mxu0 0.0
  %1791 = vmatpush1.msra.mxu0 0.0
  %1792 = vmatprep.subr.mxu0 0.0
  %1793 = vmatpush1.msra.mxu0 0.0
  %1794 = vmatprep.subr.mxu0 0.0
  %1795 = vmatpush1.msra.mxu0 0.0
  %1796 = vmatprep.subr.mxu0 0.0
  %1797 = vmatpush1.msra.mxu0 0.0
  %1798 = vmatprep.subr.mxu0 0.0
  %1799 = vmatpush1.msra.mxu0 0.0
  %1800 = vmatprep.subr.mxu0 %v1783
  %1801 = vmatpush1.msra.mxu0 %v1782
  %1802 = vmatprep.subr.mxu0 %v1781
  %1803 = vmatpush1.msra.mxu0 %v1780
  %1804 = vmatprep.subr.mxu0 %v1779
  %1805 = vmatpush1.msra.mxu0 %v1778
  %1806 = vmatprep.subr.mxu0 %v1777
  %1807 = vmatpush1.msra.mxu0 %v1776
  %1808 = vmatprep.subr.mxu0 %v1775
  %1809 = vmatpush1.msra.mxu0 %v1774
  %1810 = vmatprep.subr.mxu0 %v1773
  %1811 = vmatpush1.msra.mxu0 %v1772
  %1812 = vmatprep.subr.mxu0 %v1771
  %1813 = vmatpush1.msra.mxu0 %v1770
  %1814 = vmatprep.subr.mxu0 %v1769
  %1815 = vmatpush1.msra.mxu0 %v1768
  %1816 = vmatprep.subr.mxu0 0.0
  %1817 = vmatpush2.msra.mxu0 0.0
  %1818 = vmatprep.subr.mxu0 0.0
  %1819 = vmatpush2.msra.mxu0 0.0
  %1820 = vmatprep.subr.mxu0 0.0
  %1821 = vmatpush2.msra.mxu0 0.0
  %1822 = vmatprep.subr.mxu0 0.0
  %1823 = vmatpush2.msra.mxu0 0.0
  %1824 = vmatprep.subr.mxu0 0.0
  %1825 = vmatpush2.msra.mxu0 0.0
  %1826 = vmatprep.subr.mxu0 0.0
  %1827 = vmatpush2.msra.mxu0 0.0
  %1828 = vmatprep.subr.mxu0 0.0
  %1829 = vmatpush2.msra.mxu0 0.0
  %1830 = vmatprep.subr.mxu0 0.0
  %1831 = vmatpush2.msra.mxu0 0.0
  %1832 = vmatprep.subr.mxu0 0.0
  %1833 = vmatpush2.msra.mxu0 0.0
  %1834 = vmatprep.subr.mxu0 0.0
  %1835 = vmatpush2.msra.mxu0 0.0
  %1836 = vmatprep.subr.mxu0 0.0
  %1837 = vmatpush2.msra.mxu0 0.0
  %1838 = vmatprep.subr.mxu0 0.0
  %1839 = vmatpush2.msra.mxu0 0.0
  %1840 = vmatprep.subr.mxu0 0.0
  %1841 = vmatpush2.msra.mxu0 0.0
  %1842 = vmatprep.subr.mxu0 0.0
  %1843 = vmatpush2.msra.mxu0 0.0
  %1844 = vmatprep.subr.mxu0 0.0
  %1845 = vmatpush2.msra.mxu0 0.0
  %1846 = vmatprep.subr.mxu0 0.0
  %1847 = vmatpush2.msra.mxu0 0.0
  %1848 = vmatprep.mubr.f32.mxu0 0.0
  %1849 = vmatmul.mubr.f32.gmra.mxu0 %v240
  %v1850 = vpop.f32.mrf.mxu0
  %v1851 = vadd.f32 0.0, %v1850
  %v1852 = vpop.f32.mrf.mxu0
  %v1853 = vadd.f32 0.0, %v1852
  %1854 = vdwg.mxu0
  %v1855 = vld [vmem:[#allocation2] sm:$0xff]
  %v1856 = vadd.f32 %v1851, %v1855
  %v1857 = vxor.u32 %v1856, 2147483648
  %v1858 = vmul.f32 %v1857, 1.442695
  %v1859 = vpow.pop %v1858
  %v1860 = vadd.f32 %v1859, 1.0
  %v1861 = vrcp.pop %v1860
  %v1862 = vmul.f32 1.0, %v1861
  %v1863 = vtanh.pop %v1856
  %v1864 = vmul.f32 %v1862, 0.0
  %1866 = vrot.lane.b32.xlu0 %v1863, 64
  %v1867 = vpop.permute.xlu0 %1866
  %v1869 = vmul.f32 %v1862, %v1867
  %1871 = vrot.lane.b32.xlu0 %v1869, 32
  %v1872 = vpop.permute.xlu0 %1871
  %v1874 = vadd.f32 %v1864, %v1872
  %v1875 = vtanh.pop %v1874
  %1877 = vrot.lane.b32.xlu0 %v1875, 64
  %v1878 = vpop.permute.xlu0 %1877
  %v1880 = vmul.f32 %v1862, %v1878
  %1882 = vrot.lane.b32.xlu0 %v1880, 32
  %v1883 = vpop.permute.xlu0 %1882
  %1885 = vst.msk [vmem:[#allocation3] sm:$0xff] %vm343, %v1883
  %v1886 = vld [vmem:[#allocation2 + $0x78] sm:$0xff]
  %v1887 = vadd.f32 %v1853, %v1886
  %v1888 = vxor.u32 %v1887, 2147483648
  %v1889 = vmul.f32 %v1888, 1.442695
  %v1890 = vpow.pop %v1889
  %v1891 = vadd.f32 %v1890, 1.0
  %v1892 = vrcp.pop %v1891
  %v1893 = vmul.f32 1.0, %v1892
  %v1894 = vtanh.pop %v1887
  %v1895 = vmul.f32 %v1893, 0.0
  %1897 = vrot.lane.b32.xlu0 %v1894, 64
  %v1898 = vpop.permute.xlu0 %1897
  %v1900 = vmul.f32 %v1893, %v1898
  %1902 = vrot.lane.b32.xlu0 %v1900, 32
  %v1903 = vpop.permute.xlu0 %1902
  %v1905 = vadd.f32 %v1895, %v1903
  %v1906 = vtanh.pop %v1905
  %1908 = vrot.lane.b32.xlu0 %v1906, 64
  %v1909 = vpop.permute.xlu0 %1908
  %v1911 = vmul.f32 %v1893, %v1909
  %1913 = vrot.lane.b32.xlu0 %v1911, 32
  %v1914 = vpop.permute.xlu0 %1913
  %1916 = vst.msk [vmem:[#allocation4 + $0x38] sm:$0xff] %vm343, %v1914
  %1917 = vrot.lane.b32.xlu0 %v1911, 64
  %v1918 = vpop.permute.xlu0 %1917
  %v1920 = vsel %vm343, %v1883, %v1918
  %1922 = vrot.lane.b32.xlu0 %v1874, 96
  %v1923 = vpop.permute.xlu0 %1922
  %v1925 = vsel %vm343, %v1923, %v1905
  %v1926 = vld [vmem:[%s5] sm:$0xff]
  %v1927 = vld [vmem:[%s5 + $0x8] sm:$0xff]
  %v1928 = vld [vmem:[%s5 + $0x10] sm:$0xff]
  %v1929 = vld [vmem:[%s5 + $0x18] sm:$0xff]
  %v1930 = vld [vmem:[%s5 + $0x20] sm:$0xff]
  %v1931 = vld [vmem:[%s5 + $0x28] sm:$0xff]
  %v1932 = vld [vmem:[%s5 + $0x30] sm:$0xff]
  %v1933 = vld [vmem:[%s5 + $0x38] sm:$0xff]
  %v1934 = vld [vmem:[%s5 + $0x40] sm:$0xff]
  %v1935 = vld [vmem:[%s5 + $0x48] sm:$0xff]
  %v1936 = vld [vmem:[%s5 + $0x50] sm:$0xff]
  %v1937 = vld [vmem:[%s5 + $0x58] sm:$0xff]
  %v1938 = vld [vmem:[%s5 + $0x60] sm:$0xff]
  %v1939 = vld [vmem:[%s5 + $0x68] sm:$0xff]
  %v1940 = vld [vmem:[%s5 + $0x70] sm:$0xff]
  %v1941 = vld [vmem:[%s5 + $0x78] sm:$0xff]
  %v1943 = vsel %vm238, %v1920, 0
  %1945 = vmatprep.subr.mxu0 0.0
  %1946 = vmatpush1.msra.mxu0 0.0
  %1947 = vmatprep.subr.mxu0 0.0
  %1948 = vmatpush1.msra.mxu0 0.0
  %1949 = vmatprep.subr.mxu0 0.0
  %1950 = vmatpush1.msra.mxu0 0.0
  %1951 = vmatprep.subr.mxu0 0.0
  %1952 = vmatpush1.msra.mxu0 0.0
  %1953 = vmatprep.subr.mxu0 0.0
  %1954 = vmatpush1.msra.mxu0 0.0
  %1955 = vmatprep.subr.mxu0 0.0
  %1956 = vmatpush1.msra.mxu0 0.0
  %1957 = vmatprep.subr.mxu0 0.0
  %1958 = vmatpush1.msra.mxu0 0.0
  %1959 = vmatprep.subr.mxu0 0.0
  %1960 = vmatpush1.msra.mxu0 0.0
  %1961 = vmatprep.subr.mxu0 %v1941
  %1962 = vmatpush1.msra.mxu0 %v1940
  %1963 = vmatprep.subr.mxu0 %v1939
  %1964 = vmatpush1.msra.mxu0 %v1938
  %1965 = vmatprep.subr.mxu0 %v1937
  %1966 = vmatpush1.msra.mxu0 %v1936
  %1967 = vmatprep.subr.mxu0 %v1935
  %1968 = vmatpush1.msra.mxu0 %v1934
  %1969 = vmatprep.subr.mxu0 %v1933
  %1970 = vmatpush1.msra.mxu0 %v1932
  %1971 = vmatprep.subr.mxu0 %v1931
  %1972 = vmatpush1.msra.mxu0 %v1930
  %1973 = vmatprep.subr.mxu0 %v1929
  %1974 = vmatpush1.msra.mxu0 %v1928
  %1975 = vmatprep.subr.mxu0 %v1927
  %1976 = vmatpush1.msra.mxu0 %v1926
  %1977 = vmatprep.subr.mxu0 0.0
  %1978 = vmatpush2.msra.mxu0 0.0
  %1979 = vmatprep.subr.mxu0 0.0
  %1980 = vmatpush2.msra.mxu0 0.0
  %1981 = vmatprep.subr.mxu0 0.0
  %1982 = vmatpush2.msra.mxu0 0.0
  %1983 = vmatprep.subr.mxu0 0.0
  %1984 = vmatpush2.msra.mxu0 0.0
  %1985 = vmatprep.subr.mxu0 0.0
  %1986 = vmatpush2.msra.mxu0 0.0
  %1987 = vmatprep.subr.mxu0 0.0
  %1988 = vmatpush2.msra.mxu0 0.0
  %1989 = vmatprep.subr.mxu0 0.0
  %1990 = vmatpush2.msra.mxu0 0.0
  %1991 = vmatprep.subr.mxu0 0.0
  %1992 = vmatpush2.msra.mxu0 0.0
  %1993 = vmatprep.subr.mxu0 0.0
  %1994 = vmatpush2.msra.mxu0 0.0
  %1995 = vmatprep.subr.mxu0 0.0
  %1996 = vmatpush2.msra.mxu0 0.0
  %1997 = vmatprep.subr.mxu0 0.0
  %1998 = vmatpush2.msra.mxu0 0.0
  %1999 = vmatprep.subr.mxu0 0.0
  %2000 = vmatpush2.msra.mxu0 0.0
  %2001 = vmatprep.subr.mxu0 0.0
  %2002 = vmatpush2.msra.mxu0 0.0
  %2003 = vmatprep.subr.mxu0 0.0
  %2004 = vmatpush2.msra.mxu0 0.0
  %2005 = vmatprep.subr.mxu0 0.0
  %2006 = vmatpush2.msra.mxu0 0.0
  %2007 = vmatprep.subr.mxu0 0.0
  %2008 = vmatpush2.msra.mxu0 0.0
  %2009 = vmatprep.mubr.f32.mxu0 0.0
  %2010 = vmatmul.mubr.f32.gmra.mxu0 %v1943
  %v2011 = vpop.f32.mrf.mxu0
  %v2012 = vadd.f32 0.0, %v2011
  %v2013 = vpop.f32.mrf.mxu0
  %v2014 = vadd.f32 0.0, %v2013
  %2015 = vdwg.mxu0
  %v2016 = vld [vmem:[#allocation2 + $0x10] sm:$0xff]
  %v2017 = vadd.f32 %v2012, %v2016
  %v2018 = vxor.u32 %v2017, 2147483648
  %v2019 = vmul.f32 %v2018, 1.442695
  %v2020 = vpow.pop %v2019
  %v2021 = vadd.f32 %v2020, 1.0
  %v2022 = vrcp.pop %v2021
  %v2023 = vmul.f32 1.0, %v2022
  %v2024 = vtanh.pop %v2017
  %2026 = vrot.lane.b32.xlu0 %v1925, 32
  %v2027 = vpop.permute.xlu0 %2026
  %v2029 = vmul.f32 %v2023, %v2027
  %2031 = vrot.lane.b32.xlu0 %v2024, 64
  %v2032 = vpop.permute.xlu0 %2031
  %v2034 = vmul.f32 %v2023, %v2032
  %2036 = vrot.lane.b32.xlu0 %v2034, 32
  %v2037 = vpop.permute.xlu0 %2036
  %v2039 = vadd.f32 %v2029, %v2037
  %v2040 = vtanh.pop %v2039
  %2042 = vrot.lane.b32.xlu0 %v2040, 64
  %v2043 = vpop.permute.xlu0 %2042
  %v2045 = vmul.f32 %v2023, %v2043
  %2047 = vrot.lane.b32.xlu0 %v2045, 32
  %v2048 = vpop.permute.xlu0 %2047
  %2050 = vst.msk [vmem:[#allocation3 + $0x8] sm:$0xff] %vm343, %v2048
  %v2051 = vld [vmem:[#allocation2 + $0x68] sm:$0xff]
  %v2052 = vadd.f32 %v2014, %v2051
  %v2053 = vxor.u32 %v2052, 2147483648
  %v2054 = vmul.f32 %v2053, 1.442695
  %v2055 = vpow.pop %v2054
  %v2056 = vadd.f32 %v2055, 1.0
  %v2057 = vrcp.pop %v2056
  %v2058 = vmul.f32 1.0, %v2057
  %v2059 = vtanh.pop %v2052
  %v2060 = vmul.f32 %v2058, %v1925
  %2062 = vrot.lane.b32.xlu0 %v2059, 64
  %v2063 = vpop.permute.xlu0 %2062
  %v2065 = vmul.f32 %v2058, %v2063
  %2067 = vrot.lane.b32.xlu0 %v2065, 32
  %v2068 = vpop.permute.xlu0 %2067
  %v2070 = vadd.f32 %v2060, %v2068
  %v2071 = vtanh.pop %v2070
  %2073 = vrot.lane.b32.xlu0 %v2071, 64
  %v2074 = vpop.permute.xlu0 %2073
  %v2076 = vmul.f32 %v2058, %v2074
  %2078 = vrot.lane.b32.xlu0 %v2076, 32
  %v2079 = vpop.permute.xlu0 %2078
  %2081 = vst.msk [vmem:[#allocation4 + $0x30] sm:$0xff] %vm343, %v2079
  %2082 = vrot.lane.b32.xlu0 %v2076, 64
  %v2083 = vpop.permute.xlu0 %2082
  %v2085 = vsel %vm343, %v2048, %v2083
  %2087 = vrot.lane.b32.xlu0 %v2039, 96
  %v2088 = vpop.permute.xlu0 %2087
  %v2090 = vsel %vm343, %v2088, %v2070
  %v2091 = vld [vmem:[%s5] sm:$0xff]
  %v2092 = vld [vmem:[%s5 + $0x8] sm:$0xff]
  %v2093 = vld [vmem:[%s5 + $0x10] sm:$0xff]
  %v2094 = vld [vmem:[%s5 + $0x18] sm:$0xff]
  %v2095 = vld [vmem:[%s5 + $0x20] sm:$0xff]
  %v2096 = vld [vmem:[%s5 + $0x28] sm:$0xff]
  %v2097 = vld [vmem:[%s5 + $0x30] sm:$0xff]
  %v2098 = vld [vmem:[%s5 + $0x38] sm:$0xff]
  %v2099 = vld [vmem:[%s5 + $0x40] sm:$0xff]
  %v2100 = vld [vmem:[%s5 + $0x48] sm:$0xff]
  %v2101 = vld [vmem:[%s5 + $0x50] sm:$0xff]
  %v2102 = vld [vmem:[%s5 + $0x58] sm:$0xff]
  %v2103 = vld [vmem:[%s5 + $0x60] sm:$0xff]
  %v2104 = vld [vmem:[%s5 + $0x68] sm:$0xff]
  %v2105 = vld [vmem:[%s5 + $0x70] sm:$0xff]
  %v2106 = vld [vmem:[%s5 + $0x78] sm:$0xff]
  %v2108 = vsel %vm238, %v2085, 0
  %2110 = vmatprep.subr.mxu0 0.0
  %2111 = vmatpush1.msra.mxu0 0.0
  %2112 = vmatprep.subr.mxu0 0.0
  %2113 = vmatpush1.msra.mxu0 0.0
  %2114 = vmatprep.subr.mxu0 0.0
  %2115 = vmatpush1.msra.mxu0 0.0
  %2116 = vmatprep.subr.mxu0 0.0
  %2117 = vmatpush1.msra.mxu0 0.0
  %2118 = vmatprep.subr.mxu0 0.0
  %2119 = vmatpush1.msra.mxu0 0.0
  %2120 = vmatprep.subr.mxu0 0.0
  %2121 = vmatpush1.msra.mxu0 0.0
  %2122 = vmatprep.subr.mxu0 0.0
  %2123 = vmatpush1.msra.mxu0 0.0
  %2124 = vmatprep.subr.mxu0 0.0
  %2125 = vmatpush1.msra.mxu0 0.0
  %2126 = vmatprep.subr.mxu0 %v2106
  %2127 = vmatpush1.msra.mxu0 %v2105
  %2128 = vmatprep.subr.mxu0 %v2104
  %2129 = vmatpush1.msra.mxu0 %v2103
  %2130 = vmatprep.subr.mxu0 %v2102
  %2131 = vmatpush1.msra.mxu0 %v2101
  %2132 = vmatprep.subr.mxu0 %v2100
  %2133 = vmatpush1.msra.mxu0 %v2099
  %2134 = vmatprep.subr.mxu0 %v2098
  %2135 = vmatpush1.msra.mxu0 %v2097
  %2136 = vmatprep.subr.mxu0 %v2096
  %2137 = vmatpush1.msra.mxu0 %v2095
  %2138 = vmatprep.subr.mxu0 %v2094
  %2139 = vmatpush1.msra.mxu0 %v2093
  %2140 = vmatprep.subr.mxu0 %v2092
  %2141 = vmatpush1.msra.mxu0 %v2091
  %2142 = vmatprep.subr.mxu0 0.0
  %2143 = vmatpush2.msra.mxu0 0.0
  %2144 = vmatprep.subr.mxu0 0.0
  %2145 = vmatpush2.msra.mxu0 0.0
  %2146 = vmatprep.subr.mxu0 0.0
  %2147 = vmatpush2.msra.mxu0 0.0
  %2148 = vmatprep.subr.mxu0 0.0
  %2149 = vmatpush2.msra.mxu0 0.0
  %2150 = vmatprep.subr.mxu0 0.0
  %2151 = vmatpush2.msra.mxu0 0.0
  %2152 = vmatprep.subr.mxu0 0.0
  %2153 = vmatpush2.msra.mxu0 0.0
  %2154 = vmatprep.subr.mxu0 0.0
  %2155 = vmatpush2.msra.mxu0 0.0
  %2156 = vmatprep.subr.mxu0 0.0
  %2157 = vmatpush2.msra.mxu0 0.0
  %2158 = vmatprep.subr.mxu0 0.0
  %2159 = vmatpush2.msra.mxu0 0.0
  %2160 = vmatprep.subr.mxu0 0.0
  %2161 = vmatpush2.msra.mxu0 0.0
  %2162 = vmatprep.subr.mxu0 0.0
  %2163 = vmatpush2.msra.mxu0 0.0
  %2164 = vmatprep.subr.mxu0 0.0
  %2165 = vmatpush2.msra.mxu0 0.0
  %2166 = vmatprep.subr.mxu0 0.0
  %2167 = vmatpush2.msra.mxu0 0.0
  %2168 = vmatprep.subr.mxu0 0.0
  %2169 = vmatpush2.msra.mxu0 0.0
  %2170 = vmatprep.subr.mxu0 0.0
  %2171 = vmatpush2.msra.mxu0 0.0
  %2172 = vmatprep.subr.mxu0 0.0
  %2173 = vmatpush2.msra.mxu0 0.0
  %2174 = vmatprep.mubr.f32.mxu0 0.0
  %2175 = vmatmul.mubr.f32.gmra.mxu0 %v2108
  %v2176 = vpop.f32.mrf.mxu0
  %v2177 = vadd.f32 0.0, %v2176
  %v2178 = vpop.f32.mrf.mxu0
  %v2179 = vadd.f32 0.0, %v2178
  %2180 = vdwg.mxu0
  %v2181 = vld [vmem:[#allocation2 + $0x20] sm:$0xff]
  %v2182 = vadd.f32 %v2177, %v2181
  %v2183 = vxor.u32 %v2182, 2147483648
  %v2184 = vmul.f32 %v2183, 1.442695
  %v2185 = vpow.pop %v2184
  %v2186 = vadd.f32 %v2185, 1.0
  %v2187 = vrcp.pop %v2186
  %v2188 = vmul.f32 1.0, %v2187
  %v2189 = vtanh.pop %v2182
  %2191 = vrot.lane.b32.xlu0 %v2090, 32
  %v2192 = vpop.permute.xlu0 %2191
  %v2194 = vmul.f32 %v2188, %v2192
  %2196 = vrot.lane.b32.xlu0 %v2189, 64
  %v2197 = vpop.permute.xlu0 %2196
  %v2199 = vmul.f32 %v2188, %v2197
  %2201 = vrot.lane.b32.xlu0 %v2199, 32
  %v2202 = vpop.permute.xlu0 %2201
  %v2204 = vadd.f32 %v2194, %v2202
  %v2205 = vtanh.pop %v2204
  %2207 = vrot.lane.b32.xlu0 %v2205, 64
  %v2208 = vpop.permute.xlu0 %2207
  %v2210 = vmul.f32 %v2188, %v2208
  %2212 = vrot.lane.b32.xlu0 %v2210, 32
  %v2213 = vpop.permute.xlu0 %2212
  %2215 = vst.msk [vmem:[#allocation3 + $0x10] sm:$0xff] %vm343, %v2213
  %v2216 = vld [vmem:[#allocation2 + $0x58] sm:$0xff]
  %v2217 = vadd.f32 %v2179, %v2216
  %v2218 = vxor.u32 %v2217, 2147483648
  %v2219 = vmul.f32 %v2218, 1.442695
  %v2220 = vpow.pop %v2219
  %v2221 = vadd.f32 %v2220, 1.0
  %v2222 = vrcp.pop %v2221
  %v2223 = vmul.f32 1.0, %v2222
  %v2224 = vtanh.pop %v2217
  %v2225 = vmul.f32 %v2223, %v2090
  %2227 = vrot.lane.b32.xlu0 %v2224, 64
  %v2228 = vpop.permute.xlu0 %2227
  %v2230 = vmul.f32 %v2223, %v2228
  %2232 = vrot.lane.b32.xlu0 %v2230, 32
  %v2233 = vpop.permute.xlu0 %2232
  %v2235 = vadd.f32 %v2225, %v2233
  %v2236 = vtanh.pop %v2235
  %2238 = vrot.lane.b32.xlu0 %v2236, 64
  %v2239 = vpop.permute.xlu0 %2238
  %v2241 = vmul.f32 %v2223, %v2239
  %2243 = vrot.lane.b32.xlu0 %v2241, 32
  %v2244 = vpop.permute.xlu0 %2243
  %2246 = vst.msk [vmem:[#allocation4 + $0x28] sm:$0xff] %vm343, %v2244
  %2247 = vrot.lane.b32.xlu0 %v2241, 64
  %v2248 = vpop.permute.xlu0 %2247
  %v2250 = vsel %vm343, %v2213, %v2248
  %2252 = vrot.lane.b32.xlu0 %v2204, 96
  %v2253 = vpop.permute.xlu0 %2252
  %v2255 = vsel %vm343, %v2253, %v2235
  %v2256 = vld [vmem:[%s5] sm:$0xff]
  %v2257 = vld [vmem:[%s5 + $0x8] sm:$0xff]
  %v2258 = vld [vmem:[%s5 + $0x10] sm:$0xff]
  %v2259 = vld [vmem:[%s5 + $0x18] sm:$0xff]
  %v2260 = vld [vmem:[%s5 + $0x20] sm:$0xff]
  %v2261 = vld [vmem:[%s5 + $0x28] sm:$0xff]
  %v2262 = vld [vmem:[%s5 + $0x30] sm:$0xff]
  %v2263 = vld [vmem:[%s5 + $0x38] sm:$0xff]
  %v2264 = vld [vmem:[%s5 + $0x40] sm:$0xff]
  %v2265 = vld [vmem:[%s5 + $0x48] sm:$0xff]
  %v2266 = vld [vmem:[%s5 + $0x50] sm:$0xff]
  %v2267 = vld [vmem:[%s5 + $0x58] sm:$0xff]
  %v2268 = vld [vmem:[%s5 + $0x60] sm:$0xff]
  %v2269 = vld [vmem:[%s5 + $0x68] sm:$0xff]
  %v2270 = vld [vmem:[%s5 + $0x70] sm:$0xff]
  %v2271 = vld [vmem:[%s5 + $0x78] sm:$0xff]
  %v2273 = vsel %vm238, %v2250, 0
  %2275 = vmatprep.subr.mxu0 0.0
  %2276 = vmatpush1.msra.mxu0 0.0
  %2277 = vmatprep.subr.mxu0 0.0
  %2278 = vmatpush1.msra.mxu0 0.0
  %2279 = vmatprep.subr.mxu0 0.0
  %2280 = vmatpush1.msra.mxu0 0.0
  %2281 = vmatprep.subr.mxu0 0.0
  %2282 = vmatpush1.msra.mxu0 0.0
  %2283 = vmatprep.subr.mxu0 0.0
  %2284 = vmatpush1.msra.mxu0 0.0
  %2285 = vmatprep.subr.mxu0 0.0
  %2286 = vmatpush1.msra.mxu0 0.0
  %2287 = vmatprep.subr.mxu0 0.0
  %2288 = vmatpush1.msra.mxu0 0.0
  %2289 = vmatprep.subr.mxu0 0.0
  %2290 = vmatpush1.msra.mxu0 0.0
  %2291 = vmatprep.subr.mxu0 %v2271
  %2292 = vmatpush1.msra.mxu0 %v2270
  %2293 = vmatprep.subr.mxu0 %v2269
  %2294 = vmatpush1.msra.mxu0 %v2268
  %2295 = vmatprep.subr.mxu0 %v2267
  %2296 = vmatpush1.msra.mxu0 %v2266
  %2297 = vmatprep.subr.mxu0 %v2265
  %2298 = vmatpush1.msra.mxu0 %v2264
  %2299 = vmatprep.subr.mxu0 %v2263
  %2300 = vmatpush1.msra.mxu0 %v2262
  %2301 = vmatprep.subr.mxu0 %v2261
  %2302 = vmatpush1.msra.mxu0 %v2260
  %2303 = vmatprep.subr.mxu0 %v2259
  %2304 = vmatpush1.msra.mxu0 %v2258
  %2305 = vmatprep.subr.mxu0 %v2257
  %2306 = vmatpush1.msra.mxu0 %v2256
  %2307 = vmatprep.subr.mxu0 0.0
  %2308 = vmatpush2.msra.mxu0 0.0
  %2309 = vmatprep.subr.mxu0 0.0
  %2310 = vmatpush2.msra.mxu0 0.0
  %2311 = vmatprep.subr.mxu0 0.0
  %2312 = vmatpush2.msra.mxu0 0.0
  %2313 = vmatprep.subr.mxu0 0.0
  %2314 = vmatpush2.msra.mxu0 0.0
  %2315 = vmatprep.subr.mxu0 0.0
  %2316 = vmatpush2.msra.mxu0 0.0
  %2317 = vmatprep.subr.mxu0 0.0
  %2318 = vmatpush2.msra.mxu0 0.0
  %2319 = vmatprep.subr.mxu0 0.0
  %2320 = vmatpush2.msra.mxu0 0.0
  %2321 = vmatprep.subr.mxu0 0.0
  %2322 = vmatpush2.msra.mxu0 0.0
  %2323 = vmatprep.subr.mxu0 0.0
  %2324 = vmatpush2.msra.mxu0 0.0
  %2325 = vmatprep.subr.mxu0 0.0
  %2326 = vmatpush2.msra.mxu0 0.0
  %2327 = vmatprep.subr.mxu0 0.0
  %2328 = vmatpush2.msra.mxu0 0.0
  %2329 = vmatprep.subr.mxu0 0.0
  %2330 = vmatpush2.msra.mxu0 0.0
  %2331 = vmatprep.subr.mxu0 0.0
  %2332 = vmatpush2.msra.mxu0 0.0
  %2333 = vmatprep.subr.mxu0 0.0
  %2334 = vmatpush2.msra.mxu0 0.0
  %2335 = vmatprep.subr.mxu0 0.0
  %2336 = vmatpush2.msra.mxu0 0.0
  %2337 = vmatprep.subr.mxu0 0.0
  %2338 = vmatpush2.msra.mxu0 0.0
  %2339 = vmatprep.mubr.f32.mxu0 0.0
  %2340 = vmatmul.mubr.f32.gmra.mxu0 %v2273
  %v2341 = vpop.f32.mrf.mxu0
  %v2342 = vadd.f32 0.0, %v2341
  %v2343 = vpop.f32.mrf.mxu0
  %v2344 = vadd.f32 0.0, %v2343
  %2345 = vdwg.mxu0
  %v2346 = vld [vmem:[#allocation2 + $0x30] sm:$0xff]
  %v2347 = vadd.f32 %v2342, %v2346
  %v2348 = vxor.u32 %v2347, 2147483648
  %v2349 = vmul.f32 %v2348, 1.442695
  %v2350 = vpow.pop %v2349
  %v2351 = vadd.f32 %v2350, 1.0
  %v2352 = vrcp.pop %v2351
  %v2353 = vmul.f32 1.0, %v2352
  %v2354 = vtanh.pop %v2347
  %2356 = vrot.lane.b32.xlu0 %v2255, 32
  %v2357 = vpop.permute.xlu0 %2356
  %v2359 = vmul.f32 %v2353, %v2357
  %2361 = vrot.lane.b32.xlu0 %v2354, 64
  %v2362 = vpop.permute.xlu0 %2361
  %v2364 = vmul.f32 %v2353, %v2362
  %2366 = vrot.lane.b32.xlu0 %v2364, 32
  %v2367 = vpop.permute.xlu0 %2366
  %v2369 = vadd.f32 %v2359, %v2367
  %v2370 = vtanh.pop %v2369
  %2372 = vrot.lane.b32.xlu0 %v2370, 64
  %v2373 = vpop.permute.xlu0 %2372
  %v2375 = vmul.f32 %v2353, %v2373
  %2377 = vrot.lane.b32.xlu0 %v2375, 32
  %v2378 = vpop.permute.xlu0 %2377
  %2380 = vst.msk [vmem:[#allocation3 + $0x18] sm:$0xff] %vm343, %v2378
  %v2381 = vld [vmem:[#allocation2 + $0x48] sm:$0xff]
  %v2382 = vadd.f32 %v2344, %v2381
  %v2383 = vxor.u32 %v2382, 2147483648
  %v2384 = vmul.f32 %v2383, 1.442695
  %v2385 = vpow.pop %v2384
  %v2386 = vadd.f32 %v2385, 1.0
  %v2387 = vrcp.pop %v2386
  %v2388 = vmul.f32 1.0, %v2387
  %v2389 = vtanh.pop %v2382
  %v2390 = vmul.f32 %v2388, %v2255
  %2392 = vrot.lane.b32.xlu0 %v2389, 64
  %v2393 = vpop.permute.xlu0 %2392
  %v2395 = vmul.f32 %v2388, %v2393
  %2397 = vrot.lane.b32.xlu0 %v2395, 32
  %v2398 = vpop.permute.xlu0 %2397
  %v2400 = vadd.f32 %v2390, %v2398
  %v2401 = vtanh.pop %v2400
  %2403 = vrot.lane.b32.xlu0 %v2401, 64
  %v2404 = vpop.permute.xlu0 %2403
  %v2406 = vmul.f32 %v2388, %v2404
  %2408 = vrot.lane.b32.xlu0 %v2406, 32
  %v2409 = vpop.permute.xlu0 %2408
  %2411 = vst.msk [vmem:[#allocation4 + $0x20] sm:$0xff] %vm343, %v2409
  %2412 = vrot.lane.b32.xlu0 %v2406, 64
  %v2413 = vpop.permute.xlu0 %2412
  %v2415 = vsel %vm343, %v2378, %v2413
  %2417 = vrot.lane.b32.xlu0 %v2369, 96
  %v2418 = vpop.permute.xlu0 %2417
  %v2420 = vsel %vm343, %v2418, %v2400
  %v2421 = vld [vmem:[%s5] sm:$0xff]
  %v2422 = vld [vmem:[%s5 + $0x8] sm:$0xff]
  %v2423 = vld [vmem:[%s5 + $0x10] sm:$0xff]
  %v2424 = vld [vmem:[%s5 + $0x18] sm:$0xff]
  %v2425 = vld [vmem:[%s5 + $0x20] sm:$0xff]
  %v2426 = vld [vmem:[%s5 + $0x28] sm:$0xff]
  %v2427 = vld [vmem:[%s5 + $0x30] sm:$0xff]
  %v2428 = vld [vmem:[%s5 + $0x38] sm:$0xff]
  %v2429 = vld [vmem:[%s5 + $0x40] sm:$0xff]
  %v2430 = vld [vmem:[%s5 + $0x48] sm:$0xff]
  %v2431 = vld [vmem:[%s5 + $0x50] sm:$0xff]
  %v2432 = vld [vmem:[%s5 + $0x58] sm:$0xff]
  %v2433 = vld [vmem:[%s5 + $0x60] sm:$0xff]
  %v2434 = vld [vmem:[%s5 + $0x68] sm:$0xff]
  %v2435 = vld [vmem:[%s5 + $0x70] sm:$0xff]
  %v2436 = vld [vmem:[%s5 + $0x78] sm:$0xff]
  %v2438 = vsel %vm238, %v2415, 0
  %2440 = vmatprep.subr.mxu0 0.0
  %2441 = vmatpush1.msra.mxu0 0.0
  %2442 = vmatprep.subr.mxu0 0.0
  %2443 = vmatpush1.msra.mxu0 0.0
  %2444 = vmatprep.subr.mxu0 0.0
  %2445 = vmatpush1.msra.mxu0 0.0
  %2446 = vmatprep.subr.mxu0 0.0
  %2447 = vmatpush1.msra.mxu0 0.0
  %2448 = vmatprep.subr.mxu0 0.0
  %2449 = vmatpush1.msra.mxu0 0.0
  %2450 = vmatprep.subr.mxu0 0.0
  %2451 = vmatpush1.msra.mxu0 0.0
  %2452 = vmatprep.subr.mxu0 0.0
  %2453 = vmatpush1.msra.mxu0 0.0
  %2454 = vmatprep.subr.mxu0 0.0
  %2455 = vmatpush1.msra.mxu0 0.0
  %2456 = vmatprep.subr.mxu0 %v2436
  %2457 = vmatpush1.msra.mxu0 %v2435
  %2458 = vmatprep.subr.mxu0 %v2434
  %2459 = vmatpush1.msra.mxu0 %v2433
  %2460 = vmatprep.subr.mxu0 %v2432
  %2461 = vmatpush1.msra.mxu0 %v2431
  %2462 = vmatprep.subr.mxu0 %v2430
  %2463 = vmatpush1.msra.mxu0 %v2429
  %2464 = vmatprep.subr.mxu0 %v2428
  %2465 = vmatpush1.msra.mxu0 %v2427
  %2466 = vmatprep.subr.mxu0 %v2426
  %2467 = vmatpush1.msra.mxu0 %v2425
  %2468 = vmatprep.subr.mxu0 %v2424
  %2469 = vmatpush1.msra.mxu0 %v2423
  %2470 = vmatprep.subr.mxu0 %v2422
  %2471 = vmatpush1.msra.mxu0 %v2421
  %2472 = vmatprep.subr.mxu0 0.0
  %2473 = vmatpush2.msra.mxu0 0.0
  %2474 = vmatprep.subr.mxu0 0.0
  %2475 = vmatpush2.msra.mxu0 0.0
  %2476 = vmatprep.subr.mxu0 0.0
  %2477 = vmatpush2.msra.mxu0 0.0
  %2478 = vmatprep.subr.mxu0 0.0
  %2479 = vmatpush2.msra.mxu0 0.0
  %2480 = vmatprep.subr.mxu0 0.0
  %2481 = vmatpush2.msra.mxu0 0.0
  %2482 = vmatprep.subr.mxu0 0.0
  %2483 = vmatpush2.msra.mxu0 0.0
  %2484 = vmatprep.subr.mxu0 0.0
  %2485 = vmatpush2.msra.mxu0 0.0
  %2486 = vmatprep.subr.mxu0 0.0
  %2487 = vmatpush2.msra.mxu0 0.0
  %2488 = vmatprep.subr.mxu0 0.0
  %2489 = vmatpush2.msra.mxu0 0.0
  %2490 = vmatprep.subr.mxu0 0.0
  %2491 = vmatpush2.msra.mxu0 0.0
  %2492 = vmatprep.subr.mxu0 0.0
  %2493 = vmatpush2.msra.mxu0 0.0
  %2494 = vmatprep.subr.mxu0 0.0
  %2495 = vmatpush2.msra.mxu0 0.0
  %2496 = vmatprep.subr.mxu0 0.0
  %2497 = vmatpush2.msra.mxu0 0.0
  %2498 = vmatprep.subr.mxu0 0.0
  %2499 = vmatpush2.msra.mxu0 0.0
  %2500 = vmatprep.subr.mxu0 0.0
  %2501 = vmatpush2.msra.mxu0 0.0
  %2502 = vmatprep.subr.mxu0 0.0
  %2503 = vmatpush2.msra.mxu0 0.0
  %2504 = vmatprep.mubr.f32.mxu0 0.0
  %2505 = vmatmul.mubr.f32.gmra.mxu0 %v2438
  %v2506 = vpop.f32.mrf.mxu0
  %v2507 = vadd.f32 0.0, %v2506
  %v2508 = vpop.f32.mrf.mxu0
  %v2509 = vadd.f32 0.0, %v2508
  %2510 = vdwg.mxu0
  %v2511 = vld [vmem:[#allocation2 + $0x40] sm:$0xff]
  %v2512 = vadd.f32 %v2507, %v2511
  %v2513 = vxor.u32 %v2512, 2147483648
  %v2514 = vmul.f32 %v2513, 1.442695
  %v2515 = vpow.pop %v2514
  %v2516 = vadd.f32 %v2515, 1.0
  %v2517 = vrcp.pop %v2516
  %v2518 = vmul.f32 1.0, %v2517
  %v2519 = vtanh.pop %v2512
  %2521 = vrot.lane.b32.xlu0 %v2420, 32
  %v2522 = vpop.permute.xlu0 %2521
  %v2524 = vmul.f32 %v2518, %v2522
  %2526 = vrot.lane.b32.xlu0 %v2519, 64
  %v2527 = vpop.permute.xlu0 %2526
  %v2529 = vmul.f32 %v2518, %v2527
  %2531 = vrot.lane.b32.xlu0 %v2529, 32
  %v2532 = vpop.permute.xlu0 %2531
  %v2534 = vadd.f32 %v2524, %v2532
  %v2535 = vtanh.pop %v2534
  %2537 = vrot.lane.b32.xlu0 %v2535, 64
  %v2538 = vpop.permute.xlu0 %2537
  %v2540 = vmul.f32 %v2518, %v2538
  %2542 = vrot.lane.b32.xlu0 %v2540, 32
  %v2543 = vpop.permute.xlu0 %2542
  %2545 = vst.msk [vmem:[#allocation3 + $0x20] sm:$0xff] %vm343, %v2543
  %v2546 = vld [vmem:[#allocation2 + $0x38] sm:$0xff]
  %v2547 = vadd.f32 %v2509, %v2546
  %v2548 = vxor.u32 %v2547, 2147483648
  %v2549 = vmul.f32 %v2548, 1.442695
  %v2550 = vpow.pop %v2549
  %v2551 = vadd.f32 %v2550, 1.0
  %v2552 = vrcp.pop %v2551
  %v2553 = vmul.f32 1.0, %v2552
  %v2554 = vtanh.pop %v2547
  %v2555 = vmul.f32 %v2553, %v2420
  %2557 = vrot.lane.b32.xlu0 %v2554, 64
  %v2558 = vpop.permute.xlu0 %2557
  %v2560 = vmul.f32 %v2553, %v2558
  %2562 = vrot.lane.b32.xlu0 %v2560, 32
  %v2563 = vpop.permute.xlu0 %2562
  %v2565 = vadd.f32 %v2555, %v2563
  %v2566 = vtanh.pop %v2565
  %2568 = vrot.lane.b32.xlu0 %v2566, 64
  %v2569 = vpop.permute.xlu0 %2568
  %v2571 = vmul.f32 %v2553, %v2569
  %2573 = vrot.lane.b32.xlu0 %v2571, 32
  %v2574 = vpop.permute.xlu0 %2573
  %2576 = vst.msk [vmem:[#allocation4 + $0x18] sm:$0xff] %vm343, %v2574
  %2577 = vrot.lane.b32.xlu0 %v2571, 64
  %v2578 = vpop.permute.xlu0 %2577
  %v2580 = vsel %vm343, %v2543, %v2578
  %2582 = vrot.lane.b32.xlu0 %v2534, 96
  %v2583 = vpop.permute.xlu0 %2582
  %v2585 = vsel %vm343, %v2583, %v2565
  %v2586 = vld [vmem:[%s5] sm:$0xff]
  %v2587 = vld [vmem:[%s5 + $0x8] sm:$0xff]
  %v2588 = vld [vmem:[%s5 + $0x10] sm:$0xff]
  %v2589 = vld [vmem:[%s5 + $0x18] sm:$0xff]
  %v2590 = vld [vmem:[%s5 + $0x20] sm:$0xff]
  %v2591 = vld [vmem:[%s5 + $0x28] sm:$0xff]
  %v2592 = vld [vmem:[%s5 + $0x30] sm:$0xff]
  %v2593 = vld [vmem:[%s5 + $0x38] sm:$0xff]
  %v2594 = vld [vmem:[%s5 + $0x40] sm:$0xff]
  %v2595 = vld [vmem:[%s5 + $0x48] sm:$0xff]
  %v2596 = vld [vmem:[%s5 + $0x50] sm:$0xff]
  %v2597 = vld [vmem:[%s5 + $0x58] sm:$0xff]
  %v2598 = vld [vmem:[%s5 + $0x60] sm:$0xff]
  %v2599 = vld [vmem:[%s5 + $0x68] sm:$0xff]
  %v2600 = vld [vmem:[%s5 + $0x70] sm:$0xff]
  %v2601 = vld [vmem:[%s5 + $0x78] sm:$0xff]
  %v2603 = vsel %vm238, %v2580, 0
  %2605 = vmatprep.subr.mxu0 0.0
  %2606 = vmatpush1.msra.mxu0 0.0
  %2607 = vmatprep.subr.mxu0 0.0
  %2608 = vmatpush1.msra.mxu0 0.0
  %2609 = vmatprep.subr.mxu0 0.0
  %2610 = vmatpush1.msra.mxu0 0.0
  %2611 = vmatprep.subr.mxu0 0.0
  %2612 = vmatpush1.msra.mxu0 0.0
  %2613 = vmatprep.subr.mxu0 0.0
  %2614 = vmatpush1.msra.mxu0 0.0
  %2615 = vmatprep.subr.mxu0 0.0
  %2616 = vmatpush1.msra.mxu0 0.0
  %2617 = vmatprep.subr.mxu0 0.0
  %2618 = vmatpush1.msra.mxu0 0.0
  %2619 = vmatprep.subr.mxu0 0.0
  %2620 = vmatpush1.msra.mxu0 0.0
  %2621 = vmatprep.subr.mxu0 %v2601
  %2622 = vmatpush1.msra.mxu0 %v2600
  %2623 = vmatprep.subr.mxu0 %v2599
  %2624 = vmatpush1.msra.mxu0 %v2598
  %2625 = vmatprep.subr.mxu0 %v2597
  %2626 = vmatpush1.msra.mxu0 %v2596
  %2627 = vmatprep.subr.mxu0 %v2595
  %2628 = vmatpush1.msra.mxu0 %v2594
  %2629 = vmatprep.subr.mxu0 %v2593
  %2630 = vmatpush1.msra.mxu0 %v2592
  %2631 = vmatprep.subr.mxu0 %v2591
  %2632 = vmatpush1.msra.mxu0 %v2590
  %2633 = vmatprep.subr.mxu0 %v2589
  %2634 = vmatpush1.msra.mxu0 %v2588
  %2635 = vmatprep.subr.mxu0 %v2587
  %2636 = vmatpush1.msra.mxu0 %v2586
  %2637 = vmatprep.subr.mxu0 0.0
  %2638 = vmatpush2.msra.mxu0 0.0
  %2639 = vmatprep.subr.mxu0 0.0
  %2640 = vmatpush2.msra.mxu0 0.0
  %2641 = vmatprep.subr.mxu0 0.0
  %2642 = vmatpush2.msra.mxu0 0.0
  %2643 = vmatprep.subr.mxu0 0.0
  %2644 = vmatpush2.msra.mxu0 0.0
  %2645 = vmatprep.subr.mxu0 0.0
  %2646 = vmatpush2.msra.mxu0 0.0
  %2647 = vmatprep.subr.mxu0 0.0
  %2648 = vmatpush2.msra.mxu0 0.0
  %2649 = vmatprep.subr.mxu0 0.0
  %2650 = vmatpush2.msra.mxu0 0.0
  %2651 = vmatprep.subr.mxu0 0.0
  %2652 = vmatpush2.msra.mxu0 0.0
  %2653 = vmatprep.subr.mxu0 0.0
  %2654 = vmatpush2.msra.mxu0 0.0
  %2655 = vmatprep.subr.mxu0 0.0
  %2656 = vmatpush2.msra.mxu0 0.0
  %2657 = vmatprep.subr.mxu0 0.0
  %2658 = vmatpush2.msra.mxu0 0.0
  %2659 = vmatprep.subr.mxu0 0.0
  %2660 = vmatpush2.msra.mxu0 0.0
  %2661 = vmatprep.subr.mxu0 0.0
  %2662 = vmatpush2.msra.mxu0 0.0
  %2663 = vmatprep.subr.mxu0 0.0
  %2664 = vmatpush2.msra.mxu0 0.0
  %2665 = vmatprep.subr.mxu0 0.0
  %2666 = vmatpush2.msra.mxu0 0.0
  %2667 = vmatprep.subr.mxu0 0.0
  %2668 = vmatpush2.msra.mxu0 0.0
  %2669 = vmatprep.mubr.f32.mxu0 0.0
  %2670 = vmatmul.mubr.f32.gmra.mxu0 %v2603
  %v2671 = vpop.f32.mrf.mxu0
  %v2672 = vadd.f32 0.0, %v2671
  %v2673 = vpop.f32.mrf.mxu0
  %v2674 = vadd.f32 0.0, %v2673
  %2675 = vdwg.mxu0
  %v2676 = vld [vmem:[#allocation2 + $0x50] sm:$0xff]
  %v2677 = vadd.f32 %v2672, %v2676
  %v2678 = vxor.u32 %v2677, 2147483648
  %v2679 = vmul.f32 %v2678, 1.442695
  %v2680 = vpow.pop %v2679
  %v2681 = vadd.f32 %v2680, 1.0
  %v2682 = vrcp.pop %v2681
  %v2683 = vmul.f32 1.0, %v2682
  %v2684 = vtanh.pop %v2677
  %2686 = vrot.lane.b32.xlu0 %v2585, 32
  %v2687 = vpop.permute.xlu0 %2686
  %v2689 = vmul.f32 %v2683, %v2687
  %2691 = vrot.lane.b32.xlu0 %v2684, 64
  %v2692 = vpop.permute.xlu0 %2691
  %v2694 = vmul.f32 %v2683, %v2692
  %2696 = vrot.lane.b32.xlu0 %v2694, 32
  %v2697 = vpop.permute.xlu0 %2696
  %v2699 = vadd.f32 %v2689, %v2697
  %v2700 = vtanh.pop %v2699
  %2702 = vrot.lane.b32.xlu0 %v2700, 64
  %v2703 = vpop.permute.xlu0 %2702
  %v2705 = vmul.f32 %v2683, %v2703
  %2707 = vrot.lane.b32.xlu0 %v2705, 32
  %v2708 = vpop.permute.xlu0 %2707
  %2710 = vst.msk [vmem:[#allocation3 + $0x28] sm:$0xff] %vm343, %v2708
  %v2711 = vld [vmem:[#allocation2 + $0x28] sm:$0xff]
  %v2712 = vadd.f32 %v2674, %v2711
  %v2713 = vxor.u32 %v2712, 2147483648
  %v2714 = vmul.f32 %v2713, 1.442695
  %v2715 = vpow.pop %v2714
  %v2716 = vadd.f32 %v2715, 1.0
  %v2717 = vrcp.pop %v2716
  %v2718 = vmul.f32 1.0, %v2717
  %v2719 = vtanh.pop %v2712
  %v2720 = vmul.f32 %v2718, %v2585
  %2722 = vrot.lane.b32.xlu0 %v2719, 64
  %v2723 = vpop.permute.xlu0 %2722
  %v2725 = vmul.f32 %v2718, %v2723
  %2727 = vrot.lane.b32.xlu0 %v2725, 32
  %v2728 = vpop.permute.xlu0 %2727
  %v2730 = vadd.f32 %v2720, %v2728
  %v2731 = vtanh.pop %v2730
  %2733 = vrot.lane.b32.xlu0 %v2731, 64
  %v2734 = vpop.permute.xlu0 %2733
  %v2736 = vmul.f32 %v2718, %v2734
  %2738 = vrot.lane.b32.xlu0 %v2736, 32
  %v2739 = vpop.permute.xlu0 %2738
  %2741 = vst.msk [vmem:[#allocation4 + $0x10] sm:$0xff] %vm343, %v2739
  %2742 = vrot.lane.b32.xlu0 %v2736, 64
  %v2743 = vpop.permute.xlu0 %2742
  %v2745 = vsel %vm343, %v2708, %v2743
  %2747 = vrot.lane.b32.xlu0 %v2699, 96
  %v2748 = vpop.permute.xlu0 %2747
  %v2750 = vsel %vm343, %v2748, %v2730
  %v2751 = vld [vmem:[%s5] sm:$0xff]
  %v2752 = vld [vmem:[%s5 + $0x8] sm:$0xff]
  %v2753 = vld [vmem:[%s5 + $0x10] sm:$0xff]
  %v2754 = vld [vmem:[%s5 + $0x18] sm:$0xff]
  %v2755 = vld [vmem:[%s5 + $0x20] sm:$0xff]
  %v2756 = vld [vmem:[%s5 + $0x28] sm:$0xff]
  %v2757 = vld [vmem:[%s5 + $0x30] sm:$0xff]
  %v2758 = vld [vmem:[%s5 + $0x38] sm:$0xff]
  %v2759 = vld [vmem:[%s5 + $0x40] sm:$0xff]
  %v2760 = vld [vmem:[%s5 + $0x48] sm:$0xff]
  %v2761 = vld [vmem:[%s5 + $0x50] sm:$0xff]
  %v2762 = vld [vmem:[%s5 + $0x58] sm:$0xff]
  %v2763 = vld [vmem:[%s5 + $0x60] sm:$0xff]
  %v2764 = vld [vmem:[%s5 + $0x68] sm:$0xff]
  %v2765 = vld [vmem:[%s5 + $0x70] sm:$0xff]
  %v2766 = vld [vmem:[%s5 + $0x78] sm:$0xff]
  %v2768 = vsel %vm238, %v2745, 0
  %2770 = vmatprep.subr.mxu0 0.0
  %2771 = vmatpush1.msra.mxu0 0.0
  %2772 = vmatprep.subr.mxu0 0.0
  %2773 = vmatpush1.msra.mxu0 0.0
  %2774 = vmatprep.subr.mxu0 0.0
  %2775 = vmatpush1.msra.mxu0 0.0
  %2776 = vmatprep.subr.mxu0 0.0
  %2777 = vmatpush1.msra.mxu0 0.0
  %2778 = vmatprep.subr.mxu0 0.0
  %2779 = vmatpush1.msra.mxu0 0.0
  %2780 = vmatprep.subr.mxu0 0.0
  %2781 = vmatpush1.msra.mxu0 0.0
  %2782 = vmatprep.subr.mxu0 0.0
  %2783 = vmatpush1.msra.mxu0 0.0
  %2784 = vmatprep.subr.mxu0 0.0
  %2785 = vmatpush1.msra.mxu0 0.0
  %2786 = vmatprep.subr.mxu0 %v2766
  %2787 = vmatpush1.msra.mxu0 %v2765
  %2788 = vmatprep.subr.mxu0 %v2764
  %2789 = vmatpush1.msra.mxu0 %v2763
  %2790 = vmatprep.subr.mxu0 %v2762
  %2791 = vmatpush1.msra.mxu0 %v2761
  %2792 = vmatprep.subr.mxu0 %v2760
  %2793 = vmatpush1.msra.mxu0 %v2759
  %2794 = vmatprep.subr.mxu0 %v2758
  %2795 = vmatpush1.msra.mxu0 %v2757
  %2796 = vmatprep.subr.mxu0 %v2756
  %2797 = vmatpush1.msra.mxu0 %v2755
  %2798 = vmatprep.subr.mxu0 %v2754
  %2799 = vmatpush1.msra.mxu0 %v2753
  %2800 = vmatprep.subr.mxu0 %v2752
  %2801 = vmatpush1.msra.mxu0 %v2751
  %2802 = vmatprep.subr.mxu0 0.0
  %2803 = vmatpush2.msra.mxu0 0.0
  %2804 = vmatprep.subr.mxu0 0.0
  %2805 = vmatpush2.msra.mxu0 0.0
  %2806 = vmatprep.subr.mxu0 0.0
  %2807 = vmatpush2.msra.mxu0 0.0
  %2808 = vmatprep.subr.mxu0 0.0
  %2809 = vmatpush2.msra.mxu0 0.0
  %2810 = vmatprep.subr.mxu0 0.0
  %2811 = vmatpush2.msra.mxu0 0.0
  %2812 = vmatprep.subr.mxu0 0.0
  %2813 = vmatpush2.msra.mxu0 0.0
  %2814 = vmatprep.subr.mxu0 0.0
  %2815 = vmatpush2.msra.mxu0 0.0
  %2816 = vmatprep.subr.mxu0 0.0
  %2817 = vmatpush2.msra.mxu0 0.0
  %2818 = vmatprep.subr.mxu0 0.0
  %2819 = vmatpush2.msra.mxu0 0.0
  %2820 = vmatprep.subr.mxu0 0.0
  %2821 = vmatpush2.msra.mxu0 0.0
  %2822 = vmatprep.subr.mxu0 0.0
  %2823 = vmatpush2.msra.mxu0 0.0
  %2824 = vmatprep.subr.mxu0 0.0
  %2825 = vmatpush2.msra.mxu0 0.0
  %2826 = vmatprep.subr.mxu0 0.0
  %2827 = vmatpush2.msra.mxu0 0.0
  %2828 = vmatprep.subr.mxu0 0.0
  %2829 = vmatpush2.msra.mxu0 0.0
  %2830 = vmatprep.subr.mxu0 0.0
  %2831 = vmatpush2.msra.mxu0 0.0
  %2832 = vmatprep.subr.mxu0 0.0
  %2833 = vmatpush2.msra.mxu0 0.0
  %2834 = vmatprep.mubr.f32.mxu0 0.0
  %2835 = vmatmul.mubr.f32.gmra.mxu0 %v2768
  %v2836 = vpop.f32.mrf.mxu0
  %v2837 = vadd.f32 0.0, %v2836
  %v2838 = vpop.f32.mrf.mxu0
  %v2839 = vadd.f32 0.0, %v2838
  %2840 = vdwg.mxu0
  %v2841 = vld [vmem:[#allocation2 + $0x60] sm:$0xff]
  %v2842 = vadd.f32 %v2837, %v2841
  %v2843 = vxor.u32 %v2842, 2147483648
  %v2844 = vmul.f32 %v2843, 1.442695
  %v2845 = vpow.pop %v2844
  %v2846 = vadd.f32 %v2845, 1.0
  %v2847 = vrcp.pop %v2846
  %v2848 = vmul.f32 1.0, %v2847
  %v2849 = vtanh.pop %v2842
  %2851 = vrot.lane.b32.xlu0 %v2750, 32
  %v2852 = vpop.permute.xlu0 %2851
  %v2854 = vmul.f32 %v2848, %v2852
  %2856 = vrot.lane.b32.xlu0 %v2849, 64
  %v2857 = vpop.permute.xlu0 %2856
  %v2859 = vmul.f32 %v2848, %v2857
  %2861 = vrot.lane.b32.xlu0 %v2859, 32
  %v2862 = vpop.permute.xlu0 %2861
  %v2864 = vadd.f32 %v2854, %v2862
  %v2865 = vtanh.pop %v2864
  %2867 = vrot.lane.b32.xlu0 %v2865, 64
  %v2868 = vpop.permute.xlu0 %2867
  %v2870 = vmul.f32 %v2848, %v2868
  %2872 = vrot.lane.b32.xlu0 %v2870, 32
  %v2873 = vpop.permute.xlu0 %2872
  %2875 = vst.msk [vmem:[#allocation3 + $0x30] sm:$0xff] %vm343, %v2873
  %v2876 = vld [vmem:[#allocation2 + $0x18] sm:$0xff]
  %v2877 = vadd.f32 %v2839, %v2876
  %v2878 = vxor.u32 %v2877, 2147483648
  %v2879 = vmul.f32 %v2878, 1.442695
  %v2880 = vpow.pop %v2879
  %v2881 = vadd.f32 %v2880, 1.0
  %v2882 = vrcp.pop %v2881
  %v2883 = vmul.f32 1.0, %v2882
  %v2884 = vtanh.pop %v2877
  %v2885 = vmul.f32 %v2883, %v2750
  %2887 = vrot.lane.b32.xlu0 %v2884, 64
  %v2888 = vpop.permute.xlu0 %2887
  %v2890 = vmul.f32 %v2883, %v2888
  %2892 = vrot.lane.b32.xlu0 %v2890, 32
  %v2893 = vpop.permute.xlu0 %2892
  %v2895 = vadd.f32 %v2885, %v2893
  %v2896 = vtanh.pop %v2895
  %2898 = vrot.lane.b32.xlu0 %v2896, 64
  %v2899 = vpop.permute.xlu0 %2898
  %v2901 = vmul.f32 %v2883, %v2899
  %2903 = vrot.lane.b32.xlu0 %v2901, 32
  %v2904 = vpop.permute.xlu0 %2903
  %2906 = vst.msk [vmem:[#allocation4 + $0x8] sm:$0xff] %vm343, %v2904
  %2907 = vrot.lane.b32.xlu0 %v2901, 64
  %v2908 = vpop.permute.xlu0 %2907
  %v2910 = vsel %vm343, %v2873, %v2908
  %2912 = vrot.lane.b32.xlu0 %v2864, 96
  %v2913 = vpop.permute.xlu0 %2912
  %v2915 = vsel %vm343, %v2913, %v2895
  %v2916 = vld [vmem:[%s5] sm:$0xff]
  %v2917 = vld [vmem:[%s5 + $0x8] sm:$0xff]
  %v2918 = vld [vmem:[%s5 + $0x10] sm:$0xff]
  %v2919 = vld [vmem:[%s5 + $0x18] sm:$0xff]
  %v2920 = vld [vmem:[%s5 + $0x20] sm:$0xff]
  %v2921 = vld [vmem:[%s5 + $0x28] sm:$0xff]
  %v2922 = vld [vmem:[%s5 + $0x30] sm:$0xff]
  %v2923 = vld [vmem:[%s5 + $0x38] sm:$0xff]
  %v2924 = vld [vmem:[%s5 + $0x40] sm:$0xff]
  %v2925 = vld [vmem:[%s5 + $0x48] sm:$0xff]
  %v2926 = vld [vmem:[%s5 + $0x50] sm:$0xff]
  %v2927 = vld [vmem:[%s5 + $0x58] sm:$0xff]
  %v2928 = vld [vmem:[%s5 + $0x60] sm:$0xff]
  %v2929 = vld [vmem:[%s5 + $0x68] sm:$0xff]
  %v2930 = vld [vmem:[%s5 + $0x70] sm:$0xff]
  %v2931 = vld [vmem:[%s5 + $0x78] sm:$0xff]
  %v2933 = vsel %vm238, %v2910, 0
  %2935 = vmatprep.subr.mxu0 0.0
  %2936 = vmatpush1.msra.mxu0 0.0
  %2937 = vmatprep.subr.mxu0 0.0
  %2938 = vmatpush1.msra.mxu0 0.0
  %2939 = vmatprep.subr.mxu0 0.0
  %2940 = vmatpush1.msra.mxu0 0.0
  %2941 = vmatprep.subr.mxu0 0.0
  %2942 = vmatpush1.msra.mxu0 0.0
  %2943 = vmatprep.subr.mxu0 0.0
  %2944 = vmatpush1.msra.mxu0 0.0
  %2945 = vmatprep.subr.mxu0 0.0
  %2946 = vmatpush1.msra.mxu0 0.0
  %2947 = vmatprep.subr.mxu0 0.0
  %2948 = vmatpush1.msra.mxu0 0.0
  %2949 = vmatprep.subr.mxu0 0.0
  %2950 = vmatpush1.msra.mxu0 0.0
  %2951 = vmatprep.subr.mxu0 %v2931
  %2952 = vmatpush1.msra.mxu0 %v2930
  %2953 = vmatprep.subr.mxu0 %v2929
  %2954 = vmatpush1.msra.mxu0 %v2928
  %2955 = vmatprep.subr.mxu0 %v2927
  %2956 = vmatpush1.msra.mxu0 %v2926
  %2957 = vmatprep.subr.mxu0 %v2925
  %2958 = vmatpush1.msra.mxu0 %v2924
  %2959 = vmatprep.subr.mxu0 %v2923
  %2960 = vmatpush1.msra.mxu0 %v2922
  %2961 = vmatprep.subr.mxu0 %v2921
  %2962 = vmatpush1.msra.mxu0 %v2920
  %2963 = vmatprep.subr.mxu0 %v2919
  %2964 = vmatpush1.msra.mxu0 %v2918
  %2965 = vmatprep.subr.mxu0 %v2917
  %2966 = vmatpush1.msra.mxu0 %v2916
  %2967 = vmatprep.subr.mxu0 0.0
  %2968 = vmatpush2.msra.mxu0 0.0
  %2969 = vmatprep.subr.mxu0 0.0
  %2970 = vmatpush2.msra.mxu0 0.0
  %2971 = vmatprep.subr.mxu0 0.0
  %2972 = vmatpush2.msra.mxu0 0.0
  %2973 = vmatprep.subr.mxu0 0.0
  %2974 = vmatpush2.msra.mxu0 0.0
  %2975 = vmatprep.subr.mxu0 0.0
  %2976 = vmatpush2.msra.mxu0 0.0
  %2977 = vmatprep.subr.mxu0 0.0
  %2978 = vmatpush2.msra.mxu0 0.0
  %2979 = vmatprep.subr.mxu0 0.0
  %2980 = vmatpush2.msra.mxu0 0.0
  %2981 = vmatprep.subr.mxu0 0.0
  %2982 = vmatpush2.msra.mxu0 0.0
  %2983 = vmatprep.subr.mxu0 0.0
  %2984 = vmatpush2.msra.mxu0 0.0
  %2985 = vmatprep.subr.mxu0 0.0
  %2986 = vmatpush2.msra.mxu0 0.0
  %2987 = vmatprep.subr.mxu0 0.0
  %2988 = vmatpush2.msra.mxu0 0.0
  %2989 = vmatprep.subr.mxu0 0.0
  %2990 = vmatpush2.msra.mxu0 0.0
  %2991 = vmatprep.subr.mxu0 0.0
  %2992 = vmatpush2.msra.mxu0 0.0
  %2993 = vmatprep.subr.mxu0 0.0
  %2994 = vmatpush2.msra.mxu0 0.0
  %2995 = vmatprep.subr.mxu0 0.0
  %2996 = vmatpush2.msra.mxu0 0.0
  %2997 = vmatprep.subr.mxu0 0.0
  %2998 = vmatpush2.msra.mxu0 0.0
  %2999 = vmatprep.mubr.f32.mxu0 0.0
  %3000 = vmatmul.mubr.f32.gmra.mxu0 %v2933
  %v3001 = vpop.f32.mrf.mxu0
  %v3002 = vadd.f32 0.0, %v3001
  %v3003 = vpop.f32.mrf.mxu0
  %v3004 = vadd.f32 0.0, %v3003
  %3005 = vdwg.mxu0
  %v3006 = vld [vmem:[#allocation2 + $0x70] sm:$0xff]
  %v3007 = vadd.f32 %v3002, %v3006
  %v3008 = vxor.u32 %v3007, 2147483648
  %v3009 = vmul.f32 %v3008, 1.442695
  %v3010 = vpow.pop %v3009
  %v3011 = vadd.f32 %v3010, 1.0
  %v3012 = vrcp.pop %v3011
  %v3013 = vmul.f32 1.0, %v3012
  %v3014 = vtanh.pop %v3007
  %3016 = vrot.lane.b32.xlu0 %v2915, 32
  %v3017 = vpop.permute.xlu0 %3016
  %v3019 = vmul.f32 %v3013, %v3017
  %3021 = vrot.lane.b32.xlu0 %v3014, 64
  %v3022 = vpop.permute.xlu0 %3021
  %v3024 = vmul.f32 %v3013, %v3022
  %3026 = vrot.lane.b32.xlu0 %v3024, 32
  %v3027 = vpop.permute.xlu0 %3026
  %v3029 = vadd.f32 %v3019, %v3027
  %v3030 = vtanh.pop %v3029
  %3032 = vrot.lane.b32.xlu0 %v3030, 64
  %v3033 = vpop.permute.xlu0 %3032
  %v3035 = vmul.f32 %v3013, %v3033
  %3037 = vrot.lane.b32.xlu0 %v3035, 32
  %v3038 = vpop.permute.xlu0 %3037
  %3040 = vst.msk [vmem:[#allocation3 + $0x38] sm:$0xff] %vm343, %v3038
  %v3041 = vld [vmem:[#allocation2 + $0x8] sm:$0xff]
  %v3042 = vadd.f32 %v3004, %v3041
  %v3043 = vxor.u32 %v3042, 2147483648
  %v3044 = vmul.f32 %v3043, 1.442695
  %v3045 = vpow.pop %v3044
  %v3046 = vadd.f32 %v3045, 1.0
  %v3047 = vrcp.pop %v3046
  %v3048 = vmul.f32 1.0, %v3047
  %v3049 = vtanh.pop %v3042
  %v3050 = vmul.f32 %v3048, %v2915
  %3052 = vrot.lane.b32.xlu0 %v3049, 64
  %v3053 = vpop.permute.xlu0 %3052
  %v3055 = vmul.f32 %v3048, %v3053
  %3057 = vrot.lane.b32.xlu0 %v3055, 32
  %v3058 = vpop.permute.xlu0 %3057
  %v3060 = vadd.f32 %v3050, %v3058
  %v3061 = vtanh.pop %v3060
  %3063 = vrot.lane.b32.xlu0 %v3061, 64
  %v3064 = vpop.permute.xlu0 %3063
  %v3066 = vmul.f32 %v3048, %v3064
  %3068 = vrot.lane.b32.xlu0 %v3066, 32
  %v3069 = vpop.permute.xlu0 %3068
  %3071 = vst.msk [vmem:[#allocation4] sm:$0xff] %vm343, %v3069
  %v3072 = vld [vmem:[#allocation3 + $0x38] sm:$0xff]
  %v3073 = vld [vmem:[#allocation4 + $0x38] sm:$0xff]
  %3075 = vrot.lane.b32.xlu0 %v3073, 32
  %v3076 = vpop.permute.xlu0 %3075
  %v3078 = vsel %vm343, %v3072, %v3076
  %v3079 = vld [vmem:[%s7] sm:$0xff]
  %v3080 = vld [vmem:[%s7 + $0x8] sm:$0xff]
  %v3081 = vld [vmem:[%s7 + $0x10] sm:$0xff]
  %v3082 = vld [vmem:[%s7 + $0x18] sm:$0xff]
  %v3083 = vld [vmem:[%s7 + $0x20] sm:$0xff]
  %v3084 = vld [vmem:[%s7 + $0x28] sm:$0xff]
  %v3085 = vld [vmem:[%s7 + $0x30] sm:$0xff]
  %v3086 = vld [vmem:[%s7 + $0x38] sm:$0xff]
  %v3087 = vld [vmem:[%s8] sm:$0x1]
  %v3089 = vlaneseq
  %v3090 = vshrl.u32 %v3089, 7
  %v3091 = vsub.s32 0, %v3090
  %v3092 = vrot.slane %v3087, %v3091
  %v3095 = vsel %vm238, %v3078, 0
  %3097 = vmatprep.subr.mxu0 0.0
  %3098 = vmatpush1.msra.mxu0 0.0
  %3099 = vmatprep.subr.mxu0 0.0
  %3100 = vmatpush1.msra.mxu0 0.0
  %3101 = vmatprep.subr.mxu0 0.0
  %3102 = vmatpush1.msra.mxu0 0.0
  %3103 = vmatprep.subr.mxu0 0.0
  %3104 = vmatpush1.msra.mxu0 0.0
  %3105 = vmatprep.subr.mxu0 0.0
  %3106 = vmatpush1.msra.mxu0 0.0
  %3107 = vmatprep.subr.mxu0 0.0
  %3108 = vmatpush1.msra.mxu0 0.0
  %3109 = vmatprep.subr.mxu0 0.0
  %3110 = vmatpush1.msra.mxu0 0.0
  %3111 = vmatprep.subr.mxu0 0.0
  %3112 = vmatpush1.msra.mxu0 0.0
  %3113 = vmatprep.subr.mxu0 0.0
  %3114 = vmatpush1.msra.mxu0 %v3086
  %3115 = vmatprep.subr.mxu0 0.0
  %3116 = vmatpush1.msra.mxu0 %v3085
  %3117 = vmatprep.subr.mxu0 0.0
  %3118 = vmatpush1.msra.mxu0 %v3084
  %3119 = vmatprep.subr.mxu0 0.0
  %3120 = vmatpush1.msra.mxu0 %v3083
  %3121 = vmatprep.subr.mxu0 0.0
  %3122 = vmatpush1.msra.mxu0 %v3082
  %3123 = vmatprep.subr.mxu0 0.0
  %3124 = vmatpush1.msra.mxu0 %v3081
  %3125 = vmatprep.subr.mxu0 0.0
  %3126 = vmatpush1.msra.mxu0 %v3080
  %3127 = vmatprep.subr.mxu0 0.0
  %3128 = vmatpush1.msra.mxu0 %v3079
  %3129 = vmatprep.subr.mxu0 0.0
  %3130 = vmatpush2.msra.mxu0 0.0
  %3131 = vmatprep.subr.mxu0 0.0
  %3132 = vmatpush2.msra.mxu0 0.0
  %3133 = vmatprep.subr.mxu0 0.0
  %3134 = vmatpush2.msra.mxu0 0.0
  %3135 = vmatprep.subr.mxu0 0.0
  %3136 = vmatpush2.msra.mxu0 0.0
  %3137 = vmatprep.subr.mxu0 0.0
  %3138 = vmatpush2.msra.mxu0 0.0
  %3139 = vmatprep.subr.mxu0 0.0
  %3140 = vmatpush2.msra.mxu0 0.0
  %3141 = vmatprep.subr.mxu0 0.0
  %3142 = vmatpush2.msra.mxu0 0.0
  %3143 = vmatprep.subr.mxu0 0.0
  %3144 = vmatpush2.msra.mxu0 0.0
  %3145 = vmatprep.subr.mxu0 0.0
  %3146 = vmatpush2.msra.mxu0 0.0
  %3147 = vmatprep.subr.mxu0 0.0
  %3148 = vmatpush2.msra.mxu0 0.0
  %3149 = vmatprep.subr.mxu0 0.0
  %3150 = vmatpush2.msra.mxu0 0.0
  %3151 = vmatprep.subr.mxu0 0.0
  %3152 = vmatpush2.msra.mxu0 0.0
  %3153 = vmatprep.subr.mxu0 0.0
  %3154 = vmatpush2.msra.mxu0 0.0
  %3155 = vmatprep.subr.mxu0 0.0
  %3156 = vmatpush2.msra.mxu0 0.0
  %3157 = vmatprep.subr.mxu0 0.0
  %3158 = vmatpush2.msra.mxu0 0.0
  %3159 = vmatprep.subr.mxu0 0.0
  %3160 = vmatpush2.msra.mxu0 0.0
  %3161 = vmatprep.mubr.f32.mxu0 0.0
  %3162 = vmatmul.mubr.f32.gmra.mxu0 %v3095
  %v3163 = vpop.f32.mrf.mxu0
  %v3164 = vadd.f32 %v3092, %v3163
  %v3165 = vpop.f32.mrf.mxu0
  %3166 = vdwg.mxu0
  %v3167 = vmax.f32 %v3164, 0.0
  %v3168 = vld [vmem:[%s9] sm:$0xff]
  %v3169 = vld [vmem:[%s9 + $0x8] sm:$0xff]
  %v3170 = vld [vmem:[%s9 + $0x10] sm:$0xff]
  %v3171 = vld [vmem:[%s9 + $0x18] sm:$0xff]
  %v3172 = vld [vmem:[%s10] sm:$0x1]
  %v3174 = vlaneseq
  %v3175 = vshrl.u32 %v3174, 7
  %v3176 = vsub.s32 0, %v3175
  %v3177 = vrot.slane %v3172, %v3176
  %v3180 = vsel %vm343, %v3167, 0
  %3182 = vmatprep.subr.mxu0 0.0
  %3183 = vmatpush1.msra.mxu0 0.0
  %3184 = vmatprep.subr.mxu0 0.0
  %3185 = vmatpush1.msra.mxu0 0.0
  %3186 = vmatprep.subr.mxu0 0.0
  %3187 = vmatpush1.msra.mxu0 0.0
  %3188 = vmatprep.subr.mxu0 0.0
  %3189 = vmatpush1.msra.mxu0 0.0
  %3190 = vmatprep.subr.mxu0 0.0
  %3191 = vmatpush1.msra.mxu0 0.0
  %3192 = vmatprep.subr.mxu0 0.0
  %3193 = vmatpush1.msra.mxu0 0.0
  %3194 = vmatprep.subr.mxu0 0.0
  %3195 = vmatpush1.msra.mxu0 0.0
  %3196 = vmatprep.subr.mxu0 0.0
  %3197 = vmatpush1.msra.mxu0 0.0
  %3198 = vmatprep.subr.mxu0 0.0
  %3199 = vmatpush1.msra.mxu0 0.0
  %3200 = vmatprep.subr.mxu0 0.0
  %3201 = vmatpush1.msra.mxu0 0.0
  %3202 = vmatprep.subr.mxu0 0.0
  %3203 = vmatpush1.msra.mxu0 0.0
  %3204 = vmatprep.subr.mxu0 0.0
  %3205 = vmatpush1.msra.mxu0 0.0
  %3206 = vmatprep.subr.mxu0 0.0
  %3207 = vmatpush1.msra.mxu0 %v3171
  %3208 = vmatprep.subr.mxu0 0.0
  %3209 = vmatpush1.msra.mxu0 %v3170
  %3210 = vmatprep.subr.mxu0 0.0
  %3211 = vmatpush1.msra.mxu0 %v3169
  %3212 = vmatprep.subr.mxu0 0.0
  %3213 = vmatpush1.msra.mxu0 %v3168
  %3214 = vmatprep.subr.mxu0 0.0
  %3215 = vmatpush2.msra.mxu0 0.0
  %3216 = vmatprep.subr.mxu0 0.0
  %3217 = vmatpush2.msra.mxu0 0.0
  %3218 = vmatprep.subr.mxu0 0.0
  %3219 = vmatpush2.msra.mxu0 0.0
  %3220 = vmatprep.subr.mxu0 0.0
  %3221 = vmatpush2.msra.mxu0 0.0
  %3222 = vmatprep.subr.mxu0 0.0
  %3223 = vmatpush2.msra.mxu0 0.0
  %3224 = vmatprep.subr.mxu0 0.0
  %3225 = vmatpush2.msra.mxu0 0.0
  %3226 = vmatprep.subr.mxu0 0.0
  %3227 = vmatpush2.msra.mxu0 0.0
  %3228 = vmatprep.subr.mxu0 0.0
  %3229 = vmatpush2.msra.mxu0 0.0
  %3230 = vmatprep.subr.mxu0 0.0
  %3231 = vmatpush2.msra.mxu0 0.0
  %3232 = vmatprep.subr.mxu0 0.0
  %3233 = vmatpush2.msra.mxu0 0.0
  %3234 = vmatprep.subr.mxu0 0.0
  %3235 = vmatpush2.msra.mxu0 0.0
  %3236 = vmatprep.subr.mxu0 0.0
  %3237 = vmatpush2.msra.mxu0 0.0
  %3238 = vmatprep.subr.mxu0 0.0
  %3239 = vmatpush2.msra.mxu0 0.0
  %3240 = vmatprep.subr.mxu0 0.0
  %3241 = vmatpush2.msra.mxu0 0.0
  %3242 = vmatprep.subr.mxu0 0.0
  %3243 = vmatpush2.msra.mxu0 0.0
  %3244 = vmatprep.subr.mxu0 0.0
  %3245 = vmatpush2.msra.mxu0 0.0
  %3246 = vmatprep.mubr.f32.mxu0 0.0
  %3247 = vmatmul.mubr.f32.gmra.mxu0 %v3180
  %v3248 = vpop.f32.mrf.mxu0
  %v3249 = vadd.f32 %v3177, %v3248
  %v3250 = vpop.f32.mrf.mxu0
  %3251 = vdwg.mxu0
  %v3252 = vmax.f32 %v3249, 0.0
  %v3253 = vld [vmem:[%s11] sm:$0xff]
  %v3254 = vld [vmem:[%s11 + $0x8] sm:$0xff]
  %v3255 = vld [vmem:[%s11 + $0x10] sm:$0xff]
  %v3256 = vld [vmem:[%s11 + $0x18] sm:$0xff]
  %v3257 = vld [vmem:[%s12] sm:$0x1]
  %v3259 = vlaneseq
  %v3260 = vshrl.u32 %v3259, 7
  %v3261 = vsub.s32 0, %v3260
  %v3262 = vrot.slane %v3257, %v3261
  %v3265 = vsel %vm343, %v3252, 0
  %3267 = vmatprep.subr.mxu0 0.0
  %3268 = vmatpush1.msra.mxu0 0.0
  %3269 = vmatprep.subr.mxu0 0.0
  %3270 = vmatpush1.msra.mxu0 0.0
  %3271 = vmatprep.subr.mxu0 0.0
  %3272 = vmatpush1.msra.mxu0 0.0
  %3273 = vmatprep.subr.mxu0 0.0
  %3274 = vmatpush1.msra.mxu0 0.0
  %3275 = vmatprep.subr.mxu0 0.0
  %3276 = vmatpush1.msra.mxu0 0.0
  %3277 = vmatprep.subr.mxu0 0.0
  %3278 = vmatpush1.msra.mxu0 0.0
  %3279 = vmatprep.subr.mxu0 0.0
  %3280 = vmatpush1.msra.mxu0 0.0
  %3281 = vmatprep.subr.mxu0 0.0
  %3282 = vmatpush1.msra.mxu0 0.0
  %3283 = vmatprep.subr.mxu0 0.0
  %3284 = vmatpush1.msra.mxu0 0.0
  %3285 = vmatprep.subr.mxu0 0.0
  %3286 = vmatpush1.msra.mxu0 0.0
  %3287 = vmatprep.subr.mxu0 0.0
  %3288 = vmatpush1.msra.mxu0 0.0
  %3289 = vmatprep.subr.mxu0 0.0
  %3290 = vmatpush1.msra.mxu0 0.0
  %3291 = vmatprep.subr.mxu0 0.0
  %3292 = vmatpush1.msra.mxu0 %v3256
  %3293 = vmatprep.subr.mxu0 0.0
  %3294 = vmatpush1.msra.mxu0 %v3255
  %3295 = vmatprep.subr.mxu0 0.0
  %3296 = vmatpush1.msra.mxu0 %v3254
  %3297 = vmatprep.subr.mxu0 0.0
  %3298 = vmatpush1.msra.mxu0 %v3253
  %3299 = vmatprep.subr.mxu0 0.0
  %3300 = vmatpush2.msra.mxu0 0.0
  %3301 = vmatprep.subr.mxu0 0.0
  %3302 = vmatpush2.msra.mxu0 0.0
  %3303 = vmatprep.subr.mxu0 0.0
  %3304 = vmatpush2.msra.mxu0 0.0
  %3305 = vmatprep.subr.mxu0 0.0
  %3306 = vmatpush2.msra.mxu0 0.0
  %3307 = vmatprep.subr.mxu0 0.0
  %3308 = vmatpush2.msra.mxu0 0.0
  %3309 = vmatprep.subr.mxu0 0.0
  %3310 = vmatpush2.msra.mxu0 0.0
  %3311 = vmatprep.subr.mxu0 0.0
  %3312 = vmatpush2.msra.mxu0 0.0
  %3313 = vmatprep.subr.mxu0 0.0
  %3314 = vmatpush2.msra.mxu0 0.0
  %3315 = vmatprep.subr.mxu0 0.0
  %3316 = vmatpush2.msra.mxu0 0.0
  %3317 = vmatprep.subr.mxu0 0.0
  %3318 = vmatpush2.msra.mxu0 0.0
  %3319 = vmatprep.subr.mxu0 0.0
  %3320 = vmatpush2.msra.mxu0 0.0
  %3321 = vmatprep.subr.mxu0 0.0
  %3322 = vmatpush2.msra.mxu0 0.0
  %3323 = vmatprep.subr.mxu0 0.0
  %3324 = vmatpush2.msra.mxu0 0.0
  %3325 = vmatprep.subr.mxu0 0.0
  %3326 = vmatpush2.msra.mxu0 0.0
  %3327 = vmatprep.subr.mxu0 0.0
  %3328 = vmatpush2.msra.mxu0 0.0
  %3329 = vmatprep.subr.mxu0 0.0
  %3330 = vmatpush2.msra.mxu0 0.0
  %3331 = vmatprep.mubr.f32.mxu0 0.0
  %3332 = vmatmul.mubr.f32.gmra.mxu0 %v3265
  %v3333 = vpop.f32.mrf.mxu0
  %v3334 = vadd.f32 %v3262, %v3333
  %v3335 = vpop.f32.mrf.mxu0
  %3336 = vdwg.mxu0
  %vm3337 = vcmask 80896
  %3338 = vst.msk [vmem:[%s13] sm:$0xff] %vm3337, %v3334
  // Predicated region
  $region54: #{lstm_classifier_forward.1} parent=0 // pred_check
    _
  $region55: #{lstm_classifier_forward.1} parent=0 // pred_check_branch
    %3340 = sbr.rel (0) target = $region57
  $region56: #{lstm_classifier_forward.1} parent=0 // pred_region
    _
  $region57: #{lstm_classifier_forward.1} parent=0 // pred_fallthru
    _
  // Predicated region
  $region58: #{lstm_classifier_forward.1} parent=0 // pred_check
    _
  $region59: #{lstm_classifier_forward.1} parent=0 // pred_check_branch
    %3342 = sbr.rel (0) target = $region61
  $region60: #{lstm_classifier_forward.1} parent=0 // pred_region
    _
  $region61: #{lstm_classifier_forward.1} parent=0 // pred_fallthru
    _

</llo_original>
